<compile_context>
chip_gen: v6e
topology: v6e:2x2x1
jax: 0.10.0
libtpu: 0.0.40
codegen_flags: <defaults>
</compile_context>

<pallas_src>
import jax
import jax.numpy as jnp
from jax import lax
from jax.experimental import pallas as pl
from jax.experimental.pallas import tpu as pltpu


# ------------------------------ small helpers ------------------------------

def _cdiv(a, b):
    return -(-a // b)


def _round_up(a, m):
    return _cdiv(a, m) * m


def _vmem_limit_bytes():
    """Generation-aware scoped VMEM budget (v5e/v6e: 128 MiB phys, v7x: 64 MiB)."""
    cap = 128 * 1024 * 1024
    try:
        cap = int(getattr(pltpu.get_tpu_info(), "vmem_capacity_bytes", cap))
    except Exception:
        pass
    # keep ~40% of physical VMEM free for compiler-internal scratch; never below 16 MiB
    return max(16 * 1024 * 1024, min(48 * 1024 * 1024, (cap * 3) // 5))


_VMEM_LIMIT = _vmem_limit_bytes()


def _probe_single_buffer_consts():
    """Feature-probe pl.Buffered(1) so constant-index operands (weights/mask/bias)
    are single-buffered (VMEM headroom on v7x); silently fall back if unsupported."""
    if not hasattr(pl, "Buffered"):
        return False

    def _copy(x_ref, o_ref):
        o_ref[...] = x_ref[...]

    try:
        out = pl.pallas_call(
            _copy,
            out_shape=jax.ShapeDtypeStruct((16, 128), jnp.float32),
            grid=(2,),
            in_specs=[pl.BlockSpec((8, 128), lambda i: (0, 0),
                                   pipeline_mode=pl.Buffered(1))],
            out_specs=pl.BlockSpec((8, 128), lambda i: (i, 0)),
        )(jnp.ones((8, 128), jnp.float32))
        jax.block_until_ready(out)
        return True
    except Exception:
        return False


_SINGLE_BUF_CONSTS = _probe_single_buffer_consts()


def _const_spec(block_shape, index_map):
    """BlockSpec for an operand whose block index never changes across the grid."""
    if _SINGLE_BUF_CONSTS:
        return pl.BlockSpec(block_shape, index_map, pipeline_mode=pl.Buffered(1))
    return pl.BlockSpec(block_shape, index_map)


# ----------------------------- Pallas kernels ------------------------------

def _stack_shifted_taps(xs_ref, load, base, shifts, cin):
    """Build the (kh*kw*cin, W) MXU operand: one full-lane-width shifted copy of the
    activation per tap, so the whole conv becomes a single big-K matmul."""
    width = xs_ref.shape[-1]
    for t, s in enumerate(shifts):
        xs_ref[t * cin:(t + 1) * cin, :] = load(base + s, base + s + width)


def _make_block_kernel(shifts, Lp, G, has_expand, eps, slope, inv_cnt):
    """One fused _Residual_Block: [1x1 expand] identity, conv1 -> IN -> LReLU (kept
    in VMEM), conv2 + identity -> IN -> LReLU.  Refs use the guard-extended padded
    flat layout (C, G + Hp*Wp + G) with exactly-zero border/guards."""

    def in_lrelu(a, m):
        # one masking pass, sum + sum-of-squares reductions, one fused epilogue pass
        am = a * m
        s1 = jnp.sum(am, axis=1, keepdims=True)
        s2 = jnp.sum(am * am, axis=1, keepdims=True)
        mean = s1 * inv_cnt
        var = jnp.maximum(s2 * inv_cnt - mean * mean, 0.0)
        y = (am - mean) * lax.rsqrt(var + eps)
        return jnp.where(y > 0, y, slope * y) * m          # border stays exactly 0

    def kernel(*refs):
        i = 0
        x_ref = refs[i]; i += 1                              # (1, Cin, Lg) bf16
        w1_ref = refs[i]; i += 1                             # (Cout, 9*Cin) bf16
        w2_ref = refs[i]; i += 1                             # (Cout, 9*Cout) bf16
        we_ref = None
        if has_expand:
            we_ref = refs[i]; i += 1                         # (Cout, Cin) bf16
        m_ref = refs[i]; i += 1                              # (1, Lp) f32
        o_ref = refs[i]; i += 1                              # (1, Cout, Lg) bf16
        xs1_ref, xs2_ref, h1_ref = refs[i:i + 3]             # VMEM scratch

        cin = x_ref.shape[1]
        cout = o_ref.shape[1]
        m = m_ref[...]

        # ---- conv1 (single big-K matmul) -> IN -> LeakyReLU, stays in VMEM ----
        _stack_shifted_taps(xs1_ref, lambda lo, hi: x_ref[0, :, lo:hi], G, shifts, cin)
        a1 = jnp.dot(w1_ref[...], xs1_ref[...], preferred_element_type=jnp.float32)
        y1 = in_lrelu(a1, m)

        zg = jnp.zeros((cout, G), h1_ref.dtype)
        h1_ref[:, 0:G] = zg                                  # keep guards exactly 0
        h1_ref[:, G + Lp:G + Lp + G] = zg
        h1_ref[:, G:G + Lp] = y1.astype(h1_ref.dtype)

        # ---- conv2 + fused residual identity -> IN -> LeakyReLU ----
        _stack_shifted_taps(xs2_ref, lambda lo, hi: h1_ref[:, lo:hi], G, shifts, cout)
        a2 = jnp.dot(w2_ref[...], xs2_ref[...], preferred_element_type=jnp.float32)
        if has_expand:
            idn = jnp.dot(we_ref[...], x_ref[0, :, G:G + Lp],
                          preferred_element_type=jnp.float32)
        else:
            idn = x_ref[0, :, G:G + Lp].astype(jnp.float32)
        y2 = in_lrelu(a2 + idn, m)

        o_ref[0, :, 0:G] = zg
        o_ref[0, :, G + Lp:G + Lp + G] = zg
        o_ref[0, :, G:G + Lp] = y2.astype(o_ref.dtype)       # lane-aligned bulk store

    return kernel


def _make_final_kernel(shifts, TL, GL, WLEN):
    """Spatially tiled final 5x5 conv + bias + sigmoid (no InstanceNorm)."""

    def kernel(x_ref, w_ref, b_ref, o_ref, xwin_ref, xs_ref):
        cin = x_ref.shape[1]
        start = pl.multiple_of(pl.program_id(1) * TL, 128)   # 128-aligned halo window
        xwin_ref[...] = x_ref[0, :, pl.ds(start, WLEN)]
        _stack_shifted_taps(xs_ref, lambda lo, hi: xwin_ref[:, lo:hi], GL, shifts, cin)
        acc = jnp.dot(w_ref[...], xs_ref[...], preferred_element_type=jnp.float32)
        acc = acc + b_ref[...]
        # sigmoid: exp + approx reciprocal both on the EUP (VPU stays free)
        o_ref[0] = pl.reciprocal(1.0 + jnp.exp(-acc), approx=True).astype(o_ref.dtype)

    return kernel


def _fc_kernel(x_ref, w_ref, b_ref, o_ref):
    acc = jnp.dot(x_ref[...], w_ref[...], preferred_element_type=jnp.float32)
    o_ref[...] = jnp.maximum(acc + b_ref[...], 0.0).astype(o_ref.dtype)


# --------------------------- kernel call wrappers ---------------------------

def fc_relu(x, w, b):
    B, K = x.shape
    K2, N = w.shape
    assert K == K2
    return pl.pallas_call(
        _fc_kernel,
        out_shape=jax.ShapeDtypeStruct((B, N), jnp.bfloat16),
        grid=(1,),
        in_specs=[pl.BlockSpec((B, K), lambda i: (0, 0)),
                  pl.BlockSpec((K, N), lambda i: (0, 0)),
                  pl.BlockSpec((1, N), lambda i: (0, 0))],
        out_specs=pl.BlockSpec((B, N), lambda i: (0, 0)),
        compiler_params=pltpu.CompilerParams(
            dimension_semantics=("arbitrary",),
            vmem_limit_bytes=_VMEM_LIMIT),
    )(x.astype(jnp.bfloat16), w.astype(jnp.bfloat16),
      b.reshape(1, N).astype(jnp.float32))


def _merge_taps(w):
    """(O, I, kh, kw) -> (O, kh*kw*I) bf16, column order matching the tap stack."""
    o, ci, kh, kw = w.shape
    return jnp.transpose(w, (0, 2, 3, 1)).reshape(o, kh * kw * ci).astype(jnp.bfloat16)


def res_block(x_flat, blk, H, W, G):
    """One fused residual block on the guard-extended flat layout (N, Cin, Lg)."""
    N, Cin, Lg = x_flat.shape
    Hp, Wp = H + 2, W + 2
    Lp = Hp * Wp
    assert Lg == Lp + 2 * G and G >= Wp + 1
    Cout = blk["conv1"].shape[0]
    has_expand = "expand" in blk

    shifts = tuple((dy - 1) * Wp + (dx - 1) for dy in range(3) for dx in range(3))
    w1m, w2m = _merge_taps(blk["conv1"]), _merge_taps(blk["conv2"])
    mask = jnp.pad(jnp.ones((H, W), jnp.float32), ((1, 1), (1, 1))).reshape(1, Lp)

    inputs = [x_flat.astype(jnp.bfloat16), w1m, w2m]
    in_specs = [
        pl.BlockSpec((1, Cin, Lg), lambda n: (n, 0, 0)),
        _const_spec((Cout, 9 * Cin), lambda n: (0, 0)),
        _const_spec((Cout, 9 * Cout), lambda n: (0, 0)),
    ]
    if has_expand:
        inputs.append(blk["expand"].reshape(Cout, Cin).astype(jnp.bfloat16))
        in_specs.append(_const_spec((Cout, Cin), lambda n: (0, 0)))
    inputs.append(mask)
    in_specs.append(_const_spec((1, Lp), lambda n: (0, 0)))

    kernel = _make_block_kernel(shifts, Lp, G, has_expand,
                                eps=1e-3, slope=0.2, inv_cnt=1.0 / float(H * W))
    return pl.pallas_call(
        kernel,
        out_shape=jax.ShapeDtypeStruct((N, Cout, Lg), jnp.bfloat16),
        grid=(N,),
        in_specs=in_specs,
        out_specs=pl.BlockSpec((1, Cout, Lg), lambda n: (n, 0, 0)),
        scratch_shapes=[pltpu.VMEM((9 * Cin, Lp), jnp.bfloat16),   # stacked conv1 operand
                        pltpu.VMEM((9 * Cout, Lp), jnp.bfloat16),  # stacked conv2 operand
                        pltpu.VMEM((Cout, Lg), jnp.bfloat16)],     # intermediate activation
        compiler_params=pltpu.CompilerParams(
            dimension_semantics=("parallel",),
            vmem_limit_bytes=_VMEM_LIMIT),
    )(*inputs)


def _final_geometry(H, W, target_tiles=8):
    Hp, Wp = H + 4, W + 4
    Lp = Hp * Wp
    S = 2 * Wp + 2                             # max |tap shift| of the 5x5 conv
    GL = _round_up(S, 128)                     # left guard, lane aligned
    TL = _round_up(_cdiv(Lp, target_tiles), 128)
    nt = _cdiv(Lp, TL)
    Lq = nt * TL
    padr = Lq - Lp + GL                        # every halo window stays in bounds
    return dict(Hp=Hp, Wp=Wp, Lp=Lp, GL=GL, TL=TL, nt=nt, Lq=Lq,
                PADR=padr, Ltot=GL + Lp + padr)


def final_conv_sigmoid(x_flat, w, b, geom):
    N, Cin, Ltot = x_flat.shape
    assert Ltot == geom["Ltot"]
    Cout = w.shape[0]
    Wp, GL, TL, nt, Lq = geom["Wp"], geom["GL"], geom["TL"], geom["nt"], geom["Lq"]
    WLEN = TL + 2 * GL
    shifts = tuple((dy - 2) * Wp + (dx - 2) for dy in range(5) for dx in range(5))
    wm = _merge_taps(w)                                        # (Cout, 25*Cin)

    return pl.pallas_call(
        _make_final_kernel(shifts, TL, GL, WLEN),
        out_shape=jax.ShapeDtypeStruct((N, Cout, Lq), jnp.float32),
        grid=(N, nt),
        in_specs=[pl.BlockSpec((1, Cin, Ltot), lambda n, t: (n, 0, 0)),  # resident per image
                  _const_spec((Cout, 25 * Cin), lambda n, t: (0, 0)),
                  _const_spec((Cout, 1), lambda n, t: (0, 0))],
        out_specs=pl.BlockSpec((1, Cout, TL), lambda n, t: (n, 0, t)),   # lane-dense tiles
        scratch_shapes=[pltpu.VMEM((Cin, WLEN), jnp.bfloat16),           # halo window
                        pltpu.VMEM((25 * Cin, TL), jnp.bfloat16)],       # stacked operand
        compiler_params=pltpu.CompilerParams(
            dimension_semantics=("parallel", "arbitrary"),
            vmem_limit_bytes=_VMEM_LIMIT),
    )(x_flat.astype(jnp.bfloat16), wm, b.reshape(Cout, 1).astype(jnp.float32))


# ------------------------- layout glue (data movement only) -------------------------

def upsample_nearest_2x(x):
    N, C, H, W = x.shape
    x = jnp.broadcast_to(x[:, :, :, None, :, None], (N, C, H, 2, W, 2))
    return x.reshape(N, C, 2 * H, 2 * W)


def to_guarded_flat(x, pad, padl, padr):
    N, C, H, W = x.shape
    xp = jnp.pad(x, ((0, 0), (0, 0), (pad, pad), (pad, pad)))
    flat = xp.reshape(N, C, (H + 2 * pad) * (W + 2 * pad))
    return jnp.pad(flat, ((0, 0), (0, 0), (padl, padr)))


def from_guarded_flat(xg, H, W, pad, padl):
    Hp, Wp = H + 2 * pad, W + 2 * pad
    x = xg[:, :, padl:padl + Hp * Wp].reshape(xg.shape[0], xg.shape[1], Hp, Wp)
    return x[:, :, pad:pad + H, pad:pad + W]


def _guard_3x3(W):
    return _round_up(W + 2 + 1, 128)    # >= max |tap shift| (= Wp + 1), lane aligned


# ------------------------------- forward pass -------------------------------

def decoder_s_forward(params, z):
    B = z.shape[0]
    c0 = params["fc_w"].shape[1] // 16
    y = fc_relu(z.reshape(B, -1), params["fc_w"], params["fc_b"])        # fc + ReLU
    H = W = 4
    G = _guard_3x3(W)
    x = to_guarded_flat(y.reshape(B, c0, 4, 4), 1, G, G)

    geom = None
    stages = params["stages"]
    for si, stage in enumerate(stages):
        for blk in stage:
            x = res_block(x, blk, H, W, G)                               # one fused call
        # nearest-2x upsample + relayout for the next consumer (pure data movement)
        # TODO(synk): fuse into the consumer kernel's prologue to save an HBM pass.
        img = upsample_nearest_2x(from_guarded_flat(x, H, W, 1, G))
        H, W = 2 * H, 2 * W
        if si == len(stages) - 1:
            geom = _final_geometry(H, W)
            x = to_guarded_flat(img, 2, geom["GL"], geom["PADR"])
        else:
            G = _guard_3x3(W)
            x = to_guarded_flat(img, 1, G, G)

    out = final_conv_sigmoid(x, params["final_w"], params["final_b"], geom)
    Hp, Wp = geom["Hp"], geom["Wp"]
    img = out[:, :, :geom["Lp"]].reshape(B, -1, Hp, Wp)[:, :, 2:2 + H, 2:2 + W]
    return img                                                            # (B, 6, 256, 256)


# ------------------------------ parameter init ------------------------------

def init_decoder_params(key, hdim=32, c0=64):
    keys = iter(jax.random.split(key, 64))

    def w(shape, scale=0.05):
        return scale * jax.random.normal(next(keys), shape, jnp.float32)

    params = {
        "fc_w": w((3 * hdim, c0 * 4 * 4)),
        "fc_b": w((c0 * 4 * 4,)),
    }
    # (inc, outc, num_blocks) per make_layer stage (original module: c0 = 512)
    stage_cfg = [(c0, c0, 1), (c0, c0, 1), (c0, c0, 1),
                 (c0, c0 // 2, 1), (c0 // 2, c0 // 4, 1), (c0 // 4, c0 // 8, 2)]
    stages = []
    for inc, outc, nb in stage_cfg:
        blocks, ci = [], inc
        for _ in range(nb):
            blk = {}
            if ci != outc:
                blk["expand"] = w((outc, ci, 1, 1))       # conv_expand, no bias
            blk["conv1"] = w((outc, ci, 3, 3))
            blk["conv2"] = w((outc, outc, 3, 3))
            blocks.append(blk)
            ci = outc
        stages.append(blocks)
    params["stages"] = stages
    params["final_w"] = w((3 + 3, c0 // 8, 5, 5))
    params["final_b"] = w((3 + 3,))
    return params


# --------------- pure-JAX reference (same bf16-operand precision policy) ---------------

def _ref_conv(x, w, b=None):
    ph, pw = w.shape[2] // 2, w.shape[3] // 2
    out = lax.conv_general_dilated(
        x.astype(jnp.bfloat16), w.astype(jnp.bfloat16),
        window_strides=(1, 1), padding=[(ph, ph), (pw, pw)],
        dimension_numbers=("NCHW", "OIHW", "NCHW"),
        preferred_element_type=jnp.float32)
    if b is not None:
        out = out + b.reshape(1, -1, 1, 1)
    return out


def _ref_in_lrelu(x, eps=1e-3, slope=0.2):
    mean = jnp.mean(x, axis=(2, 3), keepdims=True)
    var = jnp.mean((x - mean) ** 2, axis=(2, 3), keepdims=True)
    y = (x - mean) * lax.rsqrt(var + eps)
    return jnp.where(y > 0, y, slope * y)


def _ref_res_block(x, p):
    if "expand" in p:
        identity = _ref_conv(x, p["expand"])              # f32 (matches the kernel)
    else:
        identity = x.astype(jnp.float32)
    h1 = _ref_in_lrelu(_ref_conv(x, p["conv1"])).astype(jnp.bfloat16)
    out = _ref_in_lrelu(_ref_conv(h1, p["conv2"]) + identity)
    return out.astype(jnp.bfloat16)


def decoder_s_reference(params, z):
    B = z.shape[0]
    c0 = params["fc_w"].shape[1] // 16
    y = jnp.dot(z.reshape(B, -1).astype(jnp.bfloat16),
                params["fc_w"].astype(jnp.bfloat16),
                preferred_element_type=jnp.float32) + params["fc_b"]
    x = jnp.maximum(y, 0.0).astype(jnp.bfloat16).reshape(B, c0, 4, 4)
    for stage in params["stages"]:
        for blk in stage:
            x = _ref_res_block(x, blk)
        x = upsample_nearest_2x(x)
    logits = _ref_conv(x, params["final_w"], params["final_b"])
    return 1.0 / (1.0 + jnp.exp(-logits))


# ----------------------------------- main -----------------------------------

if __name__ == "__main__":
    # Original module: hdim=256, base channels 512; demo uses a width-scaled config
    # (identical architecture: 7 residual blocks, 6 nearest 2x upsamples, final 5x5).
    hdim, c0 = 32, 64
    key = jax.random.PRNGKey(0)
    kp, kz, kx = jax.random.split(key, 3)
    params = init_decoder_params(kp, hdim=hdim, c0=c0)
    z = jax.random.normal(kz, (2, 3, hdim), dtype=jnp.float32)

    # ---- tight unit check: one fused residual block vs. the plain-JAX reference ----
    blk = params["stages"][3][0]                  # 64 -> 32 block, exercises conv_expand
    xt = (0.1 * jax.random.normal(kx, (2, 64, 16, 16), jnp.float32)).astype(jnp.bfloat16)
    G0 = _guard_3x3(16)
    got = from_guarded_flat(
        res_block(to_guarded_flat(xt, 1, G0, G0), blk, 16, 16, G0),
        16, 16, 1, G0).astype(jnp.float32)
    want = _ref_res_block(xt, blk).astype(jnp.float32)
    blk_err = float(jnp.max(jnp.abs(got - want)))
    assert blk_err < 6e-2, f"residual-block max abs err vs reference: {blk_err}"

    # ---- full forward ----
    fwd = jax.jit(decoder_s_forward)
    img = jax.block_until_ready(fwd(params, z))
    assert img.shape == (2, 6, 256, 256), img.shape      # 4x4 upsampled 2x six times
    assert bool(jnp.all(jnp.isfinite(img)))

    ref = jax.block_until_ready(jax.jit(decoder_s_reference)(params, z))
    max_err = float(jnp.max(jnp.abs(img - ref)))
    mean_err = float(jnp.mean(jnp.abs(img - ref)))
    # Both paths use bf16 MXU operands with f32 accumulation, but 15 conv layers of
    # InstanceNorm + LeakyReLU chaotically amplify accumulation-order / bf16-rounding
    # differences, so the end-to-end bound on the sigmoid output is necessarily loose
    # (observed ~1e-2 max); the single-block check above is the tight correctness gate.
    assert max_err < 1e-1, f"max abs err vs reference: {max_err}"
    assert mean_err < 1e-2, f"mean abs err vs reference: {mean_err}"

    print("KERNEL_OK")
</pallas_src>

<mosaic_0001>
module attributes {stable_mosaic.version = 11 : i64} {
  func.func @_copy(%arg0: i32, %arg1: memref<8x128xf32, #tpu.memory_space<vmem>>, %arg2: memref<8x128xf32, #tpu.memory_space<vmem>>) attributes {dimension_semantics = [#tpu.dimension_semantics<arbitrary>], iteration_bounds = array<i64: 2>, scalar_prefetch = 0 : i64, scratch_operands = 0 : i64, tpu.core_type = #tpu.core_type<tc>, window_params = [{pipeline_mode = #tpu.pipeline_mode<synchronous>, transform_indices = @transform_0, window_bounds = array<i64: 8, 128>}, {transform_indices = @transform_1, window_bounds = array<i64: 8, 128>}]} {
    %c0 = arith.constant 0 : index
    %c0_0 = arith.constant 0 : index
    %0 = vector.load %arg1[%c0, %c0_0] : memref<8x128xf32, #tpu.memory_space<vmem>>, vector<8x128xf32>
    %c0_1 = arith.constant 0 : index
    %c0_2 = arith.constant 0 : index
    %1 = vector.load %arg2[%c0_1, %c0_2] : memref<8x128xf32, #tpu.memory_space<vmem>>, vector<8x128xf32>
    tpu.vector_store %arg2[%c0_1, %c0_2], %0 {strides = array<i32>} : memref<8x128xf32, #tpu.memory_space<vmem>>, vector<8x128xf32>,
    return
  }
  func.func @transform_0(%arg0: i32) -> (i32, i32) {
    %c0_i32 = arith.constant 0 : i32
    %c0_i32_0 = arith.constant 0 : i32
    %c0_i32_1 = arith.constant 0 : i32
    return %c0_i32, %c0_i32_0 : i32, i32
  }
  func.func @transform_1(%arg0: i32) -> (i32, i32) {
    %c0_i32 = arith.constant 0 : i32
    %c0_i32_0 = arith.constant 0 : i32
    return %arg0, %c0_i32 : i32, i32
  }
}

module attributes {stable_mosaic.version = 11 : i64} {
  func.func @kernel(%arg0: i32, %arg1: memref<1x64x580xbf16, #tpu.memory_space<vmem>>, %arg2: memref<32x576xbf16, #tpu.memory_space<vmem>>, %arg3: memref<32x288xbf16, #tpu.memory_space<vmem>>, %arg4: memref<32x64xbf16, #tpu.memory_space<vmem>>, %arg5: memref<1x324xf32, #tpu.memory_space<vmem>>, %arg6: memref<1x32x580xbf16, #tpu.memory_space<vmem>>, %arg7: memref<576x324xbf16, #tpu.memory_space<vmem>>, %arg8: memref<288x324xbf16, #tpu.memory_space<vmem>>, %arg9: memref<32x580xbf16, #tpu.memory_space<vmem>>) attributes {dimension_semantics = [#tpu.dimension_semantics<parallel>], iteration_bounds = array<i64: 2>, scalar_prefetch = 0 : i64, scratch_operands = 3 : i64, tpu.core_type = #tpu.core_type<tc>, window_params = [{transform_indices = @transform_0, window_bounds = array<i64: 1, 64, 580>}, {pipeline_mode = #tpu.pipeline_mode<synchronous>, transform_indices = @transform_1, window_bounds = array<i64: 32, 576>}, {pipeline_mode = #tpu.pipeline_mode<synchronous>, transform_indices = @transform_2, window_bounds = array<i64: 32, 288>}, {pipeline_mode = #tpu.pipeline_mode<synchronous>, transform_indices = @transform_3, window_bounds = array<i64: 32, 64>}, {pipeline_mode = #tpu.pipeline_mode<synchronous>, transform_indices = @transform_4, window_bounds = array<i64: 1, 324>}, {transform_indices = @transform_5, window_bounds = array<i64: 1, 32, 580>}]} {
    %c0 = arith.constant 0 : index
    %c0_0 = arith.constant 0 : index
    %0 = vector.load %arg5[%c0, %c0_0] : memref<1x324xf32, #tpu.memory_space<vmem>>, vector<1x324xf32>
    %c0_1 = arith.constant 0 : index
    %c0_2 = arith.constant 0 : index
    %c109 = arith.constant 109 : index
    %1 = vector.load %arg1[%c0_1, %c0_2, %c109] : memref<1x64x580xbf16, #tpu.memory_space<vmem>>, vector<1x64x324xbf16>
    %2 = vector.shape_cast %1 : vector<1x64x324xbf16> to vector<64x324xbf16>
    %c0_3 = arith.constant 0 : index
    %c0_4 = arith.constant 0 : index
    %3 = vector.load %arg7[%c0_3, %c0_4] : memref<576x324xbf16, #tpu.memory_space<vmem>>, vector<64x324xbf16>
    tpu.vector_store %arg7[%c0_3, %c0_4], %2 {strides = array<i32>} : memref<576x324xbf16, #tpu.memory_space<vmem>>, vector<64x324xbf16>,
    %c0_5 = arith.constant 0 : index
    %c0_6 = arith.constant 0 : index
    %c110 = arith.constant 110 : index
    %4 = vector.load %arg1[%c0_5, %c0_6, %c110] : memref<1x64x580xbf16, #tpu.memory_space<vmem>>, vector<1x64x324xbf16>
    %5 = vector.shape_cast %4 : vector<1x64x324xbf16> to vector<64x324xbf16>
    %c64 = arith.constant 64 : index
    %c0_7 = arith.constant 0 : index
    %6 = vector.load %arg7[%c64, %c0_7] : memref<576x324xbf16, #tpu.memory_space<vmem>>, vector<64x324xbf16>
    tpu.vector_store %arg7[%c64, %c0_7], %5 {strides = array<i32>} : memref<576x324xbf16, #tpu.memory_space<vmem>>, vector<64x324xbf16>,
    %c0_8 = arith.constant 0 : index
    %c0_9 = arith.constant 0 : index
    %c111 = arith.constant 111 : index
    %7 = vector.load %arg1[%c0_8, %c0_9, %c111] : memref<1x64x580xbf16, #tpu.memory_space<vmem>>, vector<1x64x324xbf16>
    %8 = vector.shape_cast %7 : vector<1x64x324xbf16> to vector<64x324xbf16>
    %c128 = arith.constant 128 : index
    %c0_10 = arith.constant 0 : index
    %9 = vector.load %arg7[%c128, %c0_10] : memref<576x324xbf16, #tpu.memory_space<vmem>>, vector<64x324xbf16>
    tpu.vector_store %arg7[%c128, %c0_10], %8 {strides = array<i32>} : memref<576x324xbf16, #tpu.memory_space<vmem>>, vector<64x324xbf16>,
    %c0_11 = arith.constant 0 : index
    %c0_12 = arith.constant 0 : index
    %c127 = arith.constant 127 : index
    %10 = vector.load %arg1[%c0_11, %c0_12, %c127] : memref<1x64x580xbf16, #tpu.memory_space<vmem>>, vector<1x64x324xbf16>
    %11 = vector.shape_cast %10 : vector<1x64x324xbf16> to vector<64x324xbf16>
    %c192 = arith.constant 192 : index
    %c0_13 = arith.constant 0 : index
    %12 = vector.load %arg7[%c192, %c0_13] : memref<576x324xbf16, #tpu.memory_space<vmem>>, vector<64x324xbf16>
    tpu.vector_store %arg7[%c192, %c0_13], %11 {strides = array<i32>} : memref<576x324xbf16, #tpu.memory_space<vmem>>, vector<64x324xbf16>,
    %c0_14 = arith.constant 0 : index
    %c0_15 = arith.constant 0 : index
    %c128_16 = arith.constant 128 : index
    %13 = vector.load %arg1[%c0_14, %c0_15, %c128_16] : memref<1x64x580xbf16, #tpu.memory_space<vmem>>, vector<1x64x324xbf16>
    %14 = vector.shape_cast %13 : vector<1x64x324xbf16> to vector<64x324xbf16>
    %c256 = arith.constant 256 : index
    %c0_17 = arith.constant 0 : index
    %15 = vector.load %arg7[%c256, %c0_17] : memref<576x324xbf16, #tpu.memory_space<vmem>>, vector<64x324xbf16>
    tpu.vector_store %arg7[%c256, %c0_17], %14 {strides = array<i32>} : memref<576x324xbf16, #tpu.memory_space<vmem>>, vector<64x324xbf16>,
    %c0_18 = arith.constant 0 : index
    %c0_19 = arith.constant 0 : index
    %c129 = arith.constant 129 : index
    %16 = vector.load %arg1[%c0_18, %c0_19, %c129] : memref<1x64x580xbf16, #tpu.memory_space<vmem>>, vector<1x64x324xbf16>
    %17 = vector.shape_cast %16 : vector<1x64x324xbf16> to vector<64x324xbf16>
    %c320 = arith.constant 320 : index
    %c0_20 = arith.constant 0 : index
    %18 = vector.load %arg7[%c320, %c0_20] : memref<576x324xbf16, #tpu.memory_space<vmem>>, vector<64x324xbf16>
    tpu.vector_store %arg7[%c320, %c0_20], %17 {strides = array<i32>} : memref<576x324xbf16, #tpu.memory_space<vmem>>, vector<64x324xbf16>,
    %c0_21 = arith.constant 0 : index
    %c0_22 = arith.constant 0 : index
    %c145 = arith.constant 145 : index
    %19 = vector.load %arg1[%c0_21, %c0_22, %c145] : memref<1x64x580xbf16, #tpu.memory_space<vmem>>, vector<1x64x324xbf16>
    %20 = vector.shape_cast %19 : vector<1x64x324xbf16> to vector<64x324xbf16>
    %c384 = arith.constant 384 : index
    %c0_23 = arith.constant 0 : index
    %21 = vector.load %arg7[%c384, %c0_23] : memref<576x324xbf16, #tpu.memory_space<vmem>>, vector<64x324xbf16>
    tpu.vector_store %arg7[%c384, %c0_23], %20 {strides = array<i32>} : memref<576x324xbf16, #tpu.memory_space<vmem>>, vector<64x324xbf16>,
    %c0_24 = arith.constant 0 : index
    %c0_25 = arith.constant 0 : index
    %c146 = arith.constant 146 : index
    %22 = vector.load %arg1[%c0_24, %c0_25, %c146] : memref<1x64x580xbf16, #tpu.memory_space<vmem>>, vector<1x64x324xbf16>
    %23 = vector.shape_cast %22 : vector<1x64x324xbf16> to vector<64x324xbf16>
    %c448 = arith.constant 448 : index
    %c0_26 = arith.constant 0 : index
    %24 = vector.load %arg7[%c448, %c0_26] : memref<576x324xbf16, #tpu.memory_space<vmem>>, vector<64x324xbf16>
    tpu.vector_store %arg7[%c448, %c0_26], %23 {strides = array<i32>} : memref<576x324xbf16, #tpu.memory_space<vmem>>, vector<64x324xbf16>,
    %c0_27 = arith.constant 0 : index
    %c0_28 = arith.constant 0 : index
    %c147 = arith.constant 147 : index
    %25 = vector.load %arg1[%c0_27, %c0_28, %c147] : memref<1x64x580xbf16, #tpu.memory_space<vmem>>, vector<1x64x324xbf16>
    %26 = vector.shape_cast %25 : vector<1x64x324xbf16> to vector<64x324xbf16>
    %c512 = arith.constant 512 : index
    %c0_29 = arith.constant 0 : index
    %27 = vector.load %arg7[%c512, %c0_29] : memref<576x324xbf16, #tpu.memory_space<vmem>>, vector<64x324xbf16>
    tpu.vector_store %arg7[%c512, %c0_29], %26 {strides = array<i32>} : memref<576x324xbf16, #tpu.memory_space<vmem>>, vector<64x324xbf16>,
    %c0_30 = arith.constant 0 : index
    %c0_31 = arith.constant 0 : index
    %28 = vector.load %arg2[%c0_30, %c0_31] : memref<32x576xbf16, #tpu.memory_space<vmem>>, vector<32x576xbf16>
    %c0_32 = arith.constant 0 : index
    %c0_33 = arith.constant 0 : index
    %29 = vector.load %arg7[%c0_32, %c0_33] : memref<576x324xbf16, #tpu.memory_space<vmem>>, vector<576x324xbf16>
    %cst = arith.constant dense<0.000000e+00> : vector<32x324xf32>
    %30 = tpu.matmul %28, %29, %cst {dimension_numbers = #tpu.dot_dimension_numbers<[1], [0], [0], [1], [0, 0, 1, 1], [], []>} : vector<32x576xbf16>, vector<576x324xbf16>, vector<32x324xf32> -> vector<32x324xf32>
    %31 = vector.broadcast %0 : vector<1x324xf32> to vector<32x324xf32>
    %32 = arith.mulf %30, %31 : vector<32x324xf32>
    %cst_34 = arith.constant dense<0.000000e+00> : vector<32xf32>
    %33 = vector.multi_reduction <add>, %32, %cst_34 [1] : vector<32x324xf32> to vector<32xf32>
    %34 = vector.shape_cast %33 : vector<32xf32> to vector<32x1xf32>
    %35 = arith.mulf %32, %32 : vector<32x324xf32>
    %cst_35 = arith.constant dense<0.000000e+00> : vector<32xf32>
    %36 = vector.multi_reduction <add>, %35, %cst_35 [1] : vector<32x324xf32> to vector<32xf32>
    %37 = vector.shape_cast %36 : vector<32xf32> to vector<32x1xf32>
    %cst_36 = arith.constant 3.906250e-03 : f32
    %38 = vector.broadcast %cst_36 : f32 to vector<32x1xf32>
    %39 = arith.mulf %34, %38 : vector<32x1xf32>
    %cst_37 = arith.constant 3.906250e-03 : f32
    %40 = vector.broadcast %cst_37 : f32 to vector<32x1xf32>
    %41 = arith.mulf %37, %40 : vector<32x1xf32>
    %42 = arith.mulf %39, %39 : vector<32x1xf32>
    %43 = arith.subf %41, %42 : vector<32x1xf32>
    %cst_38 = arith.constant 0.000000e+00 : f32
    %44 = vector.broadcast %cst_38 : f32 to vector<32x1xf32>
    %45 = arith.maximumf %43, %44 : vector<32x1xf32>
    %46 = vector.broadcast %39 : vector<32x1xf32> to vector<32x324xf32>
    %47 = arith.subf %32, %46 : vector<32x324xf32>
    %cst_39 = arith.constant 1.000000e-03 : f32
    %48 = vector.broadcast %cst_39 : f32 to vector<32x1xf32>
    %49 = arith.addf %45, %48 : vector<32x1xf32>
    %50 = math.rsqrt %49 : vector<32x1xf32>
    %51 = vector.broadcast %50 : vector<32x1xf32> to vector<32x324xf32>
    %52 = arith.mulf %47, %51 : vector<32x324xf32>
    %cst_40 = arith.constant 0.000000e+00 : f32
    %53 = vector.broadcast %cst_40 : f32 to vector<32x324xf32>
    %54 = arith.cmpf ogt, %52, %53 : vector<32x324xf32>
    %cst_41 = arith.constant 2.000000e-01 : f32
    %55 = vector.broadcast %cst_41 : f32 to vector<32x324xf32>
    %56 = arith.mulf %55, %52 : vector<32x324xf32>
    %57 = arith.select %54, %52, %56 : vector<32x324xi1>, vector<32x324xf32>
    %58 = vector.broadcast %0 : vector<1x324xf32> to vector<32x324xf32>
    %59 = arith.mulf %57, %58 : vector<32x324xf32>
    %cst_42 = arith.constant 0.000000e+00 : bf16
    %60 = vector.broadcast %cst_42 : bf16 to vector<32x128xbf16>
    %c0_43 = arith.constant 0 : index
    %c0_44 = arith.constant 0 : index
    %61 = vector.load %arg9[%c0_43, %c0_44] : memref<32x580xbf16, #tpu.memory_space<vmem>>, vector<32x128xbf16>
    tpu.vector_store %arg9[%c0_43, %c0_44], %60 {strides = array<i32>} : memref<32x580xbf16, #tpu.memory_space<vmem>>, vector<32x128xbf16>,
    %c0_45 = arith.constant 0 : index
    %c452 = arith.constant 452 : index
    %62 = vector.load %arg9[%c0_45, %c452] : memref<32x580xbf16, #tpu.memory_space<vmem>>, vector<32x128xbf16>
    tpu.vector_store %arg9[%c0_45, %c452], %60 {strides = array<i32>} : memref<32x580xbf16, #tpu.memory_space<vmem>>, vector<32x128xbf16>,
    %63 = arith.truncf %59 : vector<32x324xf32> to vector<32x324xbf16>
    %c0_46 = arith.constant 0 : index
    %c128_47 = arith.constant 128 : index
    %64 = vector.load %arg9[%c0_46, %c128_47] : memref<32x580xbf16, #tpu.memory_space<vmem>>, vector<32x324xbf16>
    tpu.vector_store %arg9[%c0_46, %c128_47], %63 {strides = array<i32>} : memref<32x580xbf16, #tpu.memory_space<vmem>>, vector<32x324xbf16>,
    %c0_48 = arith.constant 0 : index
    %c109_49 = arith.constant 109 : index
    %65 = vector.load %arg9[%c0_48, %c109_49] : memref<32x580xbf16, #tpu.memory_space<vmem>>, vector<32x324xbf16>
    %c0_50 = arith.constant 0 : index
    %c0_51 = arith.constant 0 : index
    %66 = vector.load %arg8[%c0_50, %c0_51] : memref<288x324xbf16, #tpu.memory_space<vmem>>, vector<32x324xbf16>
    tpu.vector_store %arg8[%c0_50, %c0_51], %65 {strides = array<i32>} : memref<288x324xbf16, #tpu.memory_space<vmem>>, vector<32x324xbf16>,
    %c0_52 = arith.constant 0 : index
    %c110_53 = arith.constant 110 : index
    %67 = vector.load %arg9[%c0_52, %c110_53] : memref<32x580xbf16, #tpu.memory_space<vmem>>, vector<32x324xbf16>
    %c32 = arith.constant 32 : index
    %c0_54 = arith.constant 0 : index
    %68 = vector.load %arg8[%c32, %c0_54] : memref<288x324xbf16, #tpu.memory_space<vmem>>, vector<32x324xbf16>
    tpu.vector_store %arg8[%c32, %c0_54], %67 {strides = array<i32>} : memref<288x324xbf16, #tpu.memory_space<vmem>>, vector<32x324xbf16>,
    %c0_55 = arith.constant 0 : index
    %c111_56 = arith.constant 111 : index
    %69 = vector.load %arg9[%c0_55, %c111_56] : memref<32x580xbf16, #tpu.memory_space<vmem>>, vector<32x324xbf16>
    %c64_57 = arith.constant 64 : index
    %c0_58 = arith.constant 0 : index
    %70 = vector.load %arg8[%c64_57, %c0_58] : memref<288x324xbf16, #tpu.memory_space<vmem>>, vector<32x324xbf16>
    tpu.vector_store %arg8[%c64_57, %c0_58], %69 {strides = array<i32>} : memref<288x324xbf16, #tpu.memory_space<vmem>>, vector<32x324xbf16>,
    %c0_59 = arith.constant 0 : index
    %c127_60 = arith.constant 127 : index
    %71 = vector.load %arg9[%c0_59, %c127_60] : memref<32x580xbf16, #tpu.memory_space<vmem>>, vector<32x324xbf16>
    %c96 = arith.constant 96 : index
    %c0_61 = arith.constant 0 : index
    %72 = vector.load %arg8[%c96, %c0_61] : memref<288x324xbf16, #tpu.memory_space<vmem>>, vector<32x324xbf16>
    tpu.vector_store %arg8[%c96, %c0_61], %71 {strides = array<i32>} : memref<288x324xbf16, #tpu.memory_space<vmem>>, vector<32x324xbf16>,
    %c0_62 = arith.constant 0 : index
    %c128_63 = arith.constant 128 : index
    %73 = vector.load %arg9[%c0_62, %c128_63] : memref<32x580xbf16, #tpu.memory_space<vmem>>, vector<32x324xbf16>
    %c128_64 = arith.constant 128 : index
    %c0_65 = arith.constant 0 : index
    %74 = vector.load %arg8[%c128_64, %c0_65] : memref<288x324xbf16, #tpu.memory_space<vmem>>, vector<32x324xbf16>
    tpu.vector_store %arg8[%c128_64, %c0_65], %73 {strides = array<i32>} : memref<288x324xbf16, #tpu.memory_space<vmem>>, vector<32x324xbf16>,
    %c0_66 = arith.constant 0 : index
    %c129_67 = arith.constant 129 : index
    %75 = vector.load %arg9[%c0_66, %c129_67] : memref<32x580xbf16, #tpu.memory_space<vmem>>, vector<32x324xbf16>
    %c160 = arith.constant 160 : index
    %c0_68 = arith.constant 0 : index
    %76 = vector.load %arg8[%c160, %c0_68] : memref<288x324xbf16, #tpu.memory_space<vmem>>, vector<32x324xbf16>
    tpu.vector_store %arg8[%c160, %c0_68], %75 {strides = array<i32>} : memref<288x324xbf16, #tpu.memory_space<vmem>>, vector<32x324xbf16>,
    %c0_69 = arith.constant 0 : index
    %c145_70 = arith.constant 145 : index
    %77 = vector.load %arg9[%c0_69, %c145_70] : memref<32x580xbf16, #tpu.memory_space<vmem>>, vector<32x324xbf16>
    %c192_71 = arith.constant 192 : index
    %c0_72 = arith.constant 0 : index
    %78 = vector.load %arg8[%c192_71, %c0_72] : memref<288x324xbf16, #tpu.memory_space<vmem>>, vector<32x324xbf16>
    tpu.vector_store %arg8[%c192_71, %c0_72], %77 {strides = array<i32>} : memref<288x324xbf16, #tpu.memory_space<vmem>>, vector<32x324xbf16>,
    %c0_73 = arith.constant 0 : index
    %c146_74 = arith.constant 146 : index
    %79 = vector.load %arg9[%c0_73, %c146_74] : memref<32x580xbf16, #tpu.memory_space<vmem>>, vector<32x324xbf16>
    %c224 = arith.constant 224 : index
    %c0_75 = arith.constant 0 : index
    %80 = vector.load %arg8[%c224, %c0_75] : memref<288x324xbf16, #tpu.memory_space<vmem>>, vector<32x324xbf16>
    tpu.vector_store %arg8[%c224, %c0_75], %79 {strides = array<i32>} : memref<288x324xbf16, #tpu.memory_space<vmem>>, vector<32x324xbf16>,
    %c0_76 = arith.constant 0 : index
    %c147_77 = arith.constant 147 : index
    %81 = vector.load %arg9[%c0_76, %c147_77] : memref<32x580xbf16, #tpu.memory_space<vmem>>, vector<32x324xbf16>
    %c256_78 = arith.constant 256 : index
    %c0_79 = arith.constant 0 : index
    %82 = vector.load %arg8[%c256_78, %c0_79] : memref<288x324xbf16, #tpu.memory_space<vmem>>, vector<32x324xbf16>
    tpu.vector_store %arg8[%c256_78, %c0_79], %81 {strides = array<i32>} : memref<288x324xbf16, #tpu.memory_space<vmem>>, vector<32x324xbf16>,
    %c0_80 = arith.constant 0 : index
    %c0_81 = arith.constant 0 : index
    %83 = vector.load %arg3[%c0_80, %c0_81] : memref<32x288xbf16, #tpu.memory_space<vmem>>, vector<32x288xbf16>
    %c0_82 = arith.constant 0 : index
    %c0_83 = arith.constant 0 : index
    %84 = vector.load %arg8[%c0_82, %c0_83] : memref<288x324xbf16, #tpu.memory_space<vmem>>, vector<288x324xbf16>
    %cst_84 = arith.constant dense<0.000000e+00> : vector<32x324xf32>
    %85 = tpu.matmul %83, %84, %cst_84 {dimension_numbers = #tpu.dot_dimension_numbers<[1], [0], [0], [1], [0, 0, 1, 1], [], []>} : vector<32x288xbf16>, vector<288x324xbf16>, vector<32x324xf32> -> vector<32x324xf32>
    %c0_85 = arith.constant 0 : index
    %c0_86 = arith.constant 0 : index
    %86 = vector.load %arg4[%c0_85, %c0_86] : memref<32x64xbf16, #tpu.memory_space<vmem>>, vector<32x64xbf16>
    %c0_87 = arith.constant 0 : index
    %c0_88 = arith.constant 0 : index
    %c128_89 = arith.constant 128 : index
    %87 = vector.load %arg1[%c0_87, %c0_88, %c128_89] : memref<1x64x580xbf16, #tpu.memory_space<vmem>>, vector<1x64x324xbf16>
    %88 = vector.shape_cast %87 : vector<1x64x324xbf16> to vector<64x324xbf16>
    %cst_90 = arith.constant dense<0.000000e+00> : vector<32x324xf32>
    %89 = tpu.matmul %86, %88, %cst_90 {dimension_numbers = #tpu.dot_dimension_numbers<[1], [0], [0], [1], [0, 0, 1, 1], [], []>} : vector<32x64xbf16>, vector<64x324xbf16>, vector<32x324xf32> -> vector<32x324xf32>
    %90 = arith.addf %85, %89 : vector<32x324xf32>
    %91 = vector.broadcast %0 : vector<1x324xf32> to vector<32x324xf32>
    %92 = arith.mulf %90, %91 : vector<32x324xf32>
    %cst_91 = arith.constant dense<0.000000e+00> : vector<32xf32>
    %93 = vector.multi_reduction <add>, %92, %cst_91 [1] : vector<32x324xf32> to vector<32xf32>
    %94 = vector.shape_cast %93 : vector<32xf32> to vector<32x1xf32>
    %95 = arith.mulf %92, %92 : vector<32x324xf32>
    %cst_92 = arith.constant dense<0.000000e+00> : vector<32xf32>
    %96 = vector.multi_reduction <add>, %95, %cst_92 [1] : vector<32x324xf32> to vector<32xf32>
    %97 = vector.shape_cast %96 : vector<32xf32> to vector<32x1xf32>
    %cst_93 = arith.constant 3.906250e-03 : f32
    %98 = vector.broadcast %cst_93 : f32 to vector<32x1xf32>
    %99 = arith.mulf %94, %98 : vector<32x1xf32>
    %cst_94 = arith.constant 3.906250e-03 : f32
    %100 = vector.broadcast %cst_94 : f32 to vector<32x1xf32>
    %101 = arith.mulf %97, %100 : vector<32x1xf32>
    %102 = arith.mulf %99, %99 : vector<32x1xf32>
    %103 = arith.subf %101, %102 : vector<32x1xf32>
    %cst_95 = arith.constant 0.000000e+00 : f32
    %104 = vector.broadcast %cst_95 : f32 to vector<32x1xf32>
    %105 = arith.maximumf %103, %104 : vector<32x1xf32>
    %106 = vector.broadcast %99 : vector<32x1xf32> to vector<32x324xf32>
    %107 = arith.subf %92, %106 : vector<32x324xf32>
    %cst_96 = arith.constant 1.000000e-03 : f32
    %108 = vector.broadcast %cst_96 : f32 to vector<32x1xf32>
    %109 = arith.addf %105, %108 : vector<32x1xf32>
    %110 = math.rsqrt %109 : vector<32x1xf32>
    %111 = vector.broadcast %110 : vector<32x1xf32> to vector<32x324xf32>
    %112 = arith.mulf %107, %111 : vector<32x324xf32>
    %cst_97 = arith.constant 0.000000e+00 : f32
    %113 = vector.broadcast %cst_97 : f32 to vector<32x324xf32>
    %114 = arith.cmpf ogt, %112, %113 : vector<32x324xf32>
    %cst_98 = arith.constant 2.000000e-01 : f32
    %115 = vector.broadcast %cst_98 : f32 to vector<32x324xf32>
    %116 = arith.mulf %115, %112 : vector<32x324xf32>
    %117 = arith.select %114, %112, %116 : vector<32x324xi1>, vector<32x324xf32>
    %118 = vector.broadcast %0 : vector<1x324xf32> to vector<32x324xf32>
    %119 = arith.mulf %117, %118 : vector<32x324xf32>
    %c0_99 = arith.constant 0 : index
    %c0_100 = arith.constant 0 : index
    %c0_101 = arith.constant 0 : index
    %120 = vector.load %arg6[%c0_99, %c0_100, %c0_101] : memref<1x32x580xbf16, #tpu.memory_space<vmem>>, vector<1x32x128xbf16>
    %121 = vector.shape_cast %120 : vector<1x32x128xbf16> to vector<32x128xbf16>
    %122 = vector.shape_cast %60 : vector<32x128xbf16> to vector<1x32x128xbf16>
    tpu.vector_store %arg6[%c0_99, %c0_100, %c0_101], %122 {strides = array<i32>} : memref<1x32x580xbf16, #tpu.memory_space<vmem>>, vector<1x32x128xbf16>,
    %c0_102 = arith.constant 0 : index
    %c0_103 = arith.constant 0 : index
    %c452_104 = arith.constant 452 : index
    %123 = vector.load %arg6[%c0_102, %c0_103, %c452_104] : memref<1x32x580xbf16, #tpu.memory_space<vmem>>, vector<1x32x128xbf16>
    %124 = vector.shape_cast %123 : vector<1x32x128xbf16> to vector<32x128xbf16>
    %125 = vector.shape_cast %60 : vector<32x128xbf16> to vector<1x32x128xbf16>
    tpu.vector_store %arg6[%c0_102, %c0_103, %c452_104], %125 {strides = array<i32>} : memref<1x32x580xbf16, #tpu.memory_space<vmem>>, vector<1x32x128xbf16>,
    %126 = arith.truncf %119 : vector<32x324xf32> to vector<32x324xbf16>
    %c0_105 = arith.constant 0 : index
    %c0_106 = arith.constant 0 : index
    %c128_107 = arith.constant 128 : index
    %127 = vector.load %arg6[%c0_105, %c0_106, %c128_107] : memref<1x32x580xbf16, #tpu.memory_space<vmem>>, vector<1x32x324xbf16>
    %128 = vector.shape_cast %127 : vector<1x32x324xbf16> to vector<32x324xbf16>
    %129 = vector.shape_cast %126 : vector<32x324xbf16> to vector<1x32x324xbf16>
    tpu.vector_store %arg6[%c0_105, %c0_106, %c128_107], %129 {strides = array<i32>} : memref<1x32x580xbf16, #tpu.memory_space<vmem>>, vector<1x32x324xbf16>,
    return
  }
  func.func @transform_0(%arg0: i32) -> (i32, i32, i32) {
    %c0_i32 = arith.constant 0 : i32
    %c0_i32_0 = arith.constant 0 : i32
    %c0_i32_1 = arith.constant 0 : i32
    return %arg0, %c0_i32, %c0_i32_0 : i32, i32, i32
  }
  func.func @transform_1(%arg0: i32) -> (i32, i32) {
    %c0_i32 = arith.constant 0 : i32
    %c0_i32_0 = arith.constant 0 : i32
    %c0_i32_1 = arith.constant 0 : i32
    return %c0_i32, %c0_i32_0 : i32, i32
  }
  func.func @transform_2(%arg0: i32) -> (i32, i32) {
    %c0_i32 = arith.constant 0 : i32
    %c0_i32_0 = arith.constant 0 : i32
    %c0_i32_1 = arith.constant 0 : i32
    return %c0_i32, %c0_i32_0 : i32, i32
  }
  func.func @transform_3(%arg0: i32) -> (i32, i32) {
    %c0_i32 = arith.constant 0 : i32
    %c0_i32_0 = arith.constant 0 : i32
    %c0_i32_1 = arith.constant 0 : i32
    return %c0_i32, %c0_i32_0 : i32, i32
  }
  func.func @transform_4(%arg0: i32) -> (i32, i32) {
    %c0_i32 = arith.constant 0 : i32
    %c0_i32_0 = arith.constant 0 : i32
    %c0_i32_1 = arith.constant 0 : i32
    return %c0_i32, %c0_i32_0 : i32, i32
  }
  func.func @transform_5(%arg0: i32) -> (i32, i32, i32) {
    %c0_i32 = arith.constant 0 : i32
    %c0_i32_0 = arith.constant 0 : i32
    %c0_i32_1 = arith.constant 0 : i32
    return %arg0, %c0_i32, %c0_i32_0 : i32, i32, i32
  }
}

</mosaic_0001>

<llo_original>
// kernel: tpu_custom_call.1
$region0: #{tpu_custom_call.1}
  #allocation0 [shape = 'u32[]', space=smem, size = 0x4, offset = 0x4, fixed_abs, tag = 'smem constant byte address 0x4 - core index']
  #allocation1 [shape = 'u32[144,128]{1,0:T(1,128)}', space=vmem, size = 0x12000, scoped, tag = 'internal scratch']
  %s0 = inlined_call_operand.hbm [shape: f32[8,128], index: 0, kind: input, shape index: {}]
  %s1 = inlined_call_operand.hbm [shape: f32[16,128], index: 1, kind: output, shape index: {}]
  %s2 = sld [smem:[#allocation0]]
  $region41: #{tpu_custom_call.1} parent=0
    _
  %s4 = ssub.s32 1, %s2
  %s5 = scalar_select 0, %s4, %s2
  $region1: #{tpu_custom_call.1} parent=0
    #allocation2 [shape = 'u8[4096]{0}', space=vmem, size = 0x1000, scoped, tag = 'input window, operand 0, single buffered']
    #allocation3 [shape = 's32[2]{0}', space=sflag, size = 0x8, scoped, tag = 'scoped memory for tpu_custom_call.1']
    #allocation4 [shape = 's32[2]{0}', space=sflag, size = 0x8, scoped, tag = 'scoped memory for tpu_custom_call.1']
    #allocation5 [shape = 'u8[8192]{0}', space=vmem, size = 0x2000, scoped, tag = 'output window, operand 0']
    %6 = vsyncpa [#allocation3], 0
    %7 = vsyncpa [#allocation4], 0
    %s8 = scalar_lea.sflag [#allocation4], 1
    %9 = vsyncpa %s8, 0
    loop: start=0, step=1, limit=4
    $region2: #{tpu_custom_call.1} parent=1 // loop_pre_header
      _
    $region3: #{tpu_custom_call.1} parent=1 // loop_header
      %s11 = sphi 0, %s15
      %p12 = scmp.ge.s32.totalorder %s11, 4
      %s19 = sphi 0, %s19
      %s21 = sphi 0, %s19
      %s22 = sphi 0, %s21
      %s36 = sphi 0, %s22
      %s42 = sphi 0, %s44
      %s45 = sphi 0, %s42
      %s46 = sphi 0, %s45
      %s62 = sphi 0, %s46
    $region4: #{tpu_custom_call.1} parent=1 // loop_header_branch
      %14 = sbr.rel (%p12) target = $region8
    $region5: #{tpu_custom_call.1} parent=1 // loop_body
      %s16 = ssub.s32 %s11, 1
      %s17 = ssub.s32 %s11, 2
      %s18 = sadd.s32 %s11, 1
      %s20 = sadd.s32 %s19, 1
      %p23 = scmp.eq.s32.totalorder %s11, 1
      %p24 = scmp.ne.s32.totalorder %s19, %s21
      %p25 = scmp.eq.s32.totalorder %s11, 0
      %p26 = por %p24, %p25
      %p27 = scmp.ne.s32.totalorder %s19, %s21
      %p28 = scmp.eq.s32.totalorder %s16, 1
      %p29 = por %p27, %p28
      %p30 = scmp.ne.s32.totalorder %s21, %s22
      %p31 = scmp.eq.s32.totalorder %s16, 0
      %p32 = por %p30, %p31
      %p33 = scmp.ne.s32.totalorder %s21, %s22
      %p34 = scmp.eq.s32.totalorder %s17, 1
      %p35 = por %p33, %p34
      %p37 = scmp.ne.s32.totalorder %s22, %s36
      %p38 = scmp.eq.s32.totalorder %s17, 0
      %p39 = por %p37, %p38
      %s40 = ssub.s32 %s11, %s18
      %p41 = scmp.eq.s32.totalorder %s40, 0
      %s43 = sadd.s32 %s42, 1
      %s44 = scalar_select %p41, %s42, %s43
      %p47 = pneg %p41
      %p48 = scmp.eq.s32.totalorder %s11, 1
      %p49 = por %p47, %p48
      %p50 = scmp.ne.s32.totalorder %s42, %s45
      %p51 = scmp.eq.s32.totalorder %s11, 0
      %p52 = por %p50, %p51
      %p53 = scmp.ne.s32.totalorder %s42, %s45
      %p54 = scmp.eq.s32.totalorder %s16, 1
      %p55 = por %p53, %p54
      %p56 = scmp.ne.s32.totalorder %s45, %s46
      %p57 = scmp.eq.s32.totalorder %s16, 0
      %p58 = por %p56, %p57
      %p59 = scmp.ne.s32.totalorder %s45, %s46
      %p60 = scmp.eq.s32.totalorder %s17, 1
      %p61 = por %p59, %p60
      %p63 = scmp.ne.s32.totalorder %s46, %s62
      %p64 = scmp.eq.s32.totalorder %s17, 0
      %p65 = por %p63, %p64
      %p66 = scmp.le.s32.totalorder 1, %s11
      %p67 = scmp.lt.s32.totalorder %s11, 3
      %p68 = pnand %p66, %p67
      %p69 = pneg %p68
      // Predicated region
      $region9: #{tpu_custom_call.1} parent=5 // pred_check
        _
      $region10: #{tpu_custom_call.1} parent=5 // pred_check_branch
        %71 = sbr.rel (%p68) target = $region12
      $region11: #{tpu_custom_call.1} parent=5 // pred_region
        %s72 = ssub.s32 %s11, 1
        // Predicated region
        $region13: #{tpu_custom_call.1} parent=11 // pred_check
          %p73 = pneg %p32
        $region14: #{tpu_custom_call.1} parent=11 // pred_check_branch
          %75 = sbr.rel (%p73) target = $region16
        $region15: #{tpu_custom_call.1} parent=11 // pred_region
          %s77 = ssub.s32 128, 128
          %78 = vsyncadd [#allocation3], %s77
          %s80 = sshll.u32 [#allocation2], 4
          %s81 = int_to_ptr.vmem [resolvable:$true] %s80
          %83 = dma.hbm_to_vmem [thread:$0]  %s0, 128, %s81, [#allocation3]
        $region16: #{tpu_custom_call.1} parent=11 // pred_fallthru
          _
      $region12: #{tpu_custom_call.1} parent=5 // pred_fallthru
        _
      %p84 = scmp.lt.s32.totalorder %s11, 2
      // Predicated region
      $region17: #{tpu_custom_call.1} parent=5 // pred_check
        %p85 = pneg %p84
      $region18: #{tpu_custom_call.1} parent=5 // pred_check_branch
        %87 = sbr.rel (%p85) target = $region20
      $region19: #{tpu_custom_call.1} parent=5 // pred_region
        _
      $region20: #{tpu_custom_call.1} parent=5 // pred_fallthru
        _
      %p88 = scmp.le.s32.totalorder 1, %s11
      %p89 = scmp.lt.s32.totalorder %s11, 3
      %p90 = pnand %p88, %p89
      %p91 = pneg %p90
      // Predicated region
      $region21: #{tpu_custom_call.1} parent=5 // pred_check
        _
      $region22: #{tpu_custom_call.1} parent=5 // pred_check_branch
        %93 = sbr.rel (%p90) target = $region24
      $region23: #{tpu_custom_call.1} parent=5 // pred_region
        %s94 = ssub.s32 %s11, 1
        // Predicated region
        $region25: #{tpu_custom_call.1} parent=23 // pred_check
          %p95 = pneg %p32
        $region26: #{tpu_custom_call.1} parent=23 // pred_check_branch
          %97 = sbr.rel (%p95) target = $region28
        $region27: #{tpu_custom_call.1} parent=23 // pred_region
          %98 = dma.done [#allocation3], 128
        $region28: #{tpu_custom_call.1} parent=23 // pred_fallthru
          _
        %p99 = pneg %p32
        %p100 = pneg %p29
        %p101 = pneg %p58
        %p102 = pneg %p55
        %s103 = sand.u32 %s45, 1
        %s104 = scalar_lea.sflag [#allocation4], %s103
        %s105 = sand.u32 %s45, 1
        %s106 = smul.addr %s105, 8
        %s107 = scalar_lea.vmem [#allocation5], %s106
        %v108 = vld [vmem:[#allocation2] sm:$0xff]
        %109 = vst [vmem:[%s107] sm:$0xff] %v108
        %s110 = sand.u32 %s45, 1
        %s111 = scalar_lea.sflag [#allocation4], %s110
        %s112 = sand.u32 %s45, 1
        %s113 = smul.addr %s112, 8
        %s114 = scalar_lea.vmem [#allocation5], %s113
        // Predicated region
        $region29: #{tpu_custom_call.1} parent=23 // pred_check
          %p115 = pneg %p55
        $region30: #{tpu_custom_call.1} parent=23 // pred_check_branch
          %117 = sbr.rel (%p115) target = $region32
        $region31: #{tpu_custom_call.1} parent=23 // pred_region
          %s119 = ssub.s32 128, 128
          %120 = vsyncadd %s111, %s119
          %s121 = smul.addr %s16, 128
          %s122 = scalar_lea.hbm %s1, %s121
          %s124 = sshll.u32 %s114, 4
          %s125 = int_to_ptr.vmem [resolvable:$true] %s124
          %127 = dma.vmem_to_hbm [thread:$0]  %s125, 128, %s122, %s111
        $region32: #{tpu_custom_call.1} parent=23 // pred_fallthru
          _
      $region24: #{tpu_custom_call.1} parent=5 // pred_fallthru
        _
      %p128 = scmp.le.s32.totalorder 2, %s11
      // Predicated region
      $region33: #{tpu_custom_call.1} parent=5 // pred_check
        %p129 = pneg %p128
      $region34: #{tpu_custom_call.1} parent=5 // pred_check_branch
        %131 = sbr.rel (%p129) target = $region36
      $region35: #{tpu_custom_call.1} parent=5 // pred_region
        %s132 = ssub.s32 %s11, 2
        // Predicated region
        $region37: #{tpu_custom_call.1} parent=35 // pred_check
          %p133 = pneg %p61
        $region38: #{tpu_custom_call.1} parent=35 // pred_check_branch
          %135 = sbr.rel (%p133) target = $region40
        $region39: #{tpu_custom_call.1} parent=35 // pred_region
          %s136 = sand.u32 %s46, 1
          %s137 = scalar_lea.sflag [#allocation4], %s136
          %s138 = sand.u32 %s46, 1
          %s139 = smul.addr %s138, 8
          %s140 = scalar_lea.vmem [#allocation5], %s139
          %141 = dma.done %s137, 128
        $region40: #{tpu_custom_call.1} parent=35 // pred_fallthru
          _
      $region36: #{tpu_custom_call.1} parent=5 // pred_fallthru
        _
    $region6: #{tpu_custom_call.1} parent=1 // loop_footer
      %s15 = sadd.s32 1, %s11
    $region7: #{tpu_custom_call.1} parent=1 // loop_footer_branch
      %10 = sbr.rel target = $region3
    $region8: #{tpu_custom_call.1} parent=1 // loop_exit
      _
    %142 = vsyncpa [#allocation3], 1
    %s143 = scalar_lea.sflag [#allocation3], 1
    %144 = vsyncpa %s143, 1
    %145 = vsyncpa [#allocation4], 1
    %s146 = scalar_lea.sflag [#allocation4], 1
    %147 = vsyncpa %s146, 1

// kernel: tpu_custom_call.1
$region0: #{tpu_custom_call.1}
  #allocation0 [shape = 'u32[]', space=smem, size = 0x4, offset = 0x4, fixed_abs, tag = 'smem constant byte address 0x4 - core index']
  #allocation1 [shape = 'u32[144,128]{1,0:T(1,128)}', space=vmem, size = 0x12000, scoped, tag = 'internal scratch']
  #allocation2 [shape = 'bf16[576,324]{1,0:T(8,128)(2,1)}', space=vmem, size = 0x6c000, scoped, tag = 'scratch operand']
  #allocation3 [shape = 'bf16[288,324]{1,0:T(8,128)(2,1)}', space=vmem, size = 0x36000, scoped, tag = 'scratch operand']
  #allocation4 [shape = 'bf16[32,580]{1,0:T(8,128)(2,1)}', space=vmem, size = 0xa000, scoped, tag = 'scratch operand']
  %s0 = inlined_call_operand.hbm [shape: bf16[2,64,580], index: 0, kind: input, shape index: {}]
  %s1 = inlined_call_operand.hbm [shape: bf16[32,576], index: 1, kind: input, shape index: {}]
  %s2 = inlined_call_operand.hbm [shape: bf16[32,288], index: 2, kind: input, shape index: {}]
  %s3 = inlined_call_operand.hbm [shape: bf16[32,64], index: 3, kind: input, shape index: {}]
  %s4 = inlined_call_operand.vmem [shape: f32[1,324], index: 4, kind: input, shape index: {}]
  %s5 = inlined_call_operand.hbm [shape: bf16[2,32,580], index: 5, kind: output, shape index: {}]
  %s6 = sld [smem:[#allocation0]]
  $region69: #{tpu_custom_call.1} parent=0
    _
  %s8 = ssub.s32 1, %s6
  %s9 = scalar_select 0, %s8, %s6
  $region1: #{tpu_custom_call.1} parent=0
    #allocation5 [shape = 'u8[163840]{0}', space=vmem, size = 0x28000, scoped, tag = 'input window, operand 0']
    #allocation6 [shape = 's32[2]{0}', space=sflag, size = 0x8, scoped, tag = 'scoped memory for tpu_custom_call.1']
    #allocation7 [shape = 's32[2]{0}', space=sflag, size = 0x8, scoped, tag = 'scoped memory for tpu_custom_call.1']
    #allocation8 [shape = 'u8[40960]{0}', space=vmem, size = 0xa000, scoped, tag = 'input window, operand 1, single buffered']
    #allocation9 [shape = 's32[1]{0}', space=sflag, size = 0x4, scoped, tag = 'scoped memory for tpu_custom_call.1']
    #allocation10 [shape = 'u8[24576]{0}', space=vmem, size = 0x6000, scoped, tag = 'input window, operand 2, single buffered']
    #allocation11 [shape = 'u8[8192]{0}', space=vmem, size = 0x2000, scoped, tag = 'input window, operand 3, single buffered']
    #allocation12 [shape = 's32[1]{0}', space=sflag, size = 0x4, scoped, tag = 'scoped memory for tpu_custom_call.1']
    #allocation13 [shape = 'u8[81920]{0}', space=vmem, size = 0x14000, scoped, tag = 'output window, operand 0']
    %10 = vsyncpa [#allocation6], 0
    %s11 = scalar_lea.sflag [#allocation6], 1
    %12 = vsyncpa %s11, 0
    %13 = vsyncpa [#allocation9], 0
    %14 = vsyncpa [#allocation12], 0
    %15 = vsyncpa [#allocation7], 0
    %s16 = scalar_lea.sflag [#allocation7], 1
    %17 = vsyncpa %s16, 0
    loop: start=0, step=1, limit=4
    $region2: #{tpu_custom_call.1} parent=1 // loop_pre_header
      _
    $region3: #{tpu_custom_call.1} parent=1 // loop_header
      %s19 = sphi 0, %s23
      %p20 = scmp.ge.s32.totalorder %s19, 4
      %s29 = sphi 0, %s31
      %s32 = sphi 0, %s29
      %s33 = sphi 0, %s32
      %s49 = sphi 0, %s33
      %s53 = sphi 0, %s53
      %s55 = sphi 0, %s53
      %s56 = sphi 0, %s55
      %s70 = sphi 0, %s56
      %s74 = sphi 0, %s74
      %s76 = sphi 0, %s74
      %s77 = sphi 0, %s76
      %s91 = sphi 0, %s77
      %s95 = sphi 0, %s95
      %s97 = sphi 0, %s95
      %s98 = sphi 0, %s97
      %s112 = sphi 0, %s98
      %s116 = sphi 0, %s116
      %s118 = sphi 0, %s116
      %s119 = sphi 0, %s118
      %s133 = sphi 0, %s119
      %s139 = sphi 0, %s141
      %s142 = sphi 0, %s139
      %s143 = sphi 0, %s142
      %s159 = sphi 0, %s143
    $region4: #{tpu_custom_call.1} parent=1 // loop_header_branch
      %22 = sbr.rel (%p20) target = $region8
    $region5: #{tpu_custom_call.1} parent=1 // loop_body
      %s24 = ssub.s32 %s19, 1
      %s25 = ssub.s32 %s19, 2
      %s26 = sadd.s32 %s19, 1
      %s27 = ssub.s32 %s19, %s26
      %p28 = scmp.eq.s32.totalorder %s27, 0
      %s30 = sadd.s32 %s29, 1
      %s31 = scalar_select %p28, %s29, %s30
      %p34 = pneg %p28
      %p35 = scmp.eq.s32.totalorder %s19, 1
      %p36 = por %p34, %p35
      %p37 = scmp.ne.s32.totalorder %s29, %s32
      %p38 = scmp.eq.s32.totalorder %s19, 0
      %p39 = por %p37, %p38
      %p40 = scmp.ne.s32.totalorder %s29, %s32
      %p41 = scmp.eq.s32.totalorder %s24, 1
      %p42 = por %p40, %p41
      %p43 = scmp.ne.s32.totalorder %s32, %s33
      %p44 = scmp.eq.s32.totalorder %s24, 0
      %p45 = por %p43, %p44
      %p46 = scmp.ne.s32.totalorder %s32, %s33
      %p47 = scmp.eq.s32.totalorder %s25, 1
      %p48 = por %p46, %p47
      %p50 = scmp.ne.s32.totalorder %s33, %s49
      %p51 = scmp.eq.s32.totalorder %s25, 0
      %p52 = por %p50, %p51
      %s54 = sadd.s32 %s53, 1
      %p57 = scmp.eq.s32.totalorder %s19, 1
      %p58 = scmp.ne.s32.totalorder %s53, %s55
      %p59 = scmp.eq.s32.totalorder %s19, 0
      %p60 = por %p58, %p59
      %p61 = scmp.ne.s32.totalorder %s53, %s55
      %p62 = scmp.eq.s32.totalorder %s24, 1
      %p63 = por %p61, %p62
      %p64 = scmp.ne.s32.totalorder %s55, %s56
      %p65 = scmp.eq.s32.totalorder %s24, 0
      %p66 = por %p64, %p65
      %p67 = scmp.ne.s32.totalorder %s55, %s56
      %p68 = scmp.eq.s32.totalorder %s25, 1
      %p69 = por %p67, %p68
      %p71 = scmp.ne.s32.totalorder %s56, %s70
      %p72 = scmp.eq.s32.totalorder %s25, 0
      %p73 = por %p71, %p72
      %s75 = sadd.s32 %s74, 1
      %p78 = scmp.eq.s32.totalorder %s19, 1
      %p79 = scmp.ne.s32.totalorder %s74, %s76
      %p80 = scmp.eq.s32.totalorder %s19, 0
      %p81 = por %p79, %p80
      %p82 = scmp.ne.s32.totalorder %s74, %s76
      %p83 = scmp.eq.s32.totalorder %s24, 1
      %p84 = por %p82, %p83
      %p85 = scmp.ne.s32.totalorder %s76, %s77
      %p86 = scmp.eq.s32.totalorder %s24, 0
      %p87 = por %p85, %p86
      %p88 = scmp.ne.s32.totalorder %s76, %s77
      %p89 = scmp.eq.s32.totalorder %s25, 1
      %p90 = por %p88, %p89
      %p92 = scmp.ne.s32.totalorder %s77, %s91
      %p93 = scmp.eq.s32.totalorder %s25, 0
      %p94 = por %p92, %p93
      %s96 = sadd.s32 %s95, 1
      %p99 = scmp.eq.s32.totalorder %s19, 1
      %p100 = scmp.ne.s32.totalorder %s95, %s97
      %p101 = scmp.eq.s32.totalorder %s19, 0
      %p102 = por %p100, %p101
      %p103 = scmp.ne.s32.totalorder %s95, %s97
      %p104 = scmp.eq.s32.totalorder %s24, 1
      %p105 = por %p103, %p104
      %p106 = scmp.ne.s32.totalorder %s97, %s98
      %p107 = scmp.eq.s32.totalorder %s24, 0
      %p108 = por %p106, %p107
      %p109 = scmp.ne.s32.totalorder %s97, %s98
      %p110 = scmp.eq.s32.totalorder %s25, 1
      %p111 = por %p109, %p110
      %p113 = scmp.ne.s32.totalorder %s98, %s112
      %p114 = scmp.eq.s32.totalorder %s25, 0
      %p115 = por %p113, %p114
      %s117 = sadd.s32 %s116, 1
      %p120 = scmp.eq.s32.totalorder %s19, 1
      %p121 = scmp.ne.s32.totalorder %s116, %s118
      %p122 = scmp.eq.s32.totalorder %s19, 0
      %p123 = por %p121, %p122
      %p124 = scmp.ne.s32.totalorder %s116, %s118
      %p125 = scmp.eq.s32.totalorder %s24, 1
      %p126 = por %p124, %p125
      %p127 = scmp.ne.s32.totalorder %s118, %s119
      %p128 = scmp.eq.s32.totalorder %s24, 0
      %p129 = por %p127, %p128
      %p130 = scmp.ne.s32.totalorder %s118, %s119
      %p131 = scmp.eq.s32.totalorder %s25, 1
      %p132 = por %p130, %p131
      %p134 = scmp.ne.s32.totalorder %s119, %s133
      %p135 = scmp.eq.s32.totalorder %s25, 0
      %p136 = por %p134, %p135
      %s137 = ssub.s32 %s19, %s26
      %p138 = scmp.eq.s32.totalorder %s137, 0
      %s140 = sadd.s32 %s139, 1
      %s141 = scalar_select %p138, %s139, %s140
      %p144 = pneg %p138
      %p145 = scmp.eq.s32.totalorder %s19, 1
      %p146 = por %p144, %p145
      %p147 = scmp.ne.s32.totalorder %s139, %s142
      %p148 = scmp.eq.s32.totalorder %s19, 0
      %p149 = por %p147, %p148
      %p150 = scmp.ne.s32.totalorder %s139, %s142
      %p151 = scmp.eq.s32.totalorder %s24, 1
      %p152 = por %p150, %p151
      %p153 = scmp.ne.s32.totalorder %s142, %s143
      %p154 = scmp.eq.s32.totalorder %s24, 0
      %p155 = por %p153, %p154
      %p156 = scmp.ne.s32.totalorder %s142, %s143
      %p157 = scmp.eq.s32.totalorder %s25, 1
      %p158 = por %p156, %p157
      %p160 = scmp.ne.s32.totalorder %s143, %s159
      %p161 = scmp.eq.s32.totalorder %s25, 0
      %p162 = por %p160, %p161
      %p163 = scmp.le.s32.totalorder 1, %s19
      %p164 = scmp.lt.s32.totalorder %s19, 3
      %p165 = pnand %p163, %p164
      %p166 = pneg %p165
      // Predicated region
      $region9: #{tpu_custom_call.1} parent=5 // pred_check
        _
      $region10: #{tpu_custom_call.1} parent=5 // pred_check_branch
        %168 = sbr.rel (%p165) target = $region12
      $region11: #{tpu_custom_call.1} parent=5 // pred_region
        %s169 = ssub.s32 %s19, 1
        // Predicated region
        $region13: #{tpu_custom_call.1} parent=11 // pred_check
          %p170 = pneg %p66
        $region14: #{tpu_custom_call.1} parent=11 // pred_check_branch
          %172 = sbr.rel (%p170) target = $region16
        $region15: #{tpu_custom_call.1} parent=11 // pred_region
          %s174 = ssub.s32 1280, 1280
          %175 = vsyncadd [#allocation9], %s174
          %s176 = sshll.u32 [#allocation8], 4
          %s177 = int_to_ptr.vmem [resolvable:$true] %s176
          %182 = dma.hbm_to_vmem [thread:$0]  %s1, 1280, %s177, [#allocation9], 320, 320, 20
        $region16: #{tpu_custom_call.1} parent=11 // pred_fallthru
          _
        // Predicated region
        $region17: #{tpu_custom_call.1} parent=11 // pred_check
          %p183 = pneg %p87
        $region18: #{tpu_custom_call.1} parent=11 // pred_check_branch
          %185 = sbr.rel (%p183) target = $region20
        $region19: #{tpu_custom_call.1} parent=11 // pred_region
          %s187 = ssub.s32 768, 768
          %188 = vsyncadd [#allocation9], %s187
          %s189 = sshll.u32 [#allocation10], 4
          %s190 = int_to_ptr.vmem [resolvable:$true] %s189
          %195 = dma.hbm_to_vmem [thread:$0]  %s2, 768, %s190, [#allocation9], 192, 192, 12
        $region20: #{tpu_custom_call.1} parent=11 // pred_fallthru
          _
        // Predicated region
        $region21: #{tpu_custom_call.1} parent=11 // pred_check
          %p196 = pneg %p108
        $region22: #{tpu_custom_call.1} parent=11 // pred_check_branch
          %198 = sbr.rel (%p196) target = $region24
        $region23: #{tpu_custom_call.1} parent=11 // pred_region
          %s200 = ssub.s32 256, 256
          %201 = vsyncadd [#allocation12], %s200
          %s202 = sshll.u32 [#allocation11], 4
          %s203 = int_to_ptr.vmem [resolvable:$true] %s202
          %208 = dma.hbm_to_vmem [thread:$0]  %s3, 256, %s203, [#allocation12], 64, 64, 4
        $region24: #{tpu_custom_call.1} parent=11 // pred_fallthru
          _
        // Predicated region
        $region25: #{tpu_custom_call.1} parent=11 // pred_check
          %p209 = pneg %p129
        $region26: #{tpu_custom_call.1} parent=11 // pred_check_branch
          %211 = sbr.rel (%p209) target = $region28
        $region27: #{tpu_custom_call.1} parent=11 // pred_region
          _
        $region28: #{tpu_custom_call.1} parent=11 // pred_fallthru
          _
      $region12: #{tpu_custom_call.1} parent=5 // pred_fallthru
        _
      %p212 = scmp.lt.s32.totalorder %s19, 2
      // Predicated region
      $region29: #{tpu_custom_call.1} parent=5 // pred_check
        %p213 = pneg %p212
      $region30: #{tpu_custom_call.1} parent=5 // pred_check_branch
        %215 = sbr.rel (%p213) target = $region32
      $region31: #{tpu_custom_call.1} parent=5 // pred_region
        // Predicated region
        $region33: #{tpu_custom_call.1} parent=31 // pred_check
          %p216 = pneg %p39
        $region34: #{tpu_custom_call.1} parent=31 // pred_check_branch
          %218 = sbr.rel (%p216) target = $region36
        $region35: #{tpu_custom_call.1} parent=31 // pred_region
          %s219 = sand.u32 %s29, 1
          %s220 = scalar_lea.sflag [#allocation6], %s219
          %s221 = sand.u32 %s29, 1
          %s222 = smul.addr %s221, 160
          %s223 = scalar_lea.vmem [#allocation5], %s222
          %s225 = ssub.s32 2560, 2560
          %226 = vsyncadd %s220, %s225
          %s227 = smul.addr %s19, 40
          %s228 = smul.addr %s227, 64
          %s229 = scalar_lea.hbm %s0, %s228
          %s230 = sshll.u32 %s223, 4
          %s231 = int_to_ptr.vmem [resolvable:$true] %s230
          %236 = dma.hbm_to_vmem [thread:$0]  %s229, 2560, %s231, %s220, 320, 320, 20
        $region36: #{tpu_custom_call.1} parent=31 // pred_fallthru
          _
      $region32: #{tpu_custom_call.1} parent=5 // pred_fallthru
        _
      %p237 = scmp.le.s32.totalorder 1, %s19
      %p238 = scmp.lt.s32.totalorder %s19, 3
      %p239 = pnand %p237, %p238
      %p240 = pneg %p239
      // Predicated region
      $region37: #{tpu_custom_call.1} parent=5 // pred_check
        _
      $region38: #{tpu_custom_call.1} parent=5 // pred_check_branch
        %242 = sbr.rel (%p239) target = $region40
      $region39: #{tpu_custom_call.1} parent=5 // pred_region
        %s243 = ssub.s32 %s19, 1
        %s244 = sand.u32 %s32, 1
        %s245 = scalar_lea.sflag [#allocation6], %s244
        %s246 = sand.u32 %s32, 1
        %s247 = smul.addr %s246, 160
        %s248 = scalar_lea.vmem [#allocation5], %s247
        // Predicated region
        $region41: #{tpu_custom_call.1} parent=39 // pred_check
          %p249 = pneg %p45
        $region42: #{tpu_custom_call.1} parent=39 // pred_check_branch
          %251 = sbr.rel (%p249) target = $region44
        $region43: #{tpu_custom_call.1} parent=39 // pred_region
          %252 = dma.done %s245, 2560
        $region44: #{tpu_custom_call.1} parent=39 // pred_fallthru
          _
        // Predicated region
        $region45: #{tpu_custom_call.1} parent=39 // pred_check
          %p253 = pneg %p66
        $region46: #{tpu_custom_call.1} parent=39 // pred_check_branch
          %255 = sbr.rel (%p253) target = $region48
        $region47: #{tpu_custom_call.1} parent=39 // pred_region
          %256 = dma.done [#allocation9], 1280
        $region48: #{tpu_custom_call.1} parent=39 // pred_fallthru
          _
        // Predicated region
        $region49: #{tpu_custom_call.1} parent=39 // pred_check
          %p257 = pneg %p87
        $region50: #{tpu_custom_call.1} parent=39 // pred_check_branch
          %259 = sbr.rel (%p257) target = $region52
        $region51: #{tpu_custom_call.1} parent=39 // pred_region
          %260 = dma.done [#allocation9], 768
        $region52: #{tpu_custom_call.1} parent=39 // pred_fallthru
          _
        // Predicated region
        $region53: #{tpu_custom_call.1} parent=39 // pred_check
          %p261 = pneg %p108
        $region54: #{tpu_custom_call.1} parent=39 // pred_check_branch
          %263 = sbr.rel (%p261) target = $region56
        $region55: #{tpu_custom_call.1} parent=39 // pred_region
          %264 = dma.done [#allocation12], 256
        $region56: #{tpu_custom_call.1} parent=39 // pred_fallthru
          _
        %s265 = sand.u32 %s32, 1
        %s266 = scalar_lea.sflag [#allocation6], %s265
        %s267 = sand.u32 %s32, 1
        %s268 = smul.addr %s267, 160
        %s269 = scalar_lea.vmem [#allocation5], %s268
        %p270 = pneg %p45
        %p271 = pneg %p42
        %p272 = pneg %p66
        %p273 = pneg %p63
        %p274 = pneg %p87
        %p275 = pneg %p84
        %p276 = pneg %p108
        %p277 = pneg %p105
        %p278 = pneg %p129
        %p279 = pneg %p126
        %p280 = pneg %p155
        %p281 = pneg %p152
        %s282 = sand.u32 %s142, 1
        %s283 = scalar_lea.sflag [#allocation7], %s282
        %s284 = sand.u32 %s142, 1
        %s285 = smul.addr %s284, 80
        %s286 = scalar_lea.vmem [#allocation13], %s285
        %v288 = vld [vmem:[%s4] sm:$0x7]
        %v289 = vld [vmem:[%s248] sm:$0xff]
        %v290 = vld [vmem:[%s248 + $0x8] sm:$0xff]
        %v291 = vld [vmem:[%s248 + $0x14] sm:$0xff]
        %v292 = vld [vmem:[%s248 + $0x1c] sm:$0xff]
        %v293 = vld [vmem:[%s248 + $0x28] sm:$0xff]
        %v294 = vld [vmem:[%s248 + $0x30] sm:$0xff]
        %v295 = vld [vmem:[%s248 + $0x3c] sm:$0xff]
        %v296 = vld [vmem:[%s248 + $0x44] sm:$0xff]
        %v297 = vld [vmem:[%s248 + $0x50] sm:$0xff]
        %v298 = vld [vmem:[%s248 + $0x58] sm:$0xff]
        %v299 = vld [vmem:[%s248 + $0x64] sm:$0xff]
        %v300 = vld [vmem:[%s248 + $0x6c] sm:$0xff]
        %v301 = vld [vmem:[%s248 + $0x78] sm:$0xff]
        %v302 = vld [vmem:[%s248 + $0x80] sm:$0xff]
        %v303 = vld [vmem:[%s248 + $0x8c] sm:$0xff]
        %v304 = vld [vmem:[%s248 + $0x94] sm:$0xff]
        %321 = vrot.lane.b32.xlu0 %v289, 19
        %v322 = vpop.permute.xlu0 %321
        %323 = vrot.lane.b32.xlu0 %v290, 19
        %v324 = vpop.permute.xlu0 %323
        %325 = vrot.lane.b32.xlu0 %v291, 19
        %v326 = vpop.permute.xlu0 %325
        %327 = vrot.lane.b32.xlu0 %v292, 19
        %v328 = vpop.permute.xlu0 %327
        %329 = vrot.lane.b32.xlu0 %v293, 19
        %v330 = vpop.permute.xlu0 %329
        %331 = vrot.lane.b32.xlu0 %v294, 19
        %v332 = vpop.permute.xlu0 %331
        %333 = vrot.lane.b32.xlu0 %v295, 19
        %v334 = vpop.permute.xlu0 %333
        %335 = vrot.lane.b32.xlu0 %v296, 19
        %v336 = vpop.permute.xlu0 %335
        %337 = vrot.lane.b32.xlu0 %v297, 19
        %v338 = vpop.permute.xlu0 %337
        %339 = vrot.lane.b32.xlu0 %v298, 19
        %v340 = vpop.permute.xlu0 %339
        %341 = vrot.lane.b32.xlu0 %v299, 19
        %v342 = vpop.permute.xlu0 %341
        %343 = vrot.lane.b32.xlu0 %v300, 19
        %v344 = vpop.permute.xlu0 %343
        %345 = vrot.lane.b32.xlu0 %v301, 19
        %v346 = vpop.permute.xlu0 %345
        %347 = vrot.lane.b32.xlu0 %v302, 19
        %v348 = vpop.permute.xlu0 %347
        %349 = vrot.lane.b32.xlu0 %v303, 19
        %v350 = vpop.permute.xlu0 %349
        %351 = vrot.lane.b32.xlu0 %v304, 19
        %v352 = vpop.permute.xlu0 %351
        %v353 = vrot.slane %v322, 4
        %v354 = vrot.slane %v324, 4
        %v355 = vrot.slane %v326, 4
        %v356 = vrot.slane %v328, 4
        %v357 = vrot.slane %v330, 4
        %v358 = vrot.slane %v332, 4
        %v359 = vrot.slane %v334, 4
        %v360 = vrot.slane %v336, 4
        %v361 = vrot.slane %v338, 4
        %v362 = vrot.slane %v340, 4
        %v363 = vrot.slane %v342, 4
        %v364 = vrot.slane %v344, 4
        %v365 = vrot.slane %v346, 4
        %v366 = vrot.slane %v348, 4
        %v367 = vrot.slane %v350, 4
        %v368 = vrot.slane %v352, 4
        %vm369 = vcmask 1043456
        %v370 = vsel %vm369, %v353, %v354
        %vm371 = vcmask 154624
        %v372 = vsel %vm371, %v322, %v370
        %v373 = vsel %vm371, %v324, %v354
        %v374 = vsel %vm369, %v355, %v356
        %v375 = vsel %vm371, %v326, %v374
        %v376 = vsel %vm371, %v328, %v356
        %v377 = vsel %vm369, %v357, %v358
        %v378 = vsel %vm371, %v330, %v377
        %v379 = vsel %vm371, %v332, %v358
        %v380 = vsel %vm369, %v359, %v360
        %v381 = vsel %vm371, %v334, %v380
        %v382 = vsel %vm371, %v336, %v360
        %v383 = vsel %vm369, %v361, %v362
        %v384 = vsel %vm371, %v338, %v383
        %v385 = vsel %vm371, %v340, %v362
        %v386 = vsel %vm369, %v363, %v364
        %v387 = vsel %vm371, %v342, %v386
        %v388 = vsel %vm371, %v344, %v364
        %v389 = vsel %vm369, %v365, %v366
        %v390 = vsel %vm371, %v346, %v389
        %v391 = vsel %vm371, %v348, %v366
        %v392 = vsel %vm369, %v367, %v368
        %v393 = vsel %vm371, %v350, %v392
        %v394 = vsel %vm371, %v352, %v368
        %411 = vst [vmem:[#allocation2] sm:$0xff] %v372
        %vm412 = vcmask 551936
        %413 = vst.msk [vmem:[#allocation2 + $0x8] sm:$0xf] %vm412, %v373
        %414 = vst [vmem:[#allocation2 + $0xc] sm:$0xff] %v375
        %415 = vst.msk [vmem:[#allocation2 + $0x14] sm:$0xf] %vm412, %v376
        %416 = vst [vmem:[#allocation2 + $0x18] sm:$0xff] %v378
        %417 = vst.msk [vmem:[#allocation2 + $0x20] sm:$0xf] %vm412, %v379
        %418 = vst [vmem:[#allocation2 + $0x24] sm:$0xff] %v381
        %419 = vst.msk [vmem:[#allocation2 + $0x2c] sm:$0xf] %vm412, %v382
        %420 = vst [vmem:[#allocation2 + $0x30] sm:$0xff] %v384
        %421 = vst.msk [vmem:[#allocation2 + $0x38] sm:$0xf] %vm412, %v385
        %422 = vst [vmem:[#allocation2 + $0x3c] sm:$0xff] %v387
        %423 = vst.msk [vmem:[#allocation2 + $0x44] sm:$0xf] %vm412, %v388
        %424 = vst [vmem:[#allocation2 + $0x48] sm:$0xff] %v390
        %425 = vst.msk [vmem:[#allocation2 + $0x50] sm:$0xf] %vm412, %v391
        %426 = vst [vmem:[#allocation2 + $0x54] sm:$0xff] %v393
        %427 = vst.msk [vmem:[#allocation2 + $0x5c] sm:$0xf] %vm412, %v394
        %v428 = vld [vmem:[%s248] sm:$0xff]
        %v429 = vld [vmem:[%s248 + $0x8] sm:$0xff]
        %v430 = vld [vmem:[%s248 + $0x14] sm:$0xff]
        %v431 = vld [vmem:[%s248 + $0x1c] sm:$0xff]
        %v432 = vld [vmem:[%s248 + $0x28] sm:$0xff]
        %v433 = vld [vmem:[%s248 + $0x30] sm:$0xff]
        %v434 = vld [vmem:[%s248 + $0x3c] sm:$0xff]
        %v435 = vld [vmem:[%s248 + $0x44] sm:$0xff]
        %v436 = vld [vmem:[%s248 + $0x50] sm:$0xff]
        %v437 = vld [vmem:[%s248 + $0x58] sm:$0xff]
        %v438 = vld [vmem:[%s248 + $0x64] sm:$0xff]
        %v439 = vld [vmem:[%s248 + $0x6c] sm:$0xff]
        %v440 = vld [vmem:[%s248 + $0x78] sm:$0xff]
        %v441 = vld [vmem:[%s248 + $0x80] sm:$0xff]
        %v442 = vld [vmem:[%s248 + $0x8c] sm:$0xff]
        %v443 = vld [vmem:[%s248 + $0x94] sm:$0xff]
        %460 = vrot.lane.b32.xlu0 %v428, 18
        %v461 = vpop.permute.xlu0 %460
        %462 = vrot.lane.b32.xlu0 %v429, 18
        %v463 = vpop.permute.xlu0 %462
        %464 = vrot.lane.b32.xlu0 %v430, 18
        %v465 = vpop.permute.xlu0 %464
        %466 = vrot.lane.b32.xlu0 %v431, 18
        %v467 = vpop.permute.xlu0 %466
        %468 = vrot.lane.b32.xlu0 %v432, 18
        %v469 = vpop.permute.xlu0 %468
        %470 = vrot.lane.b32.xlu0 %v433, 18
        %v471 = vpop.permute.xlu0 %470
        %472 = vrot.lane.b32.xlu0 %v434, 18
        %v473 = vpop.permute.xlu0 %472
        %474 = vrot.lane.b32.xlu0 %v435, 18
        %v475 = vpop.permute.xlu0 %474
        %476 = vrot.lane.b32.xlu0 %v436, 18
        %v477 = vpop.permute.xlu0 %476
        %478 = vrot.lane.b32.xlu0 %v437, 18
        %v479 = vpop.permute.xlu0 %478
        %480 = vrot.lane.b32.xlu0 %v438, 18
        %v481 = vpop.permute.xlu0 %480
        %482 = vrot.lane.b32.xlu0 %v439, 18
        %v483 = vpop.permute.xlu0 %482
        %484 = vrot.lane.b32.xlu0 %v440, 18
        %v485 = vpop.permute.xlu0 %484
        %486 = vrot.lane.b32.xlu0 %v441, 18
        %v487 = vpop.permute.xlu0 %486
        %488 = vrot.lane.b32.xlu0 %v442, 18
        %v489 = vpop.permute.xlu0 %488
        %490 = vrot.lane.b32.xlu0 %v443, 18
        %v491 = vpop.permute.xlu0 %490
        %v492 = vrot.slane %v461, 4
        %v493 = vrot.slane %v463, 4
        %v494 = vrot.slane %v465, 4
        %v495 = vrot.slane %v467, 4
        %v496 = vrot.slane %v469, 4
        %v497 = vrot.slane %v471, 4
        %v498 = vrot.slane %v473, 4
        %v499 = vrot.slane %v475, 4
        %v500 = vrot.slane %v477, 4
        %v501 = vrot.slane %v479, 4
        %v502 = vrot.slane %v481, 4
        %v503 = vrot.slane %v483, 4
        %v504 = vrot.slane %v485, 4
        %v505 = vrot.slane %v487, 4
        %v506 = vrot.slane %v489, 4
        %v507 = vrot.slane %v491, 4
        %v508 = vsel %vm369, %v492, %v493
        %vm509 = vcmask 146432
        %v510 = vsel %vm509, %v461, %v508
        %v511 = vsel %vm509, %v463, %v493
        %v512 = vsel %vm369, %v494, %v495
        %v513 = vsel %vm509, %v465, %v512
        %v514 = vsel %vm509, %v467, %v495
        %v515 = vsel %vm369, %v496, %v497
        %v516 = vsel %vm509, %v469, %v515
        %v517 = vsel %vm509, %v471, %v497
        %v518 = vsel %vm369, %v498, %v499
        %v519 = vsel %vm509, %v473, %v518
        %v520 = vsel %vm509, %v475, %v499
        %v521 = vsel %vm369, %v500, %v501
        %v522 = vsel %vm509, %v477, %v521
        %v523 = vsel %vm509, %v479, %v501
        %v524 = vsel %vm369, %v502, %v503
        %v525 = vsel %vm509, %v481, %v524
        %v526 = vsel %vm509, %v483, %v503
        %v527 = vsel %vm369, %v504, %v505
        %v528 = vsel %vm509, %v485, %v527
        %v529 = vsel %vm509, %v487, %v505
        %v530 = vsel %vm369, %v506, %v507
        %v531 = vsel %vm509, %v489, %v530
        %v532 = vsel %vm509, %v491, %v507
        %549 = vst [vmem:[#allocation2 + $0x60] sm:$0xff] %v510
        %550 = vst.msk [vmem:[#allocation2 + $0x68] sm:$0xf] %vm412, %v511
        %551 = vst [vmem:[#allocation2 + $0x6c] sm:$0xff] %v513
        %552 = vst.msk [vmem:[#allocation2 + $0x74] sm:$0xf] %vm412, %v514
        %553 = vst [vmem:[#allocation2 + $0x78] sm:$0xff] %v516
        %554 = vst.msk [vmem:[#allocation2 + $0x80] sm:$0xf] %vm412, %v517
        %555 = vst [vmem:[#allocation2 + $0x84] sm:$0xff] %v519
        %556 = vst.msk [vmem:[#allocation2 + $0x8c] sm:$0xf] %vm412, %v520
        %557 = vst [vmem:[#allocation2 + $0x90] sm:$0xff] %v522
        %558 = vst.msk [vmem:[#allocation2 + $0x98] sm:$0xf] %vm412, %v523
        %559 = vst [vmem:[#allocation2 + $0x9c] sm:$0xff] %v525
        %560 = vst.msk [vmem:[#allocation2 + $0xa4] sm:$0xf] %vm412, %v526
        %561 = vst [vmem:[#allocation2 + $0xa8] sm:$0xff] %v528
        %562 = vst.msk [vmem:[#allocation2 + $0xb0] sm:$0xf] %vm412, %v529
        %563 = vst [vmem:[#allocation2 + $0xb4] sm:$0xff] %v531
        %564 = vst.msk [vmem:[#allocation2 + $0xbc] sm:$0xf] %vm412, %v532
        %v565 = vld [vmem:[%s248] sm:$0xff]
        %v566 = vld [vmem:[%s248 + $0x8] sm:$0xff]
        %v567 = vld [vmem:[%s248 + $0x14] sm:$0xff]
        %v568 = vld [vmem:[%s248 + $0x1c] sm:$0xff]
        %v569 = vld [vmem:[%s248 + $0x28] sm:$0xff]
        %v570 = vld [vmem:[%s248 + $0x30] sm:$0xff]
        %v571 = vld [vmem:[%s248 + $0x3c] sm:$0xff]
        %v572 = vld [vmem:[%s248 + $0x44] sm:$0xff]
        %v573 = vld [vmem:[%s248 + $0x50] sm:$0xff]
        %v574 = vld [vmem:[%s248 + $0x58] sm:$0xff]
        %v575 = vld [vmem:[%s248 + $0x64] sm:$0xff]
        %v576 = vld [vmem:[%s248 + $0x6c] sm:$0xff]
        %v577 = vld [vmem:[%s248 + $0x78] sm:$0xff]
        %v578 = vld [vmem:[%s248 + $0x80] sm:$0xff]
        %v579 = vld [vmem:[%s248 + $0x8c] sm:$0xff]
        %v580 = vld [vmem:[%s248 + $0x94] sm:$0xff]
        %597 = vrot.lane.b32.xlu0 %v565, 17
        %v598 = vpop.permute.xlu0 %597
        %599 = vrot.lane.b32.xlu0 %v566, 17
        %v600 = vpop.permute.xlu0 %599
        %601 = vrot.lane.b32.xlu0 %v567, 17
        %v602 = vpop.permute.xlu0 %601
        %603 = vrot.lane.b32.xlu0 %v568, 17
        %v604 = vpop.permute.xlu0 %603
        %605 = vrot.lane.b32.xlu0 %v569, 17
        %v606 = vpop.permute.xlu0 %605
        %607 = vrot.lane.b32.xlu0 %v570, 17
        %v608 = vpop.permute.xlu0 %607
        %609 = vrot.lane.b32.xlu0 %v571, 17
        %v610 = vpop.permute.xlu0 %609
        %611 = vrot.lane.b32.xlu0 %v572, 17
        %v612 = vpop.permute.xlu0 %611
        %613 = vrot.lane.b32.xlu0 %v573, 17
        %v614 = vpop.permute.xlu0 %613
        %615 = vrot.lane.b32.xlu0 %v574, 17
        %v616 = vpop.permute.xlu0 %615
        %617 = vrot.lane.b32.xlu0 %v575, 17
        %v618 = vpop.permute.xlu0 %617
        %619 = vrot.lane.b32.xlu0 %v576, 17
        %v620 = vpop.permute.xlu0 %619
        %621 = vrot.lane.b32.xlu0 %v577, 17
        %v622 = vpop.permute.xlu0 %621
        %623 = vrot.lane.b32.xlu0 %v578, 17
        %v624 = vpop.permute.xlu0 %623
        %625 = vrot.lane.b32.xlu0 %v579, 17
        %v626 = vpop.permute.xlu0 %625
        %627 = vrot.lane.b32.xlu0 %v580, 17
        %v628 = vpop.permute.xlu0 %627
        %v629 = vrot.slane %v598, 4
        %v630 = vrot.slane %v600, 4
        %v631 = vrot.slane %v602, 4
        %v632 = vrot.slane %v604, 4
        %v633 = vrot.slane %v606, 4
        %v634 = vrot.slane %v608, 4
        %v635 = vrot.slane %v610, 4
        %v636 = vrot.slane %v612, 4
        %v637 = vrot.slane %v614, 4
        %v638 = vrot.slane %v616, 4
        %v639 = vrot.slane %v618, 4
        %v640 = vrot.slane %v620, 4
        %v641 = vrot.slane %v622, 4
        %v642 = vrot.slane %v624, 4
        %v643 = vrot.slane %v626, 4
        %v644 = vrot.slane %v628, 4
        %v645 = vsel %vm369, %v629, %v630
        %vm646 = vcmask 138240
        %v647 = vsel %vm646, %v598, %v645
        %v648 = vsel %vm646, %v600, %v630
        %v649 = vsel %vm369, %v631, %v632
        %v650 = vsel %vm646, %v602, %v649
        %v651 = vsel %vm646, %v604, %v632
        %v652 = vsel %vm369, %v633, %v634
        %v653 = vsel %vm646, %v606, %v652
        %v654 = vsel %vm646, %v608, %v634
        %v655 = vsel %vm369, %v635, %v636
        %v656 = vsel %vm646, %v610, %v655
        %v657 = vsel %vm646, %v612, %v636
        %v658 = vsel %vm369, %v637, %v638
        %v659 = vsel %vm646, %v614, %v658
        %v660 = vsel %vm646, %v616, %v638
        %v661 = vsel %vm369, %v639, %v640
        %v662 = vsel %vm646, %v618, %v661
        %v663 = vsel %vm646, %v620, %v640
        %v664 = vsel %vm369, %v641, %v642
        %v665 = vsel %vm646, %v622, %v664
        %v666 = vsel %vm646, %v624, %v642
        %v667 = vsel %vm369, %v643, %v644
        %v668 = vsel %vm646, %v626, %v667
        %v669 = vsel %vm646, %v628, %v644
        %686 = vst [vmem:[#allocation2 + $0xc0] sm:$0xff] %v647
        %687 = vst.msk [vmem:[#allocation2 + $0xc8] sm:$0xf] %vm412, %v648
        %688 = vst [vmem:[#allocation2 + $0xcc] sm:$0xff] %v650
        %689 = vst.msk [vmem:[#allocation2 + $0xd4] sm:$0xf] %vm412, %v651
        %690 = vst [vmem:[#allocation2 + $0xd8] sm:$0xff] %v653
        %691 = vst.msk [vmem:[#allocation2 + $0xe0] sm:$0xf] %vm412, %v654
        %692 = vst [vmem:[#allocation2 + $0xe4] sm:$0xff] %v656
        %693 = vst.msk [vmem:[#allocation2 + $0xec] sm:$0xf] %vm412, %v657
        %694 = vst [vmem:[#allocation2 + $0xf0] sm:$0xff] %v659
        %695 = vst.msk [vmem:[#allocation2 + $0xf8] sm:$0xf] %vm412, %v660
        %696 = vst [vmem:[#allocation2 + $0xfc] sm:$0xff] %v662
        %697 = vst.msk [vmem:[#allocation2 + $0x104] sm:$0xf] %vm412, %v663
        %698 = vst [vmem:[#allocation2 + $0x108] sm:$0xff] %v665
        %699 = vst.msk [vmem:[#allocation2 + $0x110] sm:$0xf] %vm412, %v666
        %700 = vst [vmem:[#allocation2 + $0x114] sm:$0xff] %v668
        %701 = vst.msk [vmem:[#allocation2 + $0x11c] sm:$0xf] %vm412, %v669
        %v702 = vld [vmem:[%s248] sm:$0xff]
        %v703 = vld [vmem:[%s248 + $0x8] sm:$0xff]
        %v704 = vld [vmem:[%s248 + $0x14] sm:$0xff]
        %v705 = vld [vmem:[%s248 + $0x1c] sm:$0xff]
        %v706 = vld [vmem:[%s248 + $0x28] sm:$0xff]
        %v707 = vld [vmem:[%s248 + $0x30] sm:$0xff]
        %v708 = vld [vmem:[%s248 + $0x3c] sm:$0xff]
        %v709 = vld [vmem:[%s248 + $0x44] sm:$0xff]
        %v710 = vld [vmem:[%s248 + $0x50] sm:$0xff]
        %v711 = vld [vmem:[%s248 + $0x58] sm:$0xff]
        %v712 = vld [vmem:[%s248 + $0x64] sm:$0xff]
        %v713 = vld [vmem:[%s248 + $0x6c] sm:$0xff]
        %v714 = vld [vmem:[%s248 + $0x78] sm:$0xff]
        %v715 = vld [vmem:[%s248 + $0x80] sm:$0xff]
        %v716 = vld [vmem:[%s248 + $0x8c] sm:$0xff]
        %v717 = vld [vmem:[%s248 + $0x94] sm:$0xff]
        %734 = vrot.lane.b32.xlu0 %v702, 1
        %v735 = vpop.permute.xlu0 %734
        %736 = vrot.lane.b32.xlu0 %v703, 1
        %v737 = vpop.permute.xlu0 %736
        %738 = vrot.lane.b32.xlu0 %v704, 1
        %v739 = vpop.permute.xlu0 %738
        %740 = vrot.lane.b32.xlu0 %v705, 1
        %v741 = vpop.permute.xlu0 %740
        %742 = vrot.lane.b32.xlu0 %v706, 1
        %v743 = vpop.permute.xlu0 %742
        %744 = vrot.lane.b32.xlu0 %v707, 1
        %v745 = vpop.permute.xlu0 %744
        %746 = vrot.lane.b32.xlu0 %v708, 1
        %v747 = vpop.permute.xlu0 %746
        %748 = vrot.lane.b32.xlu0 %v709, 1
        %v749 = vpop.permute.xlu0 %748
        %750 = vrot.lane.b32.xlu0 %v710, 1
        %v751 = vpop.permute.xlu0 %750
        %752 = vrot.lane.b32.xlu0 %v711, 1
        %v753 = vpop.permute.xlu0 %752
        %754 = vrot.lane.b32.xlu0 %v712, 1
        %v755 = vpop.permute.xlu0 %754
        %756 = vrot.lane.b32.xlu0 %v713, 1
        %v757 = vpop.permute.xlu0 %756
        %758 = vrot.lane.b32.xlu0 %v714, 1
        %v759 = vpop.permute.xlu0 %758
        %760 = vrot.lane.b32.xlu0 %v715, 1
        %v761 = vpop.permute.xlu0 %760
        %762 = vrot.lane.b32.xlu0 %v716, 1
        %v763 = vpop.permute.xlu0 %762
        %764 = vrot.lane.b32.xlu0 %v717, 1
        %v765 = vpop.permute.xlu0 %764
        %v766 = vrot.slane %v735, 4
        %v767 = vrot.slane %v737, 4
        %v768 = vrot.slane %v739, 4
        %v769 = vrot.slane %v741, 4
        %v770 = vrot.slane %v743, 4
        %v771 = vrot.slane %v745, 4
        %v772 = vrot.slane %v747, 4
        %v773 = vrot.slane %v749, 4
        %v774 = vrot.slane %v751, 4
        %v775 = vrot.slane %v753, 4
        %v776 = vrot.slane %v755, 4
        %v777 = vrot.slane %v757, 4
        %v778 = vrot.slane %v759, 4
        %v779 = vrot.slane %v761, 4
        %v780 = vrot.slane %v763, 4
        %v781 = vrot.slane %v765, 4
        %v782 = vsel %vm369, %v766, %v767
        %vm783 = vcmask 7168
        %v784 = vsel %vm783, %v735, %v782
        %v785 = vsel %vm783, %v737, %v767
        %v786 = vsel %vm369, %v768, %v769
        %v787 = vsel %vm783, %v739, %v786
        %v788 = vsel %vm783, %v741, %v769
        %v789 = vsel %vm369, %v770, %v771
        %v790 = vsel %vm783, %v743, %v789
        %v791 = vsel %vm783, %v745, %v771
        %v792 = vsel %vm369, %v772, %v773
        %v793 = vsel %vm783, %v747, %v792
        %v794 = vsel %vm783, %v749, %v773
        %v795 = vsel %vm369, %v774, %v775
        %v796 = vsel %vm783, %v751, %v795
        %v797 = vsel %vm783, %v753, %v775
        %v798 = vsel %vm369, %v776, %v777
        %v799 = vsel %vm783, %v755, %v798
        %v800 = vsel %vm783, %v757, %v777
        %v801 = vsel %vm369, %v778, %v779
        %v802 = vsel %vm783, %v759, %v801
        %v803 = vsel %vm783, %v761, %v779
        %v804 = vsel %vm369, %v780, %v781
        %v805 = vsel %vm783, %v763, %v804
        %v806 = vsel %vm783, %v765, %v781
        %823 = vst [vmem:[#allocation2 + $0x120] sm:$0xff] %v784
        %824 = vst.msk [vmem:[#allocation2 + $0x128] sm:$0xf] %vm412, %v785
        %825 = vst [vmem:[#allocation2 + $0x12c] sm:$0xff] %v787
        %826 = vst.msk [vmem:[#allocation2 + $0x134] sm:$0xf] %vm412, %v788
        %827 = vst [vmem:[#allocation2 + $0x138] sm:$0xff] %v790
        %828 = vst.msk [vmem:[#allocation2 + $0x140] sm:$0xf] %vm412, %v791
        %829 = vst [vmem:[#allocation2 + $0x144] sm:$0xff] %v793
        %830 = vst.msk [vmem:[#allocation2 + $0x14c] sm:$0xf] %vm412, %v794
        %831 = vst [vmem:[#allocation2 + $0x150] sm:$0xff] %v796
        %832 = vst.msk [vmem:[#allocation2 + $0x158] sm:$0xf] %vm412, %v797
        %833 = vst [vmem:[#allocation2 + $0x15c] sm:$0xff] %v799
        %834 = vst.msk [vmem:[#allocation2 + $0x164] sm:$0xf] %vm412, %v800
        %835 = vst [vmem:[#allocation2 + $0x168] sm:$0xff] %v802
        %836 = vst.msk [vmem:[#allocation2 + $0x170] sm:$0xf] %vm412, %v803
        %837 = vst [vmem:[#allocation2 + $0x174] sm:$0xff] %v805
        %838 = vst.msk [vmem:[#allocation2 + $0x17c] sm:$0xf] %vm412, %v806
        %v839 = vld [vmem:[%s248 + $0x4] sm:$0xff]
        %v840 = vld [vmem:[%s248 + $0xc] sm:$0xf]
        %v841 = vld [vmem:[%s248 + $0x18] sm:$0xff]
        %v842 = vld [vmem:[%s248 + $0x20] sm:$0xf]
        %v843 = vld [vmem:[%s248 + $0x2c] sm:$0xff]
        %v844 = vld [vmem:[%s248 + $0x34] sm:$0xf]
        %v845 = vld [vmem:[%s248 + $0x40] sm:$0xff]
        %v846 = vld [vmem:[%s248 + $0x48] sm:$0xf]
        %v847 = vld [vmem:[%s248 + $0x54] sm:$0xff]
        %v848 = vld [vmem:[%s248 + $0x5c] sm:$0xf]
        %v849 = vld [vmem:[%s248 + $0x68] sm:$0xff]
        %v850 = vld [vmem:[%s248 + $0x70] sm:$0xf]
        %v851 = vld [vmem:[%s248 + $0x7c] sm:$0xff]
        %v852 = vld [vmem:[%s248 + $0x84] sm:$0xf]
        %v853 = vld [vmem:[%s248 + $0x90] sm:$0xff]
        %v854 = vld [vmem:[%s248 + $0x98] sm:$0xf]
        %855 = vst [vmem:[#allocation2 + $0x180] sm:$0xff] %v839
        %856 = vst.msk [vmem:[#allocation2 + $0x188] sm:$0xf] %vm412, %v840
        %857 = vst [vmem:[#allocation2 + $0x18c] sm:$0xff] %v841
        %858 = vst.msk [vmem:[#allocation2 + $0x194] sm:$0xf] %vm412, %v842
        %859 = vst [vmem:[#allocation2 + $0x198] sm:$0xff] %v843
        %860 = vst.msk [vmem:[#allocation2 + $0x1a0] sm:$0xf] %vm412, %v844
        %861 = vst [vmem:[#allocation2 + $0x1a4] sm:$0xff] %v845
        %862 = vst.msk [vmem:[#allocation2 + $0x1ac] sm:$0xf] %vm412, %v846
        %863 = vst [vmem:[#allocation2 + $0x1b0] sm:$0xff] %v847
        %864 = vst.msk [vmem:[#allocation2 + $0x1b8] sm:$0xf] %vm412, %v848
        %865 = vst [vmem:[#allocation2 + $0x1bc] sm:$0xff] %v849
        %866 = vst.msk [vmem:[#allocation2 + $0x1c4] sm:$0xf] %vm412, %v850
        %867 = vst [vmem:[#allocation2 + $0x1c8] sm:$0xff] %v851
        %868 = vst.msk [vmem:[#allocation2 + $0x1d0] sm:$0xf] %vm412, %v852
        %869 = vst [vmem:[#allocation2 + $0x1d4] sm:$0xff] %v853
        %870 = vst.msk [vmem:[#allocation2 + $0x1dc] sm:$0xf] %vm412, %v854
        %v871 = vld [vmem:[%s248 + $0x4] sm:$0xff]
        %v872 = vld [vmem:[%s248 + $0xc] sm:$0xf]
        %v873 = vld [vmem:[%s248 + $0x18] sm:$0xff]
        %v874 = vld [vmem:[%s248 + $0x20] sm:$0xf]
        %v875 = vld [vmem:[%s248 + $0x2c] sm:$0xff]
        %v876 = vld [vmem:[%s248 + $0x34] sm:$0xf]
        %v877 = vld [vmem:[%s248 + $0x40] sm:$0xff]
        %v878 = vld [vmem:[%s248 + $0x48] sm:$0xf]
        %v879 = vld [vmem:[%s248 + $0x54] sm:$0xff]
        %v880 = vld [vmem:[%s248 + $0x5c] sm:$0xf]
        %v881 = vld [vmem:[%s248 + $0x68] sm:$0xff]
        %v882 = vld [vmem:[%s248 + $0x70] sm:$0xf]
        %v883 = vld [vmem:[%s248 + $0x7c] sm:$0xff]
        %v884 = vld [vmem:[%s248 + $0x84] sm:$0xf]
        %v885 = vld [vmem:[%s248 + $0x90] sm:$0xff]
        %v886 = vld [vmem:[%s248 + $0x98] sm:$0xf]
        %903 = vrot.lane.b32.xlu0 %v871, 127
        %v904 = vpop.permute.xlu0 %903
        %905 = vrot.lane.b32.xlu0 %v872, 127
        %v906 = vpop.permute.xlu0 %905
        %907 = vrot.lane.b32.xlu0 %v873, 127
        %v908 = vpop.permute.xlu0 %907
        %909 = vrot.lane.b32.xlu0 %v874, 127
        %v910 = vpop.permute.xlu0 %909
        %911 = vrot.lane.b32.xlu0 %v875, 127
        %v912 = vpop.permute.xlu0 %911
        %913 = vrot.lane.b32.xlu0 %v876, 127
        %v914 = vpop.permute.xlu0 %913
        %915 = vrot.lane.b32.xlu0 %v877, 127
        %v916 = vpop.permute.xlu0 %915
        %917 = vrot.lane.b32.xlu0 %v878, 127
        %v918 = vpop.permute.xlu0 %917
        %919 = vrot.lane.b32.xlu0 %v879, 127
        %v920 = vpop.permute.xlu0 %919
        %921 = vrot.lane.b32.xlu0 %v880, 127
        %v922 = vpop.permute.xlu0 %921
        %923 = vrot.lane.b32.xlu0 %v881, 127
        %v924 = vpop.permute.xlu0 %923
        %925 = vrot.lane.b32.xlu0 %v882, 127
        %v926 = vpop.permute.xlu0 %925
        %927 = vrot.lane.b32.xlu0 %v883, 127
        %v928 = vpop.permute.xlu0 %927
        %929 = vrot.lane.b32.xlu0 %v884, 127
        %v930 = vpop.permute.xlu0 %929
        %931 = vrot.lane.b32.xlu0 %v885, 127
        %v932 = vpop.permute.xlu0 %931
        %933 = vrot.lane.b32.xlu0 %v886, 127
        %v934 = vpop.permute.xlu0 %933
        %v935 = vrot.slane %v904, 4
        %v936 = vrot.slane %v906, 4
        %v937 = vrot.slane %v908, 4
        %v938 = vrot.slane %v910, 4
        %v939 = vrot.slane %v912, 4
        %v940 = vrot.slane %v914, 4
        %v941 = vrot.slane %v916, 4
        %v942 = vrot.slane %v918, 4
        %v943 = vrot.slane %v920, 4
        %v944 = vrot.slane %v922, 4
        %v945 = vrot.slane %v924, 4
        %v946 = vrot.slane %v926, 4
        %v947 = vrot.slane %v928, 4
        %v948 = vrot.slane %v930, 4
        %v949 = vrot.slane %v932, 4
        %v950 = vrot.slane %v934, 4
        %v951 = vsel %vm369, %v935, %v936
        %vm952 = vcmask 1039360
        %v953 = vsel %vm952, %v904, %v951
        %v954 = vsel %vm369, %v937, %v938
        %v955 = vsel %vm952, %v908, %v954
        %v956 = vsel %vm369, %v939, %v940
        %v957 = vsel %vm952, %v912, %v956
        %v958 = vsel %vm369, %v941, %v942
        %v959 = vsel %vm952, %v916, %v958
        %v960 = vsel %vm369, %v943, %v944
        %v961 = vsel %vm952, %v920, %v960
        %v962 = vsel %vm369, %v945, %v946
        %v963 = vsel %vm952, %v924, %v962
        %v964 = vsel %vm369, %v947, %v948
        %v965 = vsel %vm952, %v928, %v964
        %v966 = vsel %vm369, %v949, %v950
        %v967 = vsel %vm952, %v932, %v966
        %984 = vst [vmem:[#allocation2 + $0x1e0] sm:$0xff] %v953
        %985 = vst.msk [vmem:[#allocation2 + $0x1e8] sm:$0xf] %vm412, %v906
        %986 = vst [vmem:[#allocation2 + $0x1ec] sm:$0xff] %v955
        %987 = vst.msk [vmem:[#allocation2 + $0x1f4] sm:$0xf] %vm412, %v910
        %988 = vst [vmem:[#allocation2 + $0x1f8] sm:$0xff] %v957
        %989 = vst.msk [vmem:[#allocation2 + $0x200] sm:$0xf] %vm412, %v914
        %990 = vst [vmem:[#allocation2 + $0x204] sm:$0xff] %v959
        %991 = vst.msk [vmem:[#allocation2 + $0x20c] sm:$0xf] %vm412, %v918
        %992 = vst [vmem:[#allocation2 + $0x210] sm:$0xff] %v961
        %993 = vst.msk [vmem:[#allocation2 + $0x218] sm:$0xf] %vm412, %v922
        %994 = vst [vmem:[#allocation2 + $0x21c] sm:$0xff] %v963
        %995 = vst.msk [vmem:[#allocation2 + $0x224] sm:$0xf] %vm412, %v926
        %996 = vst [vmem:[#allocation2 + $0x228] sm:$0xff] %v965
        %997 = vst.msk [vmem:[#allocation2 + $0x230] sm:$0xf] %vm412, %v930
        %998 = vst [vmem:[#allocation2 + $0x234] sm:$0xff] %v967
        %999 = vst.msk [vmem:[#allocation2 + $0x23c] sm:$0xf] %vm412, %v934
        %v1000 = vld [vmem:[%s248 + $0x4] sm:$0xff]
        %v1001 = vld [vmem:[%s248 + $0xc] sm:$0xf]
        %v1002 = vld [vmem:[%s248 + $0x18] sm:$0xff]
        %v1003 = vld [vmem:[%s248 + $0x20] sm:$0xf]
        %v1004 = vld [vmem:[%s248 + $0x2c] sm:$0xff]
        %v1005 = vld [vmem:[%s248 + $0x34] sm:$0xf]
        %v1006 = vld [vmem:[%s248 + $0x40] sm:$0xff]
        %v1007 = vld [vmem:[%s248 + $0x48] sm:$0xf]
        %v1008 = vld [vmem:[%s248 + $0x54] sm:$0xff]
        %v1009 = vld [vmem:[%s248 + $0x5c] sm:$0xf]
        %v1010 = vld [vmem:[%s248 + $0x68] sm:$0xff]
        %v1011 = vld [vmem:[%s248 + $0x70] sm:$0xf]
        %v1012 = vld [vmem:[%s248 + $0x7c] sm:$0xff]
        %v1013 = vld [vmem:[%s248 + $0x84] sm:$0xf]
        %v1014 = vld [vmem:[%s248 + $0x90] sm:$0xff]
        %v1015 = vld [vmem:[%s248 + $0x98] sm:$0xf]
        %1032 = vrot.lane.b32.xlu0 %v1000, 111
        %v1033 = vpop.permute.xlu0 %1032
        %1034 = vrot.lane.b32.xlu0 %v1001, 111
        %v1035 = vpop.permute.xlu0 %1034
        %1036 = vrot.lane.b32.xlu0 %v1002, 111
        %v1037 = vpop.permute.xlu0 %1036
        %1038 = vrot.lane.b32.xlu0 %v1003, 111
        %v1039 = vpop.permute.xlu0 %1038
        %1040 = vrot.lane.b32.xlu0 %v1004, 111
        %v1041 = vpop.permute.xlu0 %1040
        %1042 = vrot.lane.b32.xlu0 %v1005, 111
        %v1043 = vpop.permute.xlu0 %1042
        %1044 = vrot.lane.b32.xlu0 %v1006, 111
        %v1045 = vpop.permute.xlu0 %1044
        %1046 = vrot.lane.b32.xlu0 %v1007, 111
        %v1047 = vpop.permute.xlu0 %1046
        %1048 = vrot.lane.b32.xlu0 %v1008, 111
        %v1049 = vpop.permute.xlu0 %1048
        %1050 = vrot.lane.b32.xlu0 %v1009, 111
        %v1051 = vpop.permute.xlu0 %1050
        %1052 = vrot.lane.b32.xlu0 %v1010, 111
        %v1053 = vpop.permute.xlu0 %1052
        %1054 = vrot.lane.b32.xlu0 %v1011, 111
        %v1055 = vpop.permute.xlu0 %1054
        %1056 = vrot.lane.b32.xlu0 %v1012, 111
        %v1057 = vpop.permute.xlu0 %1056
        %1058 = vrot.lane.b32.xlu0 %v1013, 111
        %v1059 = vpop.permute.xlu0 %1058
        %1060 = vrot.lane.b32.xlu0 %v1014, 111
        %v1061 = vpop.permute.xlu0 %1060
        %1062 = vrot.lane.b32.xlu0 %v1015, 111
        %v1063 = vpop.permute.xlu0 %1062
        %v1064 = vrot.slane %v1033, 4
        %v1065 = vrot.slane %v1035, 4
        %v1066 = vrot.slane %v1037, 4
        %v1067 = vrot.slane %v1039, 4
        %v1068 = vrot.slane %v1041, 4
        %v1069 = vrot.slane %v1043, 4
        %v1070 = vrot.slane %v1045, 4
        %v1071 = vrot.slane %v1047, 4
        %v1072 = vrot.slane %v1049, 4
        %v1073 = vrot.slane %v1051, 4
        %v1074 = vrot.slane %v1053, 4
        %v1075 = vrot.slane %v1055, 4
        %v1076 = vrot.slane %v1057, 4
        %v1077 = vrot.slane %v1059, 4
        %v1078 = vrot.slane %v1061, 4
        %v1079 = vrot.slane %v1063, 4
        %v1080 = vsel %vm369, %v1064, %v1065
        %vm1081 = vcmask 908288
        %v1082 = vsel %vm1081, %v1033, %v1080
        %v1083 = vsel %vm369, %v1066, %v1067
        %v1084 = vsel %vm1081, %v1037, %v1083
        %v1085 = vsel %vm369, %v1068, %v1069
        %v1086 = vsel %vm1081, %v1041, %v1085
        %v1087 = vsel %vm369, %v1070, %v1071
        %v1088 = vsel %vm1081, %v1045, %v1087
        %v1089 = vsel %vm369, %v1072, %v1073
        %v1090 = vsel %vm1081, %v1049, %v1089
        %v1091 = vsel %vm369, %v1074, %v1075
        %v1092 = vsel %vm1081, %v1053, %v1091
        %v1093 = vsel %vm369, %v1076, %v1077
        %v1094 = vsel %vm1081, %v1057, %v1093
        %v1095 = vsel %vm369, %v1078, %v1079
        %v1096 = vsel %vm1081, %v1061, %v1095
        %1113 = vst [vmem:[#allocation2 + $0x240] sm:$0xff] %v1082
        %1114 = vst.msk [vmem:[#allocation2 + $0x248] sm:$0xf] %vm412, %v1035
        %1115 = vst [vmem:[#allocation2 + $0x24c] sm:$0xff] %v1084
        %1116 = vst.msk [vmem:[#allocation2 + $0x254] sm:$0xf] %vm412, %v1039
        %1117 = vst [vmem:[#allocation2 + $0x258] sm:$0xff] %v1086
        %1118 = vst.msk [vmem:[#allocation2 + $0x260] sm:$0xf] %vm412, %v1043
        %1119 = vst [vmem:[#allocation2 + $0x264] sm:$0xff] %v1088
        %1120 = vst.msk [vmem:[#allocation2 + $0x26c] sm:$0xf] %vm412, %v1047
        %1121 = vst [vmem:[#allocation2 + $0x270] sm:$0xff] %v1090
        %1122 = vst.msk [vmem:[#allocation2 + $0x278] sm:$0xf] %vm412, %v1051
        %1123 = vst [vmem:[#allocation2 + $0x27c] sm:$0xff] %v1092
        %1124 = vst.msk [vmem:[#allocation2 + $0x284] sm:$0xf] %vm412, %v1055
        %1125 = vst [vmem:[#allocation2 + $0x288] sm:$0xff] %v1094
        %1126 = vst.msk [vmem:[#allocation2 + $0x290] sm:$0xf] %vm412, %v1059
        %1127 = vst [vmem:[#allocation2 + $0x294] sm:$0xff] %v1096
        %1128 = vst.msk [vmem:[#allocation2 + $0x29c] sm:$0xf] %vm412, %v1063
        %v1129 = vld [vmem:[%s248 + $0x4] sm:$0xff]
        %v1130 = vld [vmem:[%s248 + $0xc] sm:$0xf]
        %v1131 = vld [vmem:[%s248 + $0x18] sm:$0xff]
        %v1132 = vld [vmem:[%s248 + $0x20] sm:$0xf]
        %v1133 = vld [vmem:[%s248 + $0x2c] sm:$0xff]
        %v1134 = vld [vmem:[%s248 + $0x34] sm:$0xf]
        %v1135 = vld [vmem:[%s248 + $0x40] sm:$0xff]
        %v1136 = vld [vmem:[%s248 + $0x48] sm:$0xf]
        %v1137 = vld [vmem:[%s248 + $0x54] sm:$0xff]
        %v1138 = vld [vmem:[%s248 + $0x5c] sm:$0xf]
        %v1139 = vld [vmem:[%s248 + $0x68] sm:$0xff]
        %v1140 = vld [vmem:[%s248 + $0x70] sm:$0xf]
        %v1141 = vld [vmem:[%s248 + $0x7c] sm:$0xff]
        %v1142 = vld [vmem:[%s248 + $0x84] sm:$0xf]
        %v1143 = vld [vmem:[%s248 + $0x90] sm:$0xff]
        %v1144 = vld [vmem:[%s248 + $0x98] sm:$0xf]
        %1161 = vrot.lane.b32.xlu0 %v1129, 110
        %v1162 = vpop.permute.xlu0 %1161
        %1163 = vrot.lane.b32.xlu0 %v1130, 110
        %v1164 = vpop.permute.xlu0 %1163
        %1165 = vrot.lane.b32.xlu0 %v1131, 110
        %v1166 = vpop.permute.xlu0 %1165
        %1167 = vrot.lane.b32.xlu0 %v1132, 110
        %v1168 = vpop.permute.xlu0 %1167
        %1169 = vrot.lane.b32.xlu0 %v1133, 110
        %v1170 = vpop.permute.xlu0 %1169
        %1171 = vrot.lane.b32.xlu0 %v1134, 110
        %v1172 = vpop.permute.xlu0 %1171
        %1173 = vrot.lane.b32.xlu0 %v1135, 110
        %v1174 = vpop.permute.xlu0 %1173
        %1175 = vrot.lane.b32.xlu0 %v1136, 110
        %v1176 = vpop.permute.xlu0 %1175
        %1177 = vrot.lane.b32.xlu0 %v1137, 110
        %v1178 = vpop.permute.xlu0 %1177
        %1179 = vrot.lane.b32.xlu0 %v1138, 110
        %v1180 = vpop.permute.xlu0 %1179
        %1181 = vrot.lane.b32.xlu0 %v1139, 110
        %v1182 = vpop.permute.xlu0 %1181
        %1183 = vrot.lane.b32.xlu0 %v1140, 110
        %v1184 = vpop.permute.xlu0 %1183
        %1185 = vrot.lane.b32.xlu0 %v1141, 110
        %v1186 = vpop.permute.xlu0 %1185
        %1187 = vrot.lane.b32.xlu0 %v1142, 110
        %v1188 = vpop.permute.xlu0 %1187
        %1189 = vrot.lane.b32.xlu0 %v1143, 110
        %v1190 = vpop.permute.xlu0 %1189
        %1191 = vrot.lane.b32.xlu0 %v1144, 110
        %v1192 = vpop.permute.xlu0 %1191
        %v1193 = vrot.slane %v1162, 4
        %v1194 = vrot.slane %v1164, 4
        %v1195 = vrot.slane %v1166, 4
        %v1196 = vrot.slane %v1168, 4
        %v1197 = vrot.slane %v1170, 4
        %v1198 = vrot.slane %v1172, 4
        %v1199 = vrot.slane %v1174, 4
        %v1200 = vrot.slane %v1176, 4
        %v1201 = vrot.slane %v1178, 4
        %v1202 = vrot.slane %v1180, 4
        %v1203 = vrot.slane %v1182, 4
        %v1204 = vrot.slane %v1184, 4
        %v1205 = vrot.slane %v1186, 4
        %v1206 = vrot.slane %v1188, 4
        %v1207 = vrot.slane %v1190, 4
        %v1208 = vrot.slane %v1192, 4
        %v1209 = vsel %vm369, %v1193, %v1194
        %vm1210 = vcmask 900096
        %v1211 = vsel %vm1210, %v1162, %v1209
        %v1212 = vsel %vm369, %v1195, %v1196
        %v1213 = vsel %vm1210, %v1166, %v1212
        %v1214 = vsel %vm369, %v1197, %v1198
        %v1215 = vsel %vm1210, %v1170, %v1214
        %v1216 = vsel %vm369, %v1199, %v1200
        %v1217 = vsel %vm1210, %v1174, %v1216
        %v1218 = vsel %vm369, %v1201, %v1202
        %v1219 = vsel %vm1210, %v1178, %v1218
        %v1220 = vsel %vm369, %v1203, %v1204
        %v1221 = vsel %vm1210, %v1182, %v1220
        %v1222 = vsel %vm369, %v1205, %v1206
        %v1223 = vsel %vm1210, %v1186, %v1222
        %v1224 = vsel %vm369, %v1207, %v1208
        %v1225 = vsel %vm1210, %v1190, %v1224
        %1242 = vst [vmem:[#allocation2 + $0x2a0] sm:$0xff] %v1211
        %1243 = vst.msk [vmem:[#allocation2 + $0x2a8] sm:$0xf] %vm412, %v1164
        %1244 = vst [vmem:[#allocation2 + $0x2ac] sm:$0xff] %v1213
        %1245 = vst.msk [vmem:[#allocation2 + $0x2b4] sm:$0xf] %vm412, %v1168
        %1246 = vst [vmem:[#allocation2 + $0x2b8] sm:$0xff] %v1215
        %1247 = vst.msk [vmem:[#allocation2 + $0x2c0] sm:$0xf] %vm412, %v1172
        %1248 = vst [vmem:[#allocation2 + $0x2c4] sm:$0xff] %v1217
        %1249 = vst.msk [vmem:[#allocation2 + $0x2cc] sm:$0xf] %vm412, %v1176
        %1250 = vst [vmem:[#allocation2 + $0x2d0] sm:$0xff] %v1219
        %1251 = vst.msk [vmem:[#allocation2 + $0x2d8] sm:$0xf] %vm412, %v1180
        %1252 = vst [vmem:[#allocation2 + $0x2dc] sm:$0xff] %v1221
        %1253 = vst.msk [vmem:[#allocation2 + $0x2e4] sm:$0xf] %vm412, %v1184
        %1254 = vst [vmem:[#allocation2 + $0x2e8] sm:$0xff] %v1223
        %1255 = vst.msk [vmem:[#allocation2 + $0x2f0] sm:$0xf] %vm412, %v1188
        %1256 = vst [vmem:[#allocation2 + $0x2f4] sm:$0xff] %v1225
        %1257 = vst.msk [vmem:[#allocation2 + $0x2fc] sm:$0xf] %vm412, %v1192
        %v1258 = vld [vmem:[%s248 + $0x4] sm:$0xff]
        %v1259 = vld [vmem:[%s248 + $0xc] sm:$0xf]
        %v1260 = vld [vmem:[%s248 + $0x18] sm:$0xff]
        %v1261 = vld [vmem:[%s248 + $0x20] sm:$0xf]
        %v1262 = vld [vmem:[%s248 + $0x2c] sm:$0xff]
        %v1263 = vld [vmem:[%s248 + $0x34] sm:$0xf]
        %v1264 = vld [vmem:[%s248 + $0x40] sm:$0xff]
        %v1265 = vld [vmem:[%s248 + $0x48] sm:$0xf]
        %v1266 = vld [vmem:[%s248 + $0x54] sm:$0xff]
        %v1267 = vld [vmem:[%s248 + $0x5c] sm:$0xf]
        %v1268 = vld [vmem:[%s248 + $0x68] sm:$0xff]
        %v1269 = vld [vmem:[%s248 + $0x70] sm:$0xf]
        %v1270 = vld [vmem:[%s248 + $0x7c] sm:$0xff]
        %v1271 = vld [vmem:[%s248 + $0x84] sm:$0xf]
        %v1272 = vld [vmem:[%s248 + $0x90] sm:$0xff]
        %v1273 = vld [vmem:[%s248 + $0x98] sm:$0xf]
        %1290 = vrot.lane.b32.xlu0 %v1258, 109
        %v1291 = vpop.permute.xlu0 %1290
        %1292 = vrot.lane.b32.xlu0 %v1259, 109
        %v1293 = vpop.permute.xlu0 %1292
        %1294 = vrot.lane.b32.xlu0 %v1260, 109
        %v1295 = vpop.permute.xlu0 %1294
        %1296 = vrot.lane.b32.xlu0 %v1261, 109
        %v1297 = vpop.permute.xlu0 %1296
        %1298 = vrot.lane.b32.xlu0 %v1262, 109
        %v1299 = vpop.permute.xlu0 %1298
        %1300 = vrot.lane.b32.xlu0 %v1263, 109
        %v1301 = vpop.permute.xlu0 %1300
        %1302 = vrot.lane.b32.xlu0 %v1264, 109
        %v1303 = vpop.permute.xlu0 %1302
        %1304 = vrot.lane.b32.xlu0 %v1265, 109
        %v1305 = vpop.permute.xlu0 %1304
        %1306 = vrot.lane.b32.xlu0 %v1266, 109
        %v1307 = vpop.permute.xlu0 %1306
        %1308 = vrot.lane.b32.xlu0 %v1267, 109
        %v1309 = vpop.permute.xlu0 %1308
        %1310 = vrot.lane.b32.xlu0 %v1268, 109
        %v1311 = vpop.permute.xlu0 %1310
        %1312 = vrot.lane.b32.xlu0 %v1269, 109
        %v1313 = vpop.permute.xlu0 %1312
        %1314 = vrot.lane.b32.xlu0 %v1270, 109
        %v1315 = vpop.permute.xlu0 %1314
        %1316 = vrot.lane.b32.xlu0 %v1271, 109
        %v1317 = vpop.permute.xlu0 %1316
        %1318 = vrot.lane.b32.xlu0 %v1272, 109
        %v1319 = vpop.permute.xlu0 %1318
        %1320 = vrot.lane.b32.xlu0 %v1273, 109
        %v1321 = vpop.permute.xlu0 %1320
        %v1322 = vrot.slane %v1291, 4
        %v1323 = vrot.slane %v1293, 4
        %v1324 = vrot.slane %v1295, 4
        %v1325 = vrot.slane %v1297, 4
        %v1326 = vrot.slane %v1299, 4
        %v1327 = vrot.slane %v1301, 4
        %v1328 = vrot.slane %v1303, 4
        %v1329 = vrot.slane %v1305, 4
        %v1330 = vrot.slane %v1307, 4
        %v1331 = vrot.slane %v1309, 4
        %v1332 = vrot.slane %v1311, 4
        %v1333 = vrot.slane %v1313, 4
        %v1334 = vrot.slane %v1315, 4
        %v1335 = vrot.slane %v1317, 4
        %v1336 = vrot.slane %v1319, 4
        %v1337 = vrot.slane %v1321, 4
        %v1338 = vsel %vm369, %v1322, %v1323
        %vm1339 = vcmask 891904
        %v1340 = vsel %vm1339, %v1291, %v1338
        %v1341 = vsel %vm369, %v1324, %v1325
        %v1342 = vsel %vm1339, %v1295, %v1341
        %v1343 = vsel %vm369, %v1326, %v1327
        %v1344 = vsel %vm1339, %v1299, %v1343
        %v1345 = vsel %vm369, %v1328, %v1329
        %v1346 = vsel %vm1339, %v1303, %v1345
        %v1347 = vsel %vm369, %v1330, %v1331
        %v1348 = vsel %vm1339, %v1307, %v1347
        %v1349 = vsel %vm369, %v1332, %v1333
        %v1350 = vsel %vm1339, %v1311, %v1349
        %v1351 = vsel %vm369, %v1334, %v1335
        %v1352 = vsel %vm1339, %v1315, %v1351
        %v1353 = vsel %vm369, %v1336, %v1337
        %v1354 = vsel %vm1339, %v1319, %v1353
        %1371 = vst [vmem:[#allocation2 + $0x300] sm:$0xff] %v1340
        %1372 = vst.msk [vmem:[#allocation2 + $0x308] sm:$0xf] %vm412, %v1293
        %1373 = vst [vmem:[#allocation2 + $0x30c] sm:$0xff] %v1342
        %1374 = vst.msk [vmem:[#allocation2 + $0x314] sm:$0xf] %vm412, %v1297
        %1375 = vst [vmem:[#allocation2 + $0x318] sm:$0xff] %v1344
        %1376 = vst.msk [vmem:[#allocation2 + $0x320] sm:$0xf] %vm412, %v1301
        %1377 = vst [vmem:[#allocation2 + $0x324] sm:$0xff] %v1346
        %1378 = vst.msk [vmem:[#allocation2 + $0x32c] sm:$0xf] %vm412, %v1305
        %1379 = vst [vmem:[#allocation2 + $0x330] sm:$0xff] %v1348
        %1380 = vst.msk [vmem:[#allocation2 + $0x338] sm:$0xf] %vm412, %v1309
        %1381 = vst [vmem:[#allocation2 + $0x33c] sm:$0xff] %v1350
        %1382 = vst.msk [vmem:[#allocation2 + $0x344] sm:$0xf] %vm412, %v1313
        %1383 = vst [vmem:[#allocation2 + $0x348] sm:$0xff] %v1352
        %1384 = vst.msk [vmem:[#allocation2 + $0x350] sm:$0xf] %vm412, %v1317
        %1385 = vst [vmem:[#allocation2 + $0x354] sm:$0xff] %v1354
        %1386 = vst.msk [vmem:[#allocation2 + $0x35c] sm:$0xf] %vm412, %v1321
        %v1387 = vld [vmem:[#allocation8] sm:$0xff]
        %v1388 = vld [vmem:[#allocation8 + $0x8] sm:$0xff]
        %v1389 = vld [vmem:[#allocation8 + $0x10] sm:$0xf]
        %v1390 = vld [vmem:[#allocation8 + $0x14] sm:$0xff]
        %v1391 = vld [vmem:[#allocation8 + $0x1c] sm:$0xff]
        %v1392 = vld [vmem:[#allocation8 + $0x24] sm:$0xf]
        %v1393 = vld [vmem:[#allocation8 + $0x28] sm:$0xff]
        %v1394 = vld [vmem:[#allocation8 + $0x30] sm:$0xff]
        %v1395 = vld [vmem:[#allocation8 + $0x38] sm:$0xf]
        %v1396 = vld [vmem:[#allocation8 + $0x3c] sm:$0xff]
        %v1397 = vld [vmem:[#allocation8 + $0x44] sm:$0xff]
        %v1398 = vld [vmem:[#allocation8 + $0x4c] sm:$0xf]
        %v1399 = vld [vmem:[#allocation2] sm:$0xff]
        %v1400 = vld [vmem:[#allocation2 + $0x8] sm:$0xf]
        %v1401 = vld [vmem:[#allocation2 + $0xc] sm:$0xff]
        %v1402 = vld [vmem:[#allocation2 + $0x14] sm:$0xf]
        %v1403 = vld [vmem:[#allocation2 + $0x18] sm:$0xff]
        %v1404 = vld [vmem:[#allocation2 + $0x20] sm:$0xf]
        %v1405 = vld [vmem:[#allocation2 + $0x24] sm:$0xff]
        %v1406 = vld [vmem:[#allocation2 + $0x2c] sm:$0xf]
        %v1407 = vld [vmem:[#allocation2 + $0x30] sm:$0xff]
        %v1408 = vld [vmem:[#allocation2 + $0x38] sm:$0xf]
        %v1409 = vld [vmem:[#allocation2 + $0x3c] sm:$0xff]
        %v1410 = vld [vmem:[#allocation2 + $0x44] sm:$0xf]
        %v1411 = vld [vmem:[#allocation2 + $0x48] sm:$0xff]
        %v1412 = vld [vmem:[#allocation2 + $0x50] sm:$0xf]
        %v1413 = vld [vmem:[#allocation2 + $0x54] sm:$0xff]
        %v1414 = vld [vmem:[#allocation2 + $0x5c] sm:$0xf]
        %v1415 = vld [vmem:[#allocation2 + $0x60] sm:$0xff]
        %v1416 = vld [vmem:[#allocation2 + $0x68] sm:$0xf]
        %v1417 = vld [vmem:[#allocation2 + $0x6c] sm:$0xff]
        %v1418 = vld [vmem:[#allocation2 + $0x74] sm:$0xf]
        %v1419 = vld [vmem:[#allocation2 + $0x78] sm:$0xff]
        %v1420 = vld [vmem:[#allocation2 + $0x80] sm:$0xf]
        %v1421 = vld [vmem:[#allocation2 + $0x84] sm:$0xff]
        %v1422 = vld [vmem:[#allocation2 + $0x8c] sm:$0xf]
        %v1423 = vld [vmem:[#allocation2 + $0x90] sm:$0xff]
        %v1424 = vld [vmem:[#allocation2 + $0x98] sm:$0xf]
        %v1425 = vld [vmem:[#allocation2 + $0x9c] sm:$0xff]
        %v1426 = vld [vmem:[#allocation2 + $0xa4] sm:$0xf]
        %v1427 = vld [vmem:[#allocation2 + $0xa8] sm:$0xff]
        %v1428 = vld [vmem:[#allocation2 + $0xb0] sm:$0xf]
        %v1429 = vld [vmem:[#allocation2 + $0xb4] sm:$0xff]
        %v1430 = vld [vmem:[#allocation2 + $0xbc] sm:$0xf]
        %v1431 = vld [vmem:[#allocation2 + $0xc0] sm:$0xff]
        %v1432 = vld [vmem:[#allocation2 + $0xc8] sm:$0xf]
        %v1433 = vld [vmem:[#allocation2 + $0xcc] sm:$0xff]
        %v1434 = vld [vmem:[#allocation2 + $0xd4] sm:$0xf]
        %v1435 = vld [vmem:[#allocation2 + $0xd8] sm:$0xff]
        %v1436 = vld [vmem:[#allocation2 + $0xe0] sm:$0xf]
        %v1437 = vld [vmem:[#allocation2 + $0xe4] sm:$0xff]
        %v1438 = vld [vmem:[#allocation2 + $0xec] sm:$0xf]
        %v1439 = vld [vmem:[#allocation2 + $0xf0] sm:$0xff]
        %v1440 = vld [vmem:[#allocation2 + $0xf8] sm:$0xf]
        %v1441 = vld [vmem:[#allocation2 + $0xfc] sm:$0xff]
        %v1442 = vld [vmem:[#allocation2 + $0x104] sm:$0xf]
        %v1443 = vld [vmem:[#allocation2 + $0x108] sm:$0xff]
        %v1444 = vld [vmem:[#allocation2 + $0x110] sm:$0xf]
        %v1445 = vld [vmem:[#allocation2 + $0x114] sm:$0xff]
        %v1446 = vld [vmem:[#allocation2 + $0x11c] sm:$0xf]
        %v1447 = vld [vmem:[#allocation2 + $0x120] sm:$0xff]
        %v1448 = vld [vmem:[#allocation2 + $0x128] sm:$0xf]
        %v1449 = vld [vmem:[#allocation2 + $0x12c] sm:$0xff]
        %v1450 = vld [vmem:[#allocation2 + $0x134] sm:$0xf]
        %v1451 = vld [vmem:[#allocation2 + $0x138] sm:$0xff]
        %v1452 = vld [vmem:[#allocation2 + $0x140] sm:$0xf]
        %v1453 = vld [vmem:[#allocation2 + $0x144] sm:$0xff]
        %v1454 = vld [vmem:[#allocation2 + $0x14c] sm:$0xf]
        %v1455 = vld [vmem:[#allocation2 + $0x150] sm:$0xff]
        %v1456 = vld [vmem:[#allocation2 + $0x158] sm:$0xf]
        %v1457 = vld [vmem:[#allocation2 + $0x15c] sm:$0xff]
        %v1458 = vld [vmem:[#allocation2 + $0x164] sm:$0xf]
        %v1459 = vld [vmem:[#allocation2 + $0x168] sm:$0xff]
        %v1460 = vld [vmem:[#allocation2 + $0x170] sm:$0xf]
        %v1461 = vld [vmem:[#allocation2 + $0x174] sm:$0xff]
        %v1462 = vld [vmem:[#allocation2 + $0x17c] sm:$0xf]
        %v1463 = vld [vmem:[#allocation2 + $0x180] sm:$0xff]
        %v1464 = vld [vmem:[#allocation2 + $0x188] sm:$0xf]
        %v1465 = vld [vmem:[#allocation2 + $0x18c] sm:$0xff]
        %v1466 = vld [vmem:[#allocation2 + $0x194] sm:$0xf]
        %v1467 = vld [vmem:[#allocation2 + $0x198] sm:$0xff]
        %v1468 = vld [vmem:[#allocation2 + $0x1a0] sm:$0xf]
        %v1469 = vld [vmem:[#allocation2 + $0x1a4] sm:$0xff]
        %v1470 = vld [vmem:[#allocation2 + $0x1ac] sm:$0xf]
        %v1471 = vld [vmem:[#allocation2 + $0x1b0] sm:$0xff]
        %v1472 = vld [vmem:[#allocation2 + $0x1b8] sm:$0xf]
        %v1473 = vld [vmem:[#allocation2 + $0x1bc] sm:$0xff]
        %v1474 = vld [vmem:[#allocation2 + $0x1c4] sm:$0xf]
        %v1475 = vld [vmem:[#allocation2 + $0x1c8] sm:$0xff]
        %v1476 = vld [vmem:[#allocation2 + $0x1d0] sm:$0xf]
        %v1477 = vld [vmem:[#allocation2 + $0x1d4] sm:$0xff]
        %v1478 = vld [vmem:[#allocation2 + $0x1dc] sm:$0xf]
        %v1479 = vld [vmem:[#allocation2 + $0x1e0] sm:$0xff]
        %v1480 = vld [vmem:[#allocation2 + $0x1e8] sm:$0xf]
        %v1481 = vld [vmem:[#allocation2 + $0x1ec] sm:$0xff]
        %v1482 = vld [vmem:[#allocation2 + $0x1f4] sm:$0xf]
        %v1483 = vld [vmem:[#allocation2 + $0x1f8] sm:$0xff]
        %v1484 = vld [vmem:[#allocation2 + $0x200] sm:$0xf]
        %v1485 = vld [vmem:[#allocation2 + $0x204] sm:$0xff]
        %v1486 = vld [vmem:[#allocation2 + $0x20c] sm:$0xf]
        %v1487 = vld [vmem:[#allocation2 + $0x210] sm:$0xff]
        %v1488 = vld [vmem:[#allocation2 + $0x218] sm:$0xf]
        %v1489 = vld [vmem:[#allocation2 + $0x21c] sm:$0xff]
        %v1490 = vld [vmem:[#allocation2 + $0x224] sm:$0xf]
        %v1491 = vld [vmem:[#allocation2 + $0x228] sm:$0xff]
        %v1492 = vld [vmem:[#allocation2 + $0x230] sm:$0xf]
        %v1493 = vld [vmem:[#allocation2 + $0x234] sm:$0xff]
        %v1494 = vld [vmem:[#allocation2 + $0x23c] sm:$0xf]
        %v1495 = vld [vmem:[#allocation2 + $0x240] sm:$0xff]
        %v1496 = vld [vmem:[#allocation2 + $0x248] sm:$0xf]
        %v1497 = vld [vmem:[#allocation2 + $0x24c] sm:$0xff]
        %v1498 = vld [vmem:[#allocation2 + $0x254] sm:$0xf]
        %v1499 = vld [vmem:[#allocation2 + $0x258] sm:$0xff]
        %v1500 = vld [vmem:[#allocation2 + $0x260] sm:$0xf]
        %v1501 = vld [vmem:[#allocation2 + $0x264] sm:$0xff]
        %v1502 = vld [vmem:[#allocation2 + $0x26c] sm:$0xf]
        %v1503 = vld [vmem:[#allocation2 + $0x270] sm:$0xff]
        %v1504 = vld [vmem:[#allocation2 + $0x278] sm:$0xf]
        %v1505 = vld [vmem:[#allocation2 + $0x27c] sm:$0xff]
        %v1506 = vld [vmem:[#allocation2 + $0x284] sm:$0xf]
        %v1507 = vld [vmem:[#allocation2 + $0x288] sm:$0xff]
        %v1508 = vld [vmem:[#allocation2 + $0x290] sm:$0xf]
        %v1509 = vld [vmem:[#allocation2 + $0x294] sm:$0xff]
        %v1510 = vld [vmem:[#allocation2 + $0x29c] sm:$0xf]
        %v1511 = vld [vmem:[#allocation2 + $0x2a0] sm:$0xff]
        %v1512 = vld [vmem:[#allocation2 + $0x2a8] sm:$0xf]
        %v1513 = vld [vmem:[#allocation2 + $0x2ac] sm:$0xff]
        %v1514 = vld [vmem:[#allocation2 + $0x2b4] sm:$0xf]
        %v1515 = vld [vmem:[#allocation2 + $0x2b8] sm:$0xff]
        %v1516 = vld [vmem:[#allocation2 + $0x2c0] sm:$0xf]
        %v1517 = vld [vmem:[#allocation2 + $0x2c4] sm:$0xff]
        %v1518 = vld [vmem:[#allocation2 + $0x2cc] sm:$0xf]
        %v1519 = vld [vmem:[#allocation2 + $0x2d0] sm:$0xff]
        %v1520 = vld [vmem:[#allocation2 + $0x2d8] sm:$0xf]
        %v1521 = vld [vmem:[#allocation2 + $0x2dc] sm:$0xff]
        %v1522 = vld [vmem:[#allocation2 + $0x2e4] sm:$0xf]
        %v1523 = vld [vmem:[#allocation2 + $0x2e8] sm:$0xff]
        %v1524 = vld [vmem:[#allocation2 + $0x2f0] sm:$0xf]
        %v1525 = vld [vmem:[#allocation2 + $0x2f4] sm:$0xff]
        %v1526 = vld [vmem:[#allocation2 + $0x2fc] sm:$0xf]
        %v1527 = vld [vmem:[#allocation2 + $0x300] sm:$0xff]
        %v1528 = vld [vmem:[#allocation2 + $0x308] sm:$0xf]
        %v1529 = vld [vmem:[#allocation2 + $0x30c] sm:$0xff]
        %v1530 = vld [vmem:[#allocation2 + $0x314] sm:$0xf]
        %v1531 = vld [vmem:[#allocation2 + $0x318] sm:$0xff]
        %v1532 = vld [vmem:[#allocation2 + $0x320] sm:$0xf]
        %v1533 = vld [vmem:[#allocation2 + $0x324] sm:$0xff]
        %v1534 = vld [vmem:[#allocation2 + $0x32c] sm:$0xf]
        %v1535 = vld [vmem:[#allocation2 + $0x330] sm:$0xff]
        %v1536 = vld [vmem:[#allocation2 + $0x338] sm:$0xf]
        %v1537 = vld [vmem:[#allocation2 + $0x33c] sm:$0xff]
        %v1538 = vld [vmem:[#allocation2 + $0x344] sm:$0xf]
        %v1539 = vld [vmem:[#allocation2 + $0x348] sm:$0xff]
        %v1540 = vld [vmem:[#allocation2 + $0x350] sm:$0xf]
        %v1541 = vld [vmem:[#allocation2 + $0x354] sm:$0xff]
        %v1542 = vld [vmem:[#allocation2 + $0x35c] sm:$0xf]
        %v1555 = vunpack.c.l.b16 %v1387
        %v1556 = vunpack.c.h.b16 %v1387
        %v1557 = vunpack.c.l.b16 %v1388
        %v1558 = vunpack.c.h.b16 %v1388
        %v1559 = vunpack.c.l.b16 %v1389
        %v1560 = vunpack.c.l.b16 %v1390
        %v1561 = vunpack.c.h.b16 %v1390
        %v1562 = vunpack.c.l.b16 %v1391
        %v1563 = vunpack.c.h.b16 %v1391
        %v1564 = vunpack.c.l.b16 %v1392
        %v1565 = vunpack.c.l.b16 %v1393
        %v1566 = vunpack.c.h.b16 %v1393
        %v1567 = vunpack.c.l.b16 %v1394
        %v1568 = vunpack.c.h.b16 %v1394
        %v1569 = vunpack.c.l.b16 %v1395
        %v1570 = vunpack.c.l.b16 %v1396
        %v1571 = vunpack.c.h.b16 %v1396
        %v1572 = vunpack.c.l.b16 %v1397
        %v1573 = vunpack.c.h.b16 %v1397
        %v1574 = vunpack.c.l.b16 %v1398
        %v1575 = vpack.c.b16 %v1560, %v1555
        %v1576 = vpack.c.b16 %v1561, %v1556
        %v1577 = vpack.c.b16 %v1562, %v1557
        %v1578 = vpack.c.b16 %v1563, %v1558
        %v1579 = vpack.c.b16 %v1564, %v1559
        %v1580 = vpack.c.b16 %v1570, %v1565
        %v1581 = vpack.c.b16 %v1571, %v1566
        %v1582 = vpack.c.b16 %v1572, %v1567
        %v1583 = vpack.c.b16 %v1573, %v1568
        %v1584 = vpack.c.b16 %v1574, %v1569
        %v1737 = vunpack.c.l.b16 %v1399
        %v1738 = vunpack.c.h.b16 %v1399
        %v1739 = vunpack.c.l.b16 %v1400
        %v1740 = vunpack.c.l.b16 %v1401
        %v1741 = vunpack.c.h.b16 %v1401
        %v1742 = vunpack.c.l.b16 %v1402
        %v1743 = vunpack.c.l.b16 %v1403
        %v1744 = vunpack.c.h.b16 %v1403
        %v1745 = vunpack.c.l.b16 %v1404
        %v1746 = vunpack.c.l.b16 %v1405
        %v1747 = vunpack.c.h.b16 %v1405
        %v1748 = vunpack.c.l.b16 %v1406
        %v1749 = vunpack.c.l.b16 %v1407
        %v1750 = vunpack.c.h.b16 %v1407
        %v1751 = vunpack.c.l.b16 %v1408
        %v1752 = vunpack.c.l.b16 %v1409
        %v1753 = vunpack.c.h.b16 %v1409
        %v1754 = vunpack.c.l.b16 %v1410
        %v1755 = vunpack.c.l.b16 %v1411
        %v1756 = vunpack.c.h.b16 %v1411
        %v1757 = vunpack.c.l.b16 %v1412
        %v1758 = vunpack.c.l.b16 %v1413
        %v1759 = vunpack.c.h.b16 %v1413
        %v1760 = vunpack.c.l.b16 %v1414
        %v1761 = vunpack.c.l.b16 %v1415
        %v1762 = vunpack.c.h.b16 %v1415
        %v1763 = vunpack.c.l.b16 %v1416
        %v1764 = vunpack.c.l.b16 %v1417
        %v1765 = vunpack.c.h.b16 %v1417
        %v1766 = vunpack.c.l.b16 %v1418
        %v1767 = vunpack.c.l.b16 %v1419
        %v1768 = vunpack.c.h.b16 %v1419
        %v1769 = vunpack.c.l.b16 %v1420
        %v1770 = vunpack.c.l.b16 %v1421
        %v1771 = vunpack.c.h.b16 %v1421
        %v1772 = vunpack.c.l.b16 %v1422
        %v1773 = vunpack.c.l.b16 %v1423
        %v1774 = vunpack.c.h.b16 %v1423
        %v1775 = vunpack.c.l.b16 %v1424
        %v1776 = vunpack.c.l.b16 %v1425
        %v1777 = vunpack.c.h.b16 %v1425
        %v1778 = vunpack.c.l.b16 %v1426
        %v1779 = vunpack.c.l.b16 %v1427
        %v1780 = vunpack.c.h.b16 %v1427
        %v1781 = vunpack.c.l.b16 %v1428
        %v1782 = vunpack.c.l.b16 %v1429
        %v1783 = vunpack.c.h.b16 %v1429
        %v1784 = vunpack.c.l.b16 %v1430
        %v1785 = vunpack.c.l.b16 %v1431
        %v1786 = vunpack.c.h.b16 %v1431
        %v1787 = vunpack.c.l.b16 %v1432
        %v1788 = vunpack.c.l.b16 %v1433
        %v1789 = vunpack.c.h.b16 %v1433
        %v1790 = vunpack.c.l.b16 %v1434
        %v1791 = vunpack.c.l.b16 %v1435
        %v1792 = vunpack.c.h.b16 %v1435
        %v1793 = vunpack.c.l.b16 %v1436
        %v1794 = vunpack.c.l.b16 %v1437
        %v1795 = vunpack.c.h.b16 %v1437
        %v1796 = vunpack.c.l.b16 %v1438
        %v1797 = vunpack.c.l.b16 %v1439
        %v1798 = vunpack.c.h.b16 %v1439
        %v1799 = vunpack.c.l.b16 %v1440
        %v1800 = vunpack.c.l.b16 %v1441
        %v1801 = vunpack.c.h.b16 %v1441
        %v1802 = vunpack.c.l.b16 %v1442
        %v1803 = vunpack.c.l.b16 %v1443
        %v1804 = vunpack.c.h.b16 %v1443
        %v1805 = vunpack.c.l.b16 %v1444
        %v1806 = vunpack.c.l.b16 %v1445
        %v1807 = vunpack.c.h.b16 %v1445
        %v1808 = vunpack.c.l.b16 %v1446
        %v1809 = vunpack.c.l.b16 %v1447
        %v1810 = vunpack.c.h.b16 %v1447
        %v1811 = vunpack.c.l.b16 %v1448
        %v1812 = vunpack.c.l.b16 %v1449
        %v1813 = vunpack.c.h.b16 %v1449
        %v1814 = vunpack.c.l.b16 %v1450
        %v1815 = vunpack.c.l.b16 %v1451
        %v1816 = vunpack.c.h.b16 %v1451
        %v1817 = vunpack.c.l.b16 %v1452
        %v1818 = vunpack.c.l.b16 %v1453
        %v1819 = vunpack.c.h.b16 %v1453
        %v1820 = vunpack.c.l.b16 %v1454
        %v1821 = vunpack.c.l.b16 %v1455
        %v1822 = vunpack.c.h.b16 %v1455
        %v1823 = vunpack.c.l.b16 %v1456
        %v1824 = vunpack.c.l.b16 %v1457
        %v1825 = vunpack.c.h.b16 %v1457
        %v1826 = vunpack.c.l.b16 %v1458
        %v1827 = vunpack.c.l.b16 %v1459
        %v1828 = vunpack.c.h.b16 %v1459
        %v1829 = vunpack.c.l.b16 %v1460
        %v1830 = vunpack.c.l.b16 %v1461
        %v1831 = vunpack.c.h.b16 %v1461
        %v1832 = vunpack.c.l.b16 %v1462
        %v1833 = vunpack.c.l.b16 %v1463
        %v1834 = vunpack.c.h.b16 %v1463
        %v1835 = vunpack.c.l.b16 %v1464
        %v1836 = vunpack.c.l.b16 %v1465
        %v1837 = vunpack.c.h.b16 %v1465
        %v1838 = vunpack.c.l.b16 %v1466
        %v1839 = vunpack.c.l.b16 %v1467
        %v1840 = vunpack.c.h.b16 %v1467
        %v1841 = vunpack.c.l.b16 %v1468
        %v1842 = vunpack.c.l.b16 %v1469
        %v1843 = vunpack.c.h.b16 %v1469
        %v1844 = vunpack.c.l.b16 %v1470
        %v1845 = vunpack.c.l.b16 %v1471
        %v1846 = vunpack.c.h.b16 %v1471
        %v1847 = vunpack.c.l.b16 %v1472
        %v1848 = vunpack.c.l.b16 %v1473
        %v1849 = vunpack.c.h.b16 %v1473
        %v1850 = vunpack.c.l.b16 %v1474
        %v1851 = vunpack.c.l.b16 %v1475
        %v1852 = vunpack.c.h.b16 %v1475
        %v1853 = vunpack.c.l.b16 %v1476
        %v1854 = vunpack.c.l.b16 %v1477
        %v1855 = vunpack.c.h.b16 %v1477
        %v1856 = vunpack.c.l.b16 %v1478
        %v1857 = vunpack.c.l.b16 %v1479
        %v1858 = vunpack.c.h.b16 %v1479
        %v1859 = vunpack.c.l.b16 %v1480
        %v1860 = vunpack.c.l.b16 %v1481
        %v1861 = vunpack.c.h.b16 %v1481
        %v1862 = vunpack.c.l.b16 %v1482
        %v1863 = vunpack.c.l.b16 %v1483
        %v1864 = vunpack.c.h.b16 %v1483
        %v1865 = vunpack.c.l.b16 %v1484
        %v1866 = vunpack.c.l.b16 %v1485
        %v1867 = vunpack.c.h.b16 %v1485
        %v1868 = vunpack.c.l.b16 %v1486
        %v1869 = vunpack.c.l.b16 %v1487
        %v1870 = vunpack.c.h.b16 %v1487
        %v1871 = vunpack.c.l.b16 %v1488
        %v1872 = vunpack.c.l.b16 %v1489
        %v1873 = vunpack.c.h.b16 %v1489
        %v1874 = vunpack.c.l.b16 %v1490
        %v1875 = vunpack.c.l.b16 %v1491
        %v1876 = vunpack.c.h.b16 %v1491
        %v1877 = vunpack.c.l.b16 %v1492
        %v1878 = vunpack.c.l.b16 %v1493
        %v1879 = vunpack.c.h.b16 %v1493
        %v1880 = vunpack.c.l.b16 %v1494
        %v1881 = vunpack.c.l.b16 %v1495
        %v1882 = vunpack.c.h.b16 %v1495
        %v1883 = vunpack.c.l.b16 %v1496
        %v1884 = vunpack.c.l.b16 %v1497
        %v1885 = vunpack.c.h.b16 %v1497
        %v1886 = vunpack.c.l.b16 %v1498
        %v1887 = vunpack.c.l.b16 %v1499
        %v1888 = vunpack.c.h.b16 %v1499
        %v1889 = vunpack.c.l.b16 %v1500
        %v1890 = vunpack.c.l.b16 %v1501
        %v1891 = vunpack.c.h.b16 %v1501
        %v1892 = vunpack.c.l.b16 %v1502
        %v1893 = vunpack.c.l.b16 %v1503
        %v1894 = vunpack.c.h.b16 %v1503
        %v1895 = vunpack.c.l.b16 %v1504
        %v1896 = vunpack.c.l.b16 %v1505
        %v1897 = vunpack.c.h.b16 %v1505
        %v1898 = vunpack.c.l.b16 %v1506
        %v1899 = vunpack.c.l.b16 %v1507
        %v1900 = vunpack.c.h.b16 %v1507
        %v1901 = vunpack.c.l.b16 %v1508
        %v1902 = vunpack.c.l.b16 %v1509
        %v1903 = vunpack.c.h.b16 %v1509
        %v1904 = vunpack.c.l.b16 %v1510
        %v1905 = vunpack.c.l.b16 %v1511
        %v1906 = vunpack.c.h.b16 %v1511
        %v1907 = vunpack.c.l.b16 %v1512
        %v1908 = vunpack.c.l.b16 %v1513
        %v1909 = vunpack.c.h.b16 %v1513
        %v1910 = vunpack.c.l.b16 %v1514
        %v1911 = vunpack.c.l.b16 %v1515
        %v1912 = vunpack.c.h.b16 %v1515
        %v1913 = vunpack.c.l.b16 %v1516
        %v1914 = vunpack.c.l.b16 %v1517
        %v1915 = vunpack.c.h.b16 %v1517
        %v1916 = vunpack.c.l.b16 %v1518
        %v1917 = vunpack.c.l.b16 %v1519
        %v1918 = vunpack.c.h.b16 %v1519
        %v1919 = vunpack.c.l.b16 %v1520
        %v1920 = vunpack.c.l.b16 %v1521
        %v1921 = vunpack.c.h.b16 %v1521
        %v1922 = vunpack.c.l.b16 %v1522
        %v1923 = vunpack.c.l.b16 %v1523
        %v1924 = vunpack.c.h.b16 %v1523
        %v1925 = vunpack.c.l.b16 %v1524
        %v1926 = vunpack.c.l.b16 %v1525
        %v1927 = vunpack.c.h.b16 %v1525
        %v1928 = vunpack.c.l.b16 %v1526
        %v1929 = vunpack.c.l.b16 %v1527
        %v1930 = vunpack.c.h.b16 %v1527
        %v1931 = vunpack.c.l.b16 %v1528
        %v1932 = vunpack.c.l.b16 %v1529
        %v1933 = vunpack.c.h.b16 %v1529
        %v1934 = vunpack.c.l.b16 %v1530
        %v1935 = vunpack.c.l.b16 %v1531
        %v1936 = vunpack.c.h.b16 %v1531
        %v1937 = vunpack.c.l.b16 %v1532
        %v1938 = vunpack.c.l.b16 %v1533
        %v1939 = vunpack.c.h.b16 %v1533
        %v1940 = vunpack.c.l.b16 %v1534
        %v1941 = vunpack.c.l.b16 %v1535
        %v1942 = vunpack.c.h.b16 %v1535
        %v1943 = vunpack.c.l.b16 %v1536
        %v1944 = vunpack.c.l.b16 %v1537
        %v1945 = vunpack.c.h.b16 %v1537
        %v1946 = vunpack.c.l.b16 %v1538
        %v1947 = vunpack.c.l.b16 %v1539
        %v1948 = vunpack.c.h.b16 %v1539
        %v1949 = vunpack.c.l.b16 %v1540
        %v1950 = vunpack.c.l.b16 %v1541
        %v1951 = vunpack.c.h.b16 %v1541
        %v1952 = vunpack.c.l.b16 %v1542
        %v1953 = vpack.c.b16 %v1740, %v1737
        %v1954 = vpack.c.b16 %v1741, %v1738
        %v1955 = vpack.c.b16 %v1742, %v1739
        %v1956 = vpack.c.b16 %v1746, %v1743
        %v1957 = vpack.c.b16 %v1747, %v1744
        %v1958 = vpack.c.b16 %v1748, %v1745
        %v1959 = vpack.c.b16 %v1752, %v1749
        %v1960 = vpack.c.b16 %v1753, %v1750
        %v1961 = vpack.c.b16 %v1754, %v1751
        %v1962 = vpack.c.b16 %v1758, %v1755
        %v1963 = vpack.c.b16 %v1759, %v1756
        %v1964 = vpack.c.b16 %v1760, %v1757
        %v1965 = vpack.c.b16 %v1764, %v1761
        %v1966 = vpack.c.b16 %v1765, %v1762
        %v1967 = vpack.c.b16 %v1766, %v1763
        %v1968 = vpack.c.b16 %v1770, %v1767
        %v1969 = vpack.c.b16 %v1771, %v1768
        %v1970 = vpack.c.b16 %v1772, %v1769
        %v1971 = vpack.c.b16 %v1776, %v1773
        %v1972 = vpack.c.b16 %v1777, %v1774
        %v1973 = vpack.c.b16 %v1778, %v1775
        %v1974 = vpack.c.b16 %v1782, %v1779
        %v1975 = vpack.c.b16 %v1783, %v1780
        %v1976 = vpack.c.b16 %v1784, %v1781
        %v1977 = vpack.c.b16 %v1788, %v1785
        %v1978 = vpack.c.b16 %v1789, %v1786
        %v1979 = vpack.c.b16 %v1790, %v1787
        %v1980 = vpack.c.b16 %v1794, %v1791
        %v1981 = vpack.c.b16 %v1795, %v1792
        %v1982 = vpack.c.b16 %v1796, %v1793
        %v1983 = vpack.c.b16 %v1800, %v1797
        %v1984 = vpack.c.b16 %v1801, %v1798
        %v1985 = vpack.c.b16 %v1802, %v1799
        %v1986 = vpack.c.b16 %v1806, %v1803
        %v1987 = vpack.c.b16 %v1807, %v1804
        %v1988 = vpack.c.b16 %v1808, %v1805
        %v1989 = vpack.c.b16 %v1812, %v1809
        %v1990 = vpack.c.b16 %v1813, %v1810
        %v1991 = vpack.c.b16 %v1814, %v1811
        %v1992 = vpack.c.b16 %v1818, %v1815
        %v1993 = vpack.c.b16 %v1819, %v1816
        %v1994 = vpack.c.b16 %v1820, %v1817
        %v1995 = vpack.c.b16 %v1824, %v1821
        %v1996 = vpack.c.b16 %v1825, %v1822
        %v1997 = vpack.c.b16 %v1826, %v1823
        %v1998 = vpack.c.b16 %v1830, %v1827
        %v1999 = vpack.c.b16 %v1831, %v1828
        %v2000 = vpack.c.b16 %v1832, %v1829
        %v2001 = vpack.c.b16 %v1836, %v1833
        %v2002 = vpack.c.b16 %v1837, %v1834
        %v2003 = vpack.c.b16 %v1838, %v1835
        %v2004 = vpack.c.b16 %v1842, %v1839
        %v2005 = vpack.c.b16 %v1843, %v1840
        %v2006 = vpack.c.b16 %v1844, %v1841
        %v2007 = vpack.c.b16 %v1848, %v1845
        %v2008 = vpack.c.b16 %v1849, %v1846
        %v2009 = vpack.c.b16 %v1850, %v1847
        %v2010 = vpack.c.b16 %v1854, %v1851
        %v2011 = vpack.c.b16 %v1855, %v1852
        %v2012 = vpack.c.b16 %v1856, %v1853
        %v2013 = vpack.c.b16 %v1860, %v1857
        %v2014 = vpack.c.b16 %v1861, %v1858
        %v2015 = vpack.c.b16 %v1862, %v1859
        %v2016 = vpack.c.b16 %v1866, %v1863
        %v2017 = vpack.c.b16 %v1867, %v1864
        %v2018 = vpack.c.b16 %v1868, %v1865
        %v2019 = vpack.c.b16 %v1872, %v1869
        %v2020 = vpack.c.b16 %v1873, %v1870
        %v2021 = vpack.c.b16 %v1874, %v1871
        %v2022 = vpack.c.b16 %v1878, %v1875
        %v2023 = vpack.c.b16 %v1879, %v1876
        %v2024 = vpack.c.b16 %v1880, %v1877
        %v2025 = vpack.c.b16 %v1884, %v1881
        %v2026 = vpack.c.b16 %v1885, %v1882
        %v2027 = vpack.c.b16 %v1886, %v1883
        %v2028 = vpack.c.b16 %v1890, %v1887
        %v2029 = vpack.c.b16 %v1891, %v1888
        %v2030 = vpack.c.b16 %v1892, %v1889
        %v2031 = vpack.c.b16 %v1896, %v1893
        %v2032 = vpack.c.b16 %v1897, %v1894
        %v2033 = vpack.c.b16 %v1898, %v1895
        %v2034 = vpack.c.b16 %v1902, %v1899
        %v2035 = vpack.c.b16 %v1903, %v1900
        %v2036 = vpack.c.b16 %v1904, %v1901
        %v2037 = vpack.c.b16 %v1908, %v1905
        %v2038 = vpack.c.b16 %v1909, %v1906
        %v2039 = vpack.c.b16 %v1910, %v1907
        %v2040 = vpack.c.b16 %v1914, %v1911
        %v2041 = vpack.c.b16 %v1915, %v1912
        %v2042 = vpack.c.b16 %v1916, %v1913
        %v2043 = vpack.c.b16 %v1920, %v1917
        %v2044 = vpack.c.b16 %v1921, %v1918
        %v2045 = vpack.c.b16 %v1922, %v1919
        %v2046 = vpack.c.b16 %v1926, %v1923
        %v2047 = vpack.c.b16 %v1927, %v1924
        %v2048 = vpack.c.b16 %v1928, %v1925
        %v2049 = vpack.c.b16 %v1932, %v1929
        %v2050 = vpack.c.b16 %v1933, %v1930
        %v2051 = vpack.c.b16 %v1934, %v1931
        %v2052 = vpack.c.b16 %v1938, %v1935
        %v2053 = vpack.c.b16 %v1939, %v1936
        %v2054 = vpack.c.b16 %v1940, %v1937
        %v2055 = vpack.c.b16 %v1944, %v1941
        %v2056 = vpack.c.b16 %v1945, %v1942
        %v2057 = vpack.c.b16 %v1946, %v1943
        %v2058 = vpack.c.b16 %v1950, %v1947
        %v2059 = vpack.c.b16 %v1951, %v1948
        %v2060 = vpack.c.b16 %v1952, %v1949
        %vm2169 = vcmask 523264
        %v2171 = vsel %vm2169, %v1579, 0
        %v2174 = vsel %vm2169, %v1584, 0
        %2176 = vmatprep.subr.bf16.mxu0 %v1975
        %2177 = vmatpush1.bf16.msra.mxu0 %v1974
        %2178 = vmatprep.subr.bf16.mxu0 %v1972
        %2179 = vmatpush1.bf16.msra.mxu0 %v1971
        %2180 = vmatprep.subr.bf16.mxu0 %v1969
        %2181 = vmatpush1.bf16.msra.mxu0 %v1968
        %2182 = vmatprep.subr.bf16.mxu0 %v1966
        %2183 = vmatpush1.bf16.msra.mxu0 %v1965
        %2184 = vmatprep.subr.bf16.mxu0 %v1963
        %2185 = vmatpush1.bf16.msra.mxu0 %v1962
        %2186 = vmatprep.subr.bf16.mxu0 %v1960
        %2187 = vmatpush1.bf16.msra.mxu0 %v1959
        %2188 = vmatprep.subr.bf16.mxu0 %v1957
        %2189 = vmatpush1.bf16.msra.mxu0 %v1956
        %2190 = vmatprep.subr.bf16.mxu0 %v1954
        %2191 = vmatpush1.bf16.msra.mxu0 %v1953
        %2192 = vmatprep.subr.bf16.mxu0 %v1999
        %2193 = vmatpush2.bf16.msra.mxu0 %v1998
        %2194 = vmatprep.subr.bf16.mxu0 %v1996
        %2195 = vmatpush2.bf16.msra.mxu0 %v1995
        %2196 = vmatprep.subr.bf16.mxu0 %v1993
        %2197 = vmatpush2.bf16.msra.mxu0 %v1992
        %2198 = vmatprep.subr.bf16.mxu0 %v1990
        %2199 = vmatpush2.bf16.msra.mxu0 %v1989
        %2200 = vmatprep.subr.bf16.mxu0 %v1987
        %2201 = vmatpush2.bf16.msra.mxu0 %v1986
        %2202 = vmatprep.subr.bf16.mxu0 %v1984
        %2203 = vmatpush2.bf16.msra.mxu0 %v1983
        %2204 = vmatprep.subr.bf16.mxu0 %v1981
        %2205 = vmatpush2.bf16.msra.mxu0 %v1980
        %2206 = vmatprep.subr.bf16.mxu0 %v1978
        %2207 = vmatpush2.bf16.msra.mxu0 %v1977
        %2208 = vmatprep.mubr.bf16.mxu0 %v1576
        %2209 = vmatmul.mubr.bf16.gmra.mxu0 %v1575
        %v2210 = vpop.f32.mrf.mxu0
        %v2211 = vadd.f32 0.0, %v2210
        %v2212 = vpop.f32.mrf.mxu0
        %v2213 = vadd.f32 0.0, %v2212
        %v2214 = vpop.f32.mrf.mxu0
        %v2215 = vadd.f32 0.0, %v2214
        %v2216 = vpop.f32.mrf.mxu0
        %v2217 = vadd.f32 0.0, %v2216
        %2218 = vmatprep.mubr.bf16.mxu0 %v1581
        %2219 = vmatmul.mubr.bf16.gmra.mxu0 %v1580
        %v2220 = vpop.f32.mrf.mxu0
        %v2221 = vadd.f32 0.0, %v2220
        %v2222 = vpop.f32.mrf.mxu0
        %v2223 = vadd.f32 0.0, %v2222
        %v2224 = vpop.f32.mrf.mxu0
        %v2225 = vadd.f32 0.0, %v2224
        %v2226 = vpop.f32.mrf.mxu0
        %v2227 = vadd.f32 0.0, %v2226
        %2228 = vdwg.mxu0
        %2229 = vmatprep.subr.bf16.mxu0 %v2023
        %2230 = vmatpush1.bf16.msra.mxu0 %v2022
        %2231 = vmatprep.subr.bf16.mxu0 %v2020
        %2232 = vmatpush1.bf16.msra.mxu0 %v2019
        %2233 = vmatprep.subr.bf16.mxu0 %v2017
        %2234 = vmatpush1.bf16.msra.mxu0 %v2016
        %2235 = vmatprep.subr.bf16.mxu0 %v2014
        %2236 = vmatpush1.bf16.msra.mxu0 %v2013
        %2237 = vmatprep.subr.bf16.mxu0 %v2011
        %2238 = vmatpush1.bf16.msra.mxu0 %v2010
        %2239 = vmatprep.subr.bf16.mxu0 %v2008
        %2240 = vmatpush1.bf16.msra.mxu0 %v2007
        %2241 = vmatprep.subr.bf16.mxu0 %v2005
        %2242 = vmatpush1.bf16.msra.mxu0 %v2004
        %2243 = vmatprep.subr.bf16.mxu0 %v2002
        %2244 = vmatpush1.bf16.msra.mxu0 %v2001
        %2245 = vmatprep.subr.bf16.mxu0 %v2047
        %2246 = vmatpush2.bf16.msra.mxu0 %v2046
        %2247 = vmatprep.subr.bf16.mxu0 %v2044
        %2248 = vmatpush2.bf16.msra.mxu0 %v2043
        %2249 = vmatprep.subr.bf16.mxu0 %v2041
        %2250 = vmatpush2.bf16.msra.mxu0 %v2040
        %2251 = vmatprep.subr.bf16.mxu0 %v2038
        %2252 = vmatpush2.bf16.msra.mxu0 %v2037
        %2253 = vmatprep.subr.bf16.mxu0 %v2035
        %2254 = vmatpush2.bf16.msra.mxu0 %v2034
        %2255 = vmatprep.subr.bf16.mxu0 %v2032
        %2256 = vmatpush2.bf16.msra.mxu0 %v2031
        %2257 = vmatprep.subr.bf16.mxu0 %v2029
        %2258 = vmatpush2.bf16.msra.mxu0 %v2028
        %2259 = vmatprep.subr.bf16.mxu0 %v2026
        %2260 = vmatpush2.bf16.msra.mxu0 %v2025
        %2261 = vmatprep.mubr.bf16.mxu0 %v1578
        %2262 = vmatmul.mubr.bf16.gmra.mxu0 %v1577
        %v2263 = vpop.f32.mrf.mxu0
        %v2264 = vadd.f32 %v2211, %v2263
        %v2265 = vpop.f32.mrf.mxu0
        %v2266 = vadd.f32 %v2213, %v2265
        %v2267 = vpop.f32.mrf.mxu0
        %v2268 = vadd.f32 %v2215, %v2267
        %v2269 = vpop.f32.mrf.mxu0
        %v2270 = vadd.f32 %v2217, %v2269
        %2271 = vmatprep.mubr.bf16.mxu0 %v1583
        %2272 = vmatmul.mubr.bf16.gmra.mxu0 %v1582
        %v2273 = vpop.f32.mrf.mxu0
        %v2274 = vadd.f32 %v2221, %v2273
        %v2275 = vpop.f32.mrf.mxu0
        %v2276 = vadd.f32 %v2223, %v2275
        %v2277 = vpop.f32.mrf.mxu0
        %v2278 = vadd.f32 %v2225, %v2277
        %v2279 = vpop.f32.mrf.mxu0
        %v2280 = vadd.f32 %v2227, %v2279
        %2281 = vdwg.mxu0
        %2282 = vmatprep.subr.bf16.mxu0 0
        %2283 = vmatpush1.bf16.msra.mxu0 0
        %2284 = vmatprep.subr.bf16.mxu0 0
        %2285 = vmatpush1.bf16.msra.mxu0 0
        %2286 = vmatprep.subr.bf16.mxu0 0
        %2287 = vmatpush1.bf16.msra.mxu0 0
        %2288 = vmatprep.subr.bf16.mxu0 0
        %2289 = vmatpush1.bf16.msra.mxu0 0
        %2290 = vmatprep.subr.bf16.mxu0 %v2059
        %2291 = vmatpush1.bf16.msra.mxu0 %v2058
        %2292 = vmatprep.subr.bf16.mxu0 %v2056
        %2293 = vmatpush1.bf16.msra.mxu0 %v2055
        %2294 = vmatprep.subr.bf16.mxu0 %v2053
        %2295 = vmatpush1.bf16.msra.mxu0 %v2052
        %2296 = vmatprep.subr.bf16.mxu0 %v2050
        %2297 = vmatpush1.bf16.msra.mxu0 %v2049
        %2298 = vmatprep.subr.bf16.mxu0 0
        %2299 = vmatpush2.bf16.msra.mxu0 0
        %2300 = vmatprep.subr.bf16.mxu0 0
        %2301 = vmatpush2.bf16.msra.mxu0 0
        %2302 = vmatprep.subr.bf16.mxu0 0
        %2303 = vmatpush2.bf16.msra.mxu0 0
        %2304 = vmatprep.subr.bf16.mxu0 0
        %2305 = vmatpush2.bf16.msra.mxu0 0
        %2306 = vmatprep.subr.bf16.mxu0 0
        %2307 = vmatpush2.bf16.msra.mxu0 0
        %2308 = vmatprep.subr.bf16.mxu0 0
        %2309 = vmatpush2.bf16.msra.mxu0 0
        %2310 = vmatprep.subr.bf16.mxu0 0
        %2311 = vmatpush2.bf16.msra.mxu0 0
        %2312 = vmatprep.subr.bf16.mxu0 0
        %2313 = vmatpush2.bf16.msra.mxu0 0
        %2314 = vmatprep.mubr.bf16.mxu0 0
        %2315 = vmatmul.mubr.bf16.gmra.mxu0 %v2171
        %v2316 = vpop.f32.mrf.mxu0
        %v2317 = vadd.f32 %v2264, %v2316
        %v2318 = vpop.f32.mrf.mxu0
        %v2319 = vadd.f32 %v2266, %v2318
        %v2320 = vpop.f32.mrf.mxu0
        %v2321 = vadd.f32 %v2268, %v2320
        %v2322 = vpop.f32.mrf.mxu0
        %v2323 = vadd.f32 %v2270, %v2322
        %2324 = vmatprep.mubr.bf16.mxu0 0
        %2325 = vmatmul.mubr.bf16.gmra.mxu0 %v2174
        %v2326 = vpop.f32.mrf.mxu0
        %v2327 = vadd.f32 %v2274, %v2326
        %v2328 = vpop.f32.mrf.mxu0
        %v2329 = vadd.f32 %v2276, %v2328
        %v2330 = vpop.f32.mrf.mxu0
        %v2331 = vadd.f32 %v2278, %v2330
        %v2332 = vpop.f32.mrf.mxu0
        %v2333 = vadd.f32 %v2280, %v2332
        %2334 = vdwg.mxu0
        %2335 = vmatprep.subr.bf16.mxu0 0
        %2336 = vmatpush1.bf16.msra.mxu0 %v1976
        %2337 = vmatprep.subr.bf16.mxu0 0
        %2338 = vmatpush1.bf16.msra.mxu0 %v1973
        %2339 = vmatprep.subr.bf16.mxu0 0
        %2340 = vmatpush1.bf16.msra.mxu0 %v1970
        %2341 = vmatprep.subr.bf16.mxu0 0
        %2342 = vmatpush1.bf16.msra.mxu0 %v1967
        %2343 = vmatprep.subr.bf16.mxu0 0
        %2344 = vmatpush1.bf16.msra.mxu0 %v1964
        %2345 = vmatprep.subr.bf16.mxu0 0
        %2346 = vmatpush1.bf16.msra.mxu0 %v1961
        %2347 = vmatprep.subr.bf16.mxu0 0
        %2348 = vmatpush1.bf16.msra.mxu0 %v1958
        %2349 = vmatprep.subr.bf16.mxu0 0
        %2350 = vmatpush1.bf16.msra.mxu0 %v1955
        %2351 = vmatprep.subr.bf16.mxu0 0
        %2352 = vmatpush2.bf16.msra.mxu0 %v2000
        %2353 = vmatprep.subr.bf16.mxu0 0
        %2354 = vmatpush2.bf16.msra.mxu0 %v1997
        %2355 = vmatprep.subr.bf16.mxu0 0
        %2356 = vmatpush2.bf16.msra.mxu0 %v1994
        %2357 = vmatprep.subr.bf16.mxu0 0
        %2358 = vmatpush2.bf16.msra.mxu0 %v1991
        %2359 = vmatprep.subr.bf16.mxu0 0
        %2360 = vmatpush2.bf16.msra.mxu0 %v1988
        %2361 = vmatprep.subr.bf16.mxu0 0
        %2362 = vmatpush2.bf16.msra.mxu0 %v1985
        %2363 = vmatprep.subr.bf16.mxu0 0
        %2364 = vmatpush2.bf16.msra.mxu0 %v1982
        %2365 = vmatprep.subr.bf16.mxu0 0
        %2366 = vmatpush2.bf16.msra.mxu0 %v1979
        %2367 = vmatprep.mubr.bf16.mxu0 %v1576
        %2368 = vmatmul.mubr.bf16.gmra.mxu0 %v1575
        %v2369 = vpop.f32.mrf.mxu0
        %v2370 = vadd.f32 0.0, %v2369
        %v2371 = vpop.f32.mrf.mxu0
        %v2372 = vpop.f32.mrf.mxu0
        %v2373 = vadd.f32 0.0, %v2372
        %v2374 = vpop.f32.mrf.mxu0
        %2375 = vmatprep.mubr.bf16.mxu0 %v1581
        %2376 = vmatmul.mubr.bf16.gmra.mxu0 %v1580
        %v2377 = vpop.f32.mrf.mxu0
        %v2378 = vadd.f32 0.0, %v2377
        %v2379 = vpop.f32.mrf.mxu0
        %v2380 = vpop.f32.mrf.mxu0
        %v2381 = vadd.f32 0.0, %v2380
        %v2382 = vpop.f32.mrf.mxu0
        %2383 = vdwg.mxu0
        %2384 = vmatprep.subr.bf16.mxu0 0
        %2385 = vmatpush1.bf16.msra.mxu0 %v2024
        %2386 = vmatprep.subr.bf16.mxu0 0
        %2387 = vmatpush1.bf16.msra.mxu0 %v2021
        %2388 = vmatprep.subr.bf16.mxu0 0
        %2389 = vmatpush1.bf16.msra.mxu0 %v2018
        %2390 = vmatprep.subr.bf16.mxu0 0
        %2391 = vmatpush1.bf16.msra.mxu0 %v2015
        %2392 = vmatprep.subr.bf16.mxu0 0
        %2393 = vmatpush1.bf16.msra.mxu0 %v2012
        %2394 = vmatprep.subr.bf16.mxu0 0
        %2395 = vmatpush1.bf16.msra.mxu0 %v2009
        %2396 = vmatprep.subr.bf16.mxu0 0
        %2397 = vmatpush1.bf16.msra.mxu0 %v2006
        %2398 = vmatprep.subr.bf16.mxu0 0
        %2399 = vmatpush1.bf16.msra.mxu0 %v2003
        %2400 = vmatprep.subr.bf16.mxu0 0
        %2401 = vmatpush2.bf16.msra.mxu0 %v2048
        %2402 = vmatprep.subr.bf16.mxu0 0
        %2403 = vmatpush2.bf16.msra.mxu0 %v2045
        %2404 = vmatprep.subr.bf16.mxu0 0
        %2405 = vmatpush2.bf16.msra.mxu0 %v2042
        %2406 = vmatprep.subr.bf16.mxu0 0
        %2407 = vmatpush2.bf16.msra.mxu0 %v2039
        %2408 = vmatprep.subr.bf16.mxu0 0
        %2409 = vmatpush2.bf16.msra.mxu0 %v2036
        %2410 = vmatprep.subr.bf16.mxu0 0
        %2411 = vmatpush2.bf16.msra.mxu0 %v2033
        %2412 = vmatprep.subr.bf16.mxu0 0
        %2413 = vmatpush2.bf16.msra.mxu0 %v2030
        %2414 = vmatprep.subr.bf16.mxu0 0
        %2415 = vmatpush2.bf16.msra.mxu0 %v2027
        %2416 = vmatprep.mubr.bf16.mxu0 %v1578
        %2417 = vmatmul.mubr.bf16.gmra.mxu0 %v1577
        %v2418 = vpop.f32.mrf.mxu0
        %v2419 = vadd.f32 %v2370, %v2418
        %v2420 = vpop.f32.mrf.mxu0
        %v2421 = vpop.f32.mrf.mxu0
        %v2422 = vadd.f32 %v2373, %v2421
        %v2423 = vpop.f32.mrf.mxu0
        %2424 = vmatprep.mubr.bf16.mxu0 %v1583
        %2425 = vmatmul.mubr.bf16.gmra.mxu0 %v1582
        %v2426 = vpop.f32.mrf.mxu0
        %v2427 = vadd.f32 %v2378, %v2426
        %v2428 = vpop.f32.mrf.mxu0
        %v2429 = vpop.f32.mrf.mxu0
        %v2430 = vadd.f32 %v2381, %v2429
        %v2431 = vpop.f32.mrf.mxu0
        %2432 = vdwg.mxu0
        %2433 = vmatprep.subr.bf16.mxu0 0
        %2434 = vmatpush1.bf16.msra.mxu0 0
        %2435 = vmatprep.subr.bf16.mxu0 0
        %2436 = vmatpush1.bf16.msra.mxu0 0
        %2437 = vmatprep.subr.bf16.mxu0 0
        %2438 = vmatpush1.bf16.msra.mxu0 0
        %2439 = vmatprep.subr.bf16.mxu0 0
        %2440 = vmatpush1.bf16.msra.mxu0 0
        %2441 = vmatprep.subr.bf16.mxu0 0
        %2442 = vmatpush1.bf16.msra.mxu0 %v2060
        %2443 = vmatprep.subr.bf16.mxu0 0
        %2444 = vmatpush1.bf16.msra.mxu0 %v2057
        %2445 = vmatprep.subr.bf16.mxu0 0
        %2446 = vmatpush1.bf16.msra.mxu0 %v2054
        %2447 = vmatprep.subr.bf16.mxu0 0
        %2448 = vmatpush1.bf16.msra.mxu0 %v2051
        %2449 = vmatprep.subr.bf16.mxu0 0
        %2450 = vmatpush2.bf16.msra.mxu0 0
        %2451 = vmatprep.subr.bf16.mxu0 0
        %2452 = vmatpush2.bf16.msra.mxu0 0
        %2453 = vmatprep.subr.bf16.mxu0 0
        %2454 = vmatpush2.bf16.msra.mxu0 0
        %2455 = vmatprep.subr.bf16.mxu0 0
        %2456 = vmatpush2.bf16.msra.mxu0 0
        %2457 = vmatprep.subr.bf16.mxu0 0
        %2458 = vmatpush2.bf16.msra.mxu0 0
        %2459 = vmatprep.subr.bf16.mxu0 0
        %2460 = vmatpush2.bf16.msra.mxu0 0
        %2461 = vmatprep.subr.bf16.mxu0 0
        %2462 = vmatpush2.bf16.msra.mxu0 0
        %2463 = vmatprep.subr.bf16.mxu0 0
        %2464 = vmatpush2.bf16.msra.mxu0 0
        %2465 = vmatprep.mubr.bf16.mxu0 0
        %2466 = vmatmul.mubr.bf16.gmra.mxu0 %v2171
        %v2467 = vpop.f32.mrf.mxu0
        %v2468 = vadd.f32 %v2419, %v2467
        %v2469 = vpop.f32.mrf.mxu0
        %v2470 = vpop.f32.mrf.mxu0
        %v2471 = vadd.f32 %v2422, %v2470
        %v2472 = vpop.f32.mrf.mxu0
        %2473 = vmatprep.mubr.bf16.mxu0 0
        %2474 = vmatmul.mubr.bf16.gmra.mxu0 %v2174
        %v2475 = vpop.f32.mrf.mxu0
        %v2476 = vadd.f32 %v2427, %v2475
        %v2477 = vpop.f32.mrf.mxu0
        %v2478 = vpop.f32.mrf.mxu0
        %v2479 = vadd.f32 %v2430, %v2478
        %v2480 = vpop.f32.mrf.mxu0
        %2481 = vdwg.mxu0
        %v2483 = vlaneseq
        %v2484 = vshrl.u32 %v2483, 7
        %v2485 = vsub.s32 0, %v2484
        %v2486 = vrot.slane %v288, %v2485
        %v2487 = vlaneseq
        %v2488 = vshrl.u32 %v2487, 7
        %v2489 = vsub.s32 1, %v2488
        %v2490 = vrot.slane %v288, %v2489
        %v2491 = vlaneseq
        %v2492 = vshrl.u32 %v2491, 7
        %v2493 = vsub.s32 2, %v2492
        %v2494 = vrot.slane %v288, %v2493
        %v2498 = vmul.f32 %v2317, %v2486
        %v2499 = vmul.f32 %v2319, %v2490
        %v2500 = vmul.f32 %v2468, %v2494
        %v2501 = vmul.f32 %v2321, %v2486
        %v2502 = vmul.f32 %v2323, %v2490
        %v2503 = vmul.f32 %v2471, %v2494
        %v2504 = vmul.f32 %v2327, %v2486
        %v2505 = vmul.f32 %v2329, %v2490
        %v2506 = vmul.f32 %v2476, %v2494
        %v2507 = vmul.f32 %v2331, %v2486
        %v2508 = vmul.f32 %v2333, %v2490
        %v2509 = vmul.f32 %v2479, %v2494
        %v2510 = vadd.f32 %v2498, %v2499
        %vm2511 = vcmask 556032
        %v2512 = vsel %vm2511, %v2500, 0.0
        %v2513 = vadd.f32 %v2510, %v2512
        %2514 = vadd.xlane.f32.xlu0 %v2513
        %v2515 = vpop.xlane.xlu0 %2514
        %v2516 = vadd.f32 %v2501, %v2502
        %v2517 = vsel %vm2511, %v2503, 0.0
        %v2518 = vadd.f32 %v2516, %v2517
        %2519 = vadd.xlane.f32.xlu0 %v2518
        %v2520 = vpop.xlane.xlu0 %2519
        %v2521 = vadd.f32 %v2504, %v2505
        %v2522 = vsel %vm2511, %v2506, 0.0
        %v2523 = vadd.f32 %v2521, %v2522
        %2524 = vadd.xlane.f32.xlu0 %v2523
        %v2525 = vpop.xlane.xlu0 %2524
        %v2526 = vadd.f32 %v2507, %v2508
        %v2527 = vsel %vm2511, %v2509, 0.0
        %v2528 = vadd.f32 %v2526, %v2527
        %2529 = vadd.xlane.f32.xlu0 %v2528
        %v2530 = vpop.xlane.xlu0 %2529
        %v2531 = vmul.f32 %v2498, %v2498
        %v2532 = vmul.f32 %v2499, %v2499
        %v2533 = vmul.f32 %v2500, %v2500
        %v2534 = vmul.f32 %v2501, %v2501
        %v2535 = vmul.f32 %v2502, %v2502
        %v2536 = vmul.f32 %v2503, %v2503
        %v2537 = vmul.f32 %v2504, %v2504
        %v2538 = vmul.f32 %v2505, %v2505
        %v2539 = vmul.f32 %v2506, %v2506
        %v2540 = vmul.f32 %v2507, %v2507
        %v2541 = vmul.f32 %v2508, %v2508
        %v2542 = vmul.f32 %v2509, %v2509
        %v2543 = vadd.f32 %v2531, %v2532
        %v2544 = vsel %vm2511, %v2533, 0.0
        %v2545 = vadd.f32 %v2543, %v2544
        %2546 = vadd.xlane.f32.xlu0 %v2545
        %v2547 = vpop.xlane.xlu0 %2546
        %v2548 = vadd.f32 %v2534, %v2535
        %v2549 = vsel %vm2511, %v2536, 0.0
        %v2550 = vadd.f32 %v2548, %v2549
        %2551 = vadd.xlane.f32.xlu0 %v2550
        %v2552 = vpop.xlane.xlu0 %2551
        %v2553 = vadd.f32 %v2537, %v2538
        %v2554 = vsel %vm2511, %v2539, 0.0
        %v2555 = vadd.f32 %v2553, %v2554
        %2556 = vadd.xlane.f32.xlu0 %v2555
        %v2557 = vpop.xlane.xlu0 %2556
        %v2558 = vadd.f32 %v2540, %v2541
        %v2559 = vsel %vm2511, %v2542, 0.0
        %v2560 = vadd.f32 %v2558, %v2559
        %2561 = vadd.xlane.f32.xlu0 %v2560
        %v2562 = vpop.xlane.xlu0 %2561
        %v2563 = vmul.f32 %v2515, 0.00390625
        %v2564 = vmul.f32 %v2520, 0.00390625
        %v2565 = vmul.f32 %v2525, 0.00390625
        %v2566 = vmul.f32 %v2530, 0.00390625
        %v2567 = vmul.f32 %v2547, 0.00390625
        %v2568 = vmul.f32 %v2552, 0.00390625
        %v2569 = vmul.f32 %v2557, 0.00390625
        %v2570 = vmul.f32 %v2562, 0.00390625
        %v2571 = vmul.f32 %v2563, %v2563
        %v2572 = vmul.f32 %v2564, %v2564
        %v2573 = vmul.f32 %v2565, %v2565
        %v2574 = vmul.f32 %v2566, %v2566
        %v2575 = vsub.f32 %v2567, %v2571
        %v2576 = vsub.f32 %v2568, %v2572
        %v2577 = vsub.f32 %v2569, %v2573
        %v2578 = vsub.f32 %v2570, %v2574
        %v2579 = vmax.f32 %v2575, 0.0
        %v2580 = vmax.f32 %v2576, 0.0
        %v2581 = vmax.f32 %v2577, 0.0
        %v2582 = vmax.f32 %v2578, 0.0
        %v2583 = vsub.f32 %v2498, %v2563
        %v2584 = vsub.f32 %v2499, %v2563
        %v2585 = vsub.f32 %v2500, %v2563
        %v2586 = vsub.f32 %v2501, %v2564
        %v2587 = vsub.f32 %v2502, %v2564
        %v2588 = vsub.f32 %v2503, %v2564
        %v2589 = vsub.f32 %v2504, %v2565
        %v2590 = vsub.f32 %v2505, %v2565
        %v2591 = vsub.f32 %v2506, %v2565
        %v2592 = vsub.f32 %v2507, %v2566
        %v2593 = vsub.f32 %v2508, %v2566
        %v2594 = vsub.f32 %v2509, %v2566
        %v2595 = vadd.f32 %v2579, 0.001
        %v2596 = vadd.f32 %v2580, 0.001
        %v2597 = vadd.f32 %v2581, 0.001
        %v2598 = vadd.f32 %v2582, 0.001
        %v2599 = vrsqrt.pop %v2595
        %v2600 = vrsqrt.pop %v2596
        %v2601 = vrsqrt.pop %v2597
        %v2602 = vrsqrt.pop %v2598
        %v2603 = vmul.f32 %v2583, %v2599
        %v2604 = vmul.f32 %v2584, %v2599
        %v2605 = vmul.f32 %v2585, %v2599
        %v2606 = vmul.f32 %v2586, %v2600
        %v2607 = vmul.f32 %v2587, %v2600
        %v2608 = vmul.f32 %v2588, %v2600
        %v2609 = vmul.f32 %v2589, %v2601
        %v2610 = vmul.f32 %v2590, %v2601
        %v2611 = vmul.f32 %v2591, %v2601
        %v2612 = vmul.f32 %v2592, %v2602
        %v2613 = vmul.f32 %v2593, %v2602
        %v2614 = vmul.f32 %v2594, %v2602
        %vm2615 = vcmp.gt.f32.partialorder %v2603, 0.0
        %vm2616 = vcmp.gt.f32.partialorder %v2604, 0.0
        %vm2617 = vcmp.gt.f32.partialorder %v2605, 0.0
        %vm2618 = vcmp.gt.f32.partialorder %v2606, 0.0
        %vm2619 = vcmp.gt.f32.partialorder %v2607, 0.0
        %vm2620 = vcmp.gt.f32.partialorder %v2608, 0.0
        %vm2621 = vcmp.gt.f32.partialorder %v2609, 0.0
        %vm2622 = vcmp.gt.f32.partialorder %v2610, 0.0
        %vm2623 = vcmp.gt.f32.partialorder %v2611, 0.0
        %vm2624 = vcmp.gt.f32.partialorder %v2612, 0.0
        %vm2625 = vcmp.gt.f32.partialorder %v2613, 0.0
        %vm2626 = vcmp.gt.f32.partialorder %v2614, 0.0
        %v2627 = vmul.f32 %v2603, 0.2
        %v2628 = vmul.f32 %v2604, 0.2
        %v2629 = vmul.f32 %v2605, 0.2
        %v2630 = vmul.f32 %v2606, 0.2
        %v2631 = vmul.f32 %v2607, 0.2
        %v2632 = vmul.f32 %v2608, 0.2
        %v2633 = vmul.f32 %v2609, 0.2
        %v2634 = vmul.f32 %v2610, 0.2
        %v2635 = vmul.f32 %v2611, 0.2
        %v2636 = vmul.f32 %v2612, 0.2
        %v2637 = vmul.f32 %v2613, 0.2
        %v2638 = vmul.f32 %v2614, 0.2
        %v2639 = vsel %vm2615, %v2603, %v2627
        %v2640 = vsel %vm2616, %v2604, %v2628
        %v2641 = vsel %vm2617, %v2605, %v2629
        %v2642 = vsel %vm2618, %v2606, %v2630
        %v2643 = vsel %vm2619, %v2607, %v2631
        %v2644 = vsel %vm2620, %v2608, %v2632
        %v2645 = vsel %vm2621, %v2609, %v2633
        %v2646 = vsel %vm2622, %v2610, %v2634
        %v2647 = vsel %vm2623, %v2611, %v2635
        %v2648 = vsel %vm2624, %v2612, %v2636
        %v2649 = vsel %vm2625, %v2613, %v2637
        %v2650 = vsel %vm2626, %v2614, %v2638
        %v2651 = vmul.f32 %v2639, %v2486
        %v2652 = vmul.f32 %v2640, %v2490
        %v2653 = vmul.f32 %v2641, %v2494
        %v2654 = vmul.f32 %v2642, %v2486
        %v2655 = vmul.f32 %v2643, %v2490
        %v2656 = vmul.f32 %v2644, %v2494
        %v2657 = vmul.f32 %v2645, %v2486
        %v2658 = vmul.f32 %v2646, %v2490
        %v2659 = vmul.f32 %v2647, %v2494
        %v2660 = vmul.f32 %v2648, %v2486
        %v2661 = vmul.f32 %v2649, %v2490
        %v2662 = vmul.f32 %v2650, %v2494
        %2663 = vst [vmem:[#allocation4] sm:$0xf] 0
        %2664 = vst [vmem:[#allocation4 + $0x14] sm:$0xf] 0
        %2665 = vst [vmem:[#allocation4 + $0x28] sm:$0xf] 0
        %2666 = vst [vmem:[#allocation4 + $0x3c] sm:$0xf] 0
        %vm2667 = vcmask 1044000
        %vm2668 = vcmask 556036
        %vm2669 = vmor %vm2668, %vm2667
        %2670 = vst.msk [vmem:[#allocation4 + $0xc] sm:$0xff] %vm2669, 0
        %2671 = vst.msk [vmem:[#allocation4 + $0x20] sm:$0xff] %vm2669, 0
        %2672 = vst.msk [vmem:[#allocation4 + $0x34] sm:$0xff] %vm2669, 0
        %2673 = vst.msk [vmem:[#allocation4 + $0x48] sm:$0xff] %vm2669, 0
        %v2674 = vpack.c.bf16 %v2654, %v2651
        %v2675 = vpack.c.bf16 %v2655, %v2652
        %v2676 = vpack.c.bf16 %v2656, %v2653
        %v2677 = vpack.c.bf16 %v2660, %v2657
        %v2678 = vpack.c.bf16 %v2661, %v2658
        %v2679 = vpack.c.bf16 %v2662, %v2659
        %v2686 = vunpack.c.l.b16 %v2674
        %v2687 = vunpack.c.l.b16 %v2675
        %v2688 = vunpack.c.l.b16 %v2676
        %v2689 = vunpack.c.h.b16 %v2674
        %v2690 = vunpack.c.h.b16 %v2675
        %v2691 = vunpack.c.h.b16 %v2676
        %v2692 = vunpack.c.l.b16 %v2677
        %v2693 = vunpack.c.l.b16 %v2678
        %v2694 = vunpack.c.l.b16 %v2679
        %v2695 = vunpack.c.h.b16 %v2677
        %v2696 = vunpack.c.h.b16 %v2678
        %v2697 = vunpack.c.h.b16 %v2679
        %v2698 = vpack.c.b16 %v2687, %v2686
        %v2699 = vpack.c.b16 %v2688, %v2688
        %v2700 = vpack.c.b16 %v2690, %v2689
        %v2701 = vpack.c.b16 %v2691, %v2691
        %v2702 = vpack.c.b16 %v2693, %v2692
        %v2703 = vpack.c.b16 %v2694, %v2694
        %v2704 = vpack.c.b16 %v2696, %v2695
        %v2705 = vpack.c.b16 %v2697, %v2697
        %2714 = vst [vmem:[#allocation4 + $0x4] sm:$0xff] %v2698
        %2715 = vst.msk [vmem:[#allocation4 + $0xc] sm:$0xf] %vm412, %v2699
        %2716 = vst [vmem:[#allocation4 + $0x18] sm:$0xff] %v2700
        %2717 = vst.msk [vmem:[#allocation4 + $0x20] sm:$0xf] %vm412, %v2701
        %2718 = vst [vmem:[#allocation4 + $0x2c] sm:$0xff] %v2702
        %2719 = vst.msk [vmem:[#allocation4 + $0x34] sm:$0xf] %vm412, %v2703
        %2720 = vst [vmem:[#allocation4 + $0x40] sm:$0xff] %v2704
        %2721 = vst.msk [vmem:[#allocation4 + $0x48] sm:$0xf] %vm412, %v2705
        %v2722 = vld [vmem:[#allocation4] sm:$0xff]
        %v2723 = vld [vmem:[#allocation4 + $0x8] sm:$0xff]
        %v2724 = vld [vmem:[#allocation4 + $0x14] sm:$0xff]
        %v2725 = vld [vmem:[#allocation4 + $0x1c] sm:$0xff]
        %v2726 = vld [vmem:[#allocation4 + $0x28] sm:$0xff]
        %v2727 = vld [vmem:[#allocation4 + $0x30] sm:$0xff]
        %v2728 = vld [vmem:[#allocation4 + $0x3c] sm:$0xff]
        %v2729 = vld [vmem:[#allocation4 + $0x44] sm:$0xff]
        %2738 = vrot.lane.b32.xlu0 %v2722, 19
        %v2739 = vpop.permute.xlu0 %2738
        %2740 = vrot.lane.b32.xlu0 %v2723, 19
        %v2741 = vpop.permute.xlu0 %2740
        %2742 = vrot.lane.b32.xlu0 %v2724, 19
        %v2743 = vpop.permute.xlu0 %2742
        %2744 = vrot.lane.b32.xlu0 %v2725, 19
        %v2745 = vpop.permute.xlu0 %2744
        %2746 = vrot.lane.b32.xlu0 %v2726, 19
        %v2747 = vpop.permute.xlu0 %2746
        %2748 = vrot.lane.b32.xlu0 %v2727, 19
        %v2749 = vpop.permute.xlu0 %2748
        %2750 = vrot.lane.b32.xlu0 %v2728, 19
        %v2751 = vpop.permute.xlu0 %2750
        %2752 = vrot.lane.b32.xlu0 %v2729, 19
        %v2753 = vpop.permute.xlu0 %2752
        %v2754 = vrot.slane %v2739, 4
        %v2755 = vrot.slane %v2741, 4
        %v2756 = vrot.slane %v2743, 4
        %v2757 = vrot.slane %v2745, 4
        %v2758 = vrot.slane %v2747, 4
        %v2759 = vrot.slane %v2749, 4
        %v2760 = vrot.slane %v2751, 4
        %v2761 = vrot.slane %v2753, 4
        %v2762 = vsel %vm369, %v2754, %v2755
        %v2763 = vsel %vm371, %v2739, %v2762
        %v2764 = vsel %vm371, %v2741, %v2755
        %v2765 = vsel %vm369, %v2756, %v2757
        %v2766 = vsel %vm371, %v2743, %v2765
        %v2767 = vsel %vm371, %v2745, %v2757
        %v2768 = vsel %vm369, %v2758, %v2759
        %v2769 = vsel %vm371, %v2747, %v2768
        %v2770 = vsel %vm371, %v2749, %v2759
        %v2771 = vsel %vm369, %v2760, %v2761
        %v2772 = vsel %vm371, %v2751, %v2771
        %v2773 = vsel %vm371, %v2753, %v2761
        %2782 = vst [vmem:[#allocation3] sm:$0xff] %v2763
        %2783 = vst.msk [vmem:[#allocation3 + $0x8] sm:$0xf] %vm412, %v2764
        %2784 = vst [vmem:[#allocation3 + $0xc] sm:$0xff] %v2766
        %2785 = vst.msk [vmem:[#allocation3 + $0x14] sm:$0xf] %vm412, %v2767
        %2786 = vst [vmem:[#allocation3 + $0x18] sm:$0xff] %v2769
        %2787 = vst.msk [vmem:[#allocation3 + $0x20] sm:$0xf] %vm412, %v2770
        %2788 = vst [vmem:[#allocation3 + $0x24] sm:$0xff] %v2772
        %2789 = vst.msk [vmem:[#allocation3 + $0x2c] sm:$0xf] %vm412, %v2773
        %v2790 = vld [vmem:[#allocation4] sm:$0xff]
        %v2791 = vld [vmem:[#allocation4 + $0x8] sm:$0xff]
        %v2792 = vld [vmem:[#allocation4 + $0x14] sm:$0xff]
        %v2793 = vld [vmem:[#allocation4 + $0x1c] sm:$0xff]
        %v2794 = vld [vmem:[#allocation4 + $0x28] sm:$0xff]
        %v2795 = vld [vmem:[#allocation4 + $0x30] sm:$0xff]
        %v2796 = vld [vmem:[#allocation4 + $0x3c] sm:$0xff]
        %v2797 = vld [vmem:[#allocation4 + $0x44] sm:$0xff]
        %2806 = vrot.lane.b32.xlu0 %v2790, 18
        %v2807 = vpop.permute.xlu0 %2806
        %2808 = vrot.lane.b32.xlu0 %v2791, 18
        %v2809 = vpop.permute.xlu0 %2808
        %2810 = vrot.lane.b32.xlu0 %v2792, 18
        %v2811 = vpop.permute.xlu0 %2810
        %2812 = vrot.lane.b32.xlu0 %v2793, 18
        %v2813 = vpop.permute.xlu0 %2812
        %2814 = vrot.lane.b32.xlu0 %v2794, 18
        %v2815 = vpop.permute.xlu0 %2814
        %2816 = vrot.lane.b32.xlu0 %v2795, 18
        %v2817 = vpop.permute.xlu0 %2816
        %2818 = vrot.lane.b32.xlu0 %v2796, 18
        %v2819 = vpop.permute.xlu0 %2818
        %2820 = vrot.lane.b32.xlu0 %v2797, 18
        %v2821 = vpop.permute.xlu0 %2820
        %v2822 = vrot.slane %v2807, 4
        %v2823 = vrot.slane %v2809, 4
        %v2824 = vrot.slane %v2811, 4
        %v2825 = vrot.slane %v2813, 4
        %v2826 = vrot.slane %v2815, 4
        %v2827 = vrot.slane %v2817, 4
        %v2828 = vrot.slane %v2819, 4
        %v2829 = vrot.slane %v2821, 4
        %v2830 = vsel %vm369, %v2822, %v2823
        %v2831 = vsel %vm509, %v2807, %v2830
        %v2832 = vsel %vm509, %v2809, %v2823
        %v2833 = vsel %vm369, %v2824, %v2825
        %v2834 = vsel %vm509, %v2811, %v2833
        %v2835 = vsel %vm509, %v2813, %v2825
        %v2836 = vsel %vm369, %v2826, %v2827
        %v2837 = vsel %vm509, %v2815, %v2836
        %v2838 = vsel %vm509, %v2817, %v2827
        %v2839 = vsel %vm369, %v2828, %v2829
        %v2840 = vsel %vm509, %v2819, %v2839
        %v2841 = vsel %vm509, %v2821, %v2829
        %2850 = vst [vmem:[#allocation3 + $0x30] sm:$0xff] %v2831
        %2851 = vst.msk [vmem:[#allocation3 + $0x38] sm:$0xf] %vm412, %v2832
        %2852 = vst [vmem:[#allocation3 + $0x3c] sm:$0xff] %v2834
        %2853 = vst.msk [vmem:[#allocation3 + $0x44] sm:$0xf] %vm412, %v2835
        %2854 = vst [vmem:[#allocation3 + $0x48] sm:$0xff] %v2837
        %2855 = vst.msk [vmem:[#allocation3 + $0x50] sm:$0xf] %vm412, %v2838
        %2856 = vst [vmem:[#allocation3 + $0x54] sm:$0xff] %v2840
        %2857 = vst.msk [vmem:[#allocation3 + $0x5c] sm:$0xf] %vm412, %v2841
        %v2858 = vld [vmem:[#allocation4] sm:$0xff]
        %v2859 = vld [vmem:[#allocation4 + $0x8] sm:$0xff]
        %v2860 = vld [vmem:[#allocation4 + $0x14] sm:$0xff]
        %v2861 = vld [vmem:[#allocation4 + $0x1c] sm:$0xff]
        %v2862 = vld [vmem:[#allocation4 + $0x28] sm:$0xff]
        %v2863 = vld [vmem:[#allocation4 + $0x30] sm:$0xff]
        %v2864 = vld [vmem:[#allocation4 + $0x3c] sm:$0xff]
        %v2865 = vld [vmem:[#allocation4 + $0x44] sm:$0xff]
        %2874 = vrot.lane.b32.xlu0 %v2858, 17
        %v2875 = vpop.permute.xlu0 %2874
        %2876 = vrot.lane.b32.xlu0 %v2859, 17
        %v2877 = vpop.permute.xlu0 %2876
        %2878 = vrot.lane.b32.xlu0 %v2860, 17
        %v2879 = vpop.permute.xlu0 %2878
        %2880 = vrot.lane.b32.xlu0 %v2861, 17
        %v2881 = vpop.permute.xlu0 %2880
        %2882 = vrot.lane.b32.xlu0 %v2862, 17
        %v2883 = vpop.permute.xlu0 %2882
        %2884 = vrot.lane.b32.xlu0 %v2863, 17
        %v2885 = vpop.permute.xlu0 %2884
        %2886 = vrot.lane.b32.xlu0 %v2864, 17
        %v2887 = vpop.permute.xlu0 %2886
        %2888 = vrot.lane.b32.xlu0 %v2865, 17
        %v2889 = vpop.permute.xlu0 %2888
        %v2890 = vrot.slane %v2875, 4
        %v2891 = vrot.slane %v2877, 4
        %v2892 = vrot.slane %v2879, 4
        %v2893 = vrot.slane %v2881, 4
        %v2894 = vrot.slane %v2883, 4
        %v2895 = vrot.slane %v2885, 4
        %v2896 = vrot.slane %v2887, 4
        %v2897 = vrot.slane %v2889, 4
        %v2898 = vsel %vm369, %v2890, %v2891
        %v2899 = vsel %vm646, %v2875, %v2898
        %v2900 = vsel %vm646, %v2877, %v2891
        %v2901 = vsel %vm369, %v2892, %v2893
        %v2902 = vsel %vm646, %v2879, %v2901
        %v2903 = vsel %vm646, %v2881, %v2893
        %v2904 = vsel %vm369, %v2894, %v2895
        %v2905 = vsel %vm646, %v2883, %v2904
        %v2906 = vsel %vm646, %v2885, %v2895
        %v2907 = vsel %vm369, %v2896, %v2897
        %v2908 = vsel %vm646, %v2887, %v2907
        %v2909 = vsel %vm646, %v2889, %v2897
        %2918 = vst [vmem:[#allocation3 + $0x60] sm:$0xff] %v2899
        %2919 = vst.msk [vmem:[#allocation3 + $0x68] sm:$0xf] %vm412, %v2900
        %2920 = vst [vmem:[#allocation3 + $0x6c] sm:$0xff] %v2902
        %2921 = vst.msk [vmem:[#allocation3 + $0x74] sm:$0xf] %vm412, %v2903
        %2922 = vst [vmem:[#allocation3 + $0x78] sm:$0xff] %v2905
        %2923 = vst.msk [vmem:[#allocation3 + $0x80] sm:$0xf] %vm412, %v2906
        %2924 = vst [vmem:[#allocation3 + $0x84] sm:$0xff] %v2908
        %2925 = vst.msk [vmem:[#allocation3 + $0x8c] sm:$0xf] %vm412, %v2909
        %v2926 = vld [vmem:[#allocation4] sm:$0xff]
        %v2927 = vld [vmem:[#allocation4 + $0x8] sm:$0xff]
        %v2928 = vld [vmem:[#allocation4 + $0x14] sm:$0xff]
        %v2929 = vld [vmem:[#allocation4 + $0x1c] sm:$0xff]
        %v2930 = vld [vmem:[#allocation4 + $0x28] sm:$0xff]
        %v2931 = vld [vmem:[#allocation4 + $0x30] sm:$0xff]
        %v2932 = vld [vmem:[#allocation4 + $0x3c] sm:$0xff]
        %v2933 = vld [vmem:[#allocation4 + $0x44] sm:$0xff]
        %2942 = vrot.lane.b32.xlu0 %v2926, 1
        %v2943 = vpop.permute.xlu0 %2942
        %2944 = vrot.lane.b32.xlu0 %v2927, 1
        %v2945 = vpop.permute.xlu0 %2944
        %2946 = vrot.lane.b32.xlu0 %v2928, 1
        %v2947 = vpop.permute.xlu0 %2946
        %2948 = vrot.lane.b32.xlu0 %v2929, 1
        %v2949 = vpop.permute.xlu0 %2948
        %2950 = vrot.lane.b32.xlu0 %v2930, 1
        %v2951 = vpop.permute.xlu0 %2950
        %2952 = vrot.lane.b32.xlu0 %v2931, 1
        %v2953 = vpop.permute.xlu0 %2952
        %2954 = vrot.lane.b32.xlu0 %v2932, 1
        %v2955 = vpop.permute.xlu0 %2954
        %2956 = vrot.lane.b32.xlu0 %v2933, 1
        %v2957 = vpop.permute.xlu0 %2956
        %v2958 = vrot.slane %v2943, 4
        %v2959 = vrot.slane %v2945, 4
        %v2960 = vrot.slane %v2947, 4
        %v2961 = vrot.slane %v2949, 4
        %v2962 = vrot.slane %v2951, 4
        %v2963 = vrot.slane %v2953, 4
        %v2964 = vrot.slane %v2955, 4
        %v2965 = vrot.slane %v2957, 4
        %v2966 = vsel %vm369, %v2958, %v2959
        %v2967 = vsel %vm783, %v2943, %v2966
        %v2968 = vsel %vm783, %v2945, %v2959
        %v2969 = vsel %vm369, %v2960, %v2961
        %v2970 = vsel %vm783, %v2947, %v2969
        %v2971 = vsel %vm783, %v2949, %v2961
        %v2972 = vsel %vm369, %v2962, %v2963
        %v2973 = vsel %vm783, %v2951, %v2972
        %v2974 = vsel %vm783, %v2953, %v2963
        %v2975 = vsel %vm369, %v2964, %v2965
        %v2976 = vsel %vm783, %v2955, %v2975
        %v2977 = vsel %vm783, %v2957, %v2965
        %2986 = vst [vmem:[#allocation3 + $0x90] sm:$0xff] %v2967
        %2987 = vst.msk [vmem:[#allocation3 + $0x98] sm:$0xf] %vm412, %v2968
        %2988 = vst [vmem:[#allocation3 + $0x9c] sm:$0xff] %v2970
        %2989 = vst.msk [vmem:[#allocation3 + $0xa4] sm:$0xf] %vm412, %v2971
        %2990 = vst [vmem:[#allocation3 + $0xa8] sm:$0xff] %v2973
        %2991 = vst.msk [vmem:[#allocation3 + $0xb0] sm:$0xf] %vm412, %v2974
        %2992 = vst [vmem:[#allocation3 + $0xb4] sm:$0xff] %v2976
        %2993 = vst.msk [vmem:[#allocation3 + $0xbc] sm:$0xf] %vm412, %v2977
        %v2994 = vld [vmem:[#allocation4 + $0x4] sm:$0xff]
        %v2995 = vld [vmem:[#allocation4 + $0xc] sm:$0xf]
        %v2996 = vld [vmem:[#allocation4 + $0x18] sm:$0xff]
        %v2997 = vld [vmem:[#allocation4 + $0x20] sm:$0xf]
        %v2998 = vld [vmem:[#allocation4 + $0x2c] sm:$0xff]
        %v2999 = vld [vmem:[#allocation4 + $0x34] sm:$0xf]
        %v3000 = vld [vmem:[#allocation4 + $0x40] sm:$0xff]
        %v3001 = vld [vmem:[#allocation4 + $0x48] sm:$0xf]
        %3002 = vst [vmem:[#allocation3 + $0xc0] sm:$0xff] %v2994
        %3003 = vst.msk [vmem:[#allocation3 + $0xc8] sm:$0xf] %vm412, %v2995
        %3004 = vst [vmem:[#allocation3 + $0xcc] sm:$0xff] %v2996
        %3005 = vst.msk [vmem:[#allocation3 + $0xd4] sm:$0xf] %vm412, %v2997
        %3006 = vst [vmem:[#allocation3 + $0xd8] sm:$0xff] %v2998
        %3007 = vst.msk [vmem:[#allocation3 + $0xe0] sm:$0xf] %vm412, %v2999
        %3008 = vst [vmem:[#allocation3 + $0xe4] sm:$0xff] %v3000
        %3009 = vst.msk [vmem:[#allocation3 + $0xec] sm:$0xf] %vm412, %v3001
        %v3010 = vld [vmem:[#allocation4 + $0x4] sm:$0xff]
        %v3011 = vld [vmem:[#allocation4 + $0xc] sm:$0xf]
        %v3012 = vld [vmem:[#allocation4 + $0x18] sm:$0xff]
        %v3013 = vld [vmem:[#allocation4 + $0x20] sm:$0xf]
        %v3014 = vld [vmem:[#allocation4 + $0x2c] sm:$0xff]
        %v3015 = vld [vmem:[#allocation4 + $0x34] sm:$0xf]
        %v3016 = vld [vmem:[#allocation4 + $0x40] sm:$0xff]
        %v3017 = vld [vmem:[#allocation4 + $0x48] sm:$0xf]
        %3026 = vrot.lane.b32.xlu0 %v3010, 127
        %v3027 = vpop.permute.xlu0 %3026
        %3028 = vrot.lane.b32.xlu0 %v3011, 127
        %v3029 = vpop.permute.xlu0 %3028
        %3030 = vrot.lane.b32.xlu0 %v3012, 127
        %v3031 = vpop.permute.xlu0 %3030
        %3032 = vrot.lane.b32.xlu0 %v3013, 127
        %v3033 = vpop.permute.xlu0 %3032
        %3034 = vrot.lane.b32.xlu0 %v3014, 127
        %v3035 = vpop.permute.xlu0 %3034
        %3036 = vrot.lane.b32.xlu0 %v3015, 127
        %v3037 = vpop.permute.xlu0 %3036
        %3038 = vrot.lane.b32.xlu0 %v3016, 127
        %v3039 = vpop.permute.xlu0 %3038
        %3040 = vrot.lane.b32.xlu0 %v3017, 127
        %v3041 = vpop.permute.xlu0 %3040
        %v3042 = vrot.slane %v3027, 4
        %v3043 = vrot.slane %v3029, 4
        %v3044 = vrot.slane %v3031, 4
        %v3045 = vrot.slane %v3033, 4
        %v3046 = vrot.slane %v3035, 4
        %v3047 = vrot.slane %v3037, 4
        %v3048 = vrot.slane %v3039, 4
        %v3049 = vrot.slane %v3041, 4
        %v3050 = vsel %vm369, %v3042, %v3043
        %v3051 = vsel %vm952, %v3027, %v3050
        %v3052 = vsel %vm369, %v3044, %v3045
        %v3053 = vsel %vm952, %v3031, %v3052
        %v3054 = vsel %vm369, %v3046, %v3047
        %v3055 = vsel %vm952, %v3035, %v3054
        %v3056 = vsel %vm369, %v3048, %v3049
        %v3057 = vsel %vm952, %v3039, %v3056
        %3066 = vst [vmem:[#allocation3 + $0xf0] sm:$0xff] %v3051
        %3067 = vst.msk [vmem:[#allocation3 + $0xf8] sm:$0xf] %vm412, %v3029
        %3068 = vst [vmem:[#allocation3 + $0xfc] sm:$0xff] %v3053
        %3069 = vst.msk [vmem:[#allocation3 + $0x104] sm:$0xf] %vm412, %v3033
        %3070 = vst [vmem:[#allocation3 + $0x108] sm:$0xff] %v3055
        %3071 = vst.msk [vmem:[#allocation3 + $0x110] sm:$0xf] %vm412, %v3037
        %3072 = vst [vmem:[#allocation3 + $0x114] sm:$0xff] %v3057
        %3073 = vst.msk [vmem:[#allocation3 + $0x11c] sm:$0xf] %vm412, %v3041
        %v3074 = vld [vmem:[#allocation4 + $0x4] sm:$0xff]
        %v3075 = vld [vmem:[#allocation4 + $0xc] sm:$0xf]
        %v3076 = vld [vmem:[#allocation4 + $0x18] sm:$0xff]
        %v3077 = vld [vmem:[#allocation4 + $0x20] sm:$0xf]
        %v3078 = vld [vmem:[#allocation4 + $0x2c] sm:$0xff]
        %v3079 = vld [vmem:[#allocation4 + $0x34] sm:$0xf]
        %v3080 = vld [vmem:[#allocation4 + $0x40] sm:$0xff]
        %v3081 = vld [vmem:[#allocation4 + $0x48] sm:$0xf]
        %3090 = vrot.lane.b32.xlu0 %v3074, 111
        %v3091 = vpop.permute.xlu0 %3090
        %3092 = vrot.lane.b32.xlu0 %v3075, 111
        %v3093 = vpop.permute.xlu0 %3092
        %3094 = vrot.lane.b32.xlu0 %v3076, 111
        %v3095 = vpop.permute.xlu0 %3094
        %3096 = vrot.lane.b32.xlu0 %v3077, 111
        %v3097 = vpop.permute.xlu0 %3096
        %3098 = vrot.lane.b32.xlu0 %v3078, 111
        %v3099 = vpop.permute.xlu0 %3098
        %3100 = vrot.lane.b32.xlu0 %v3079, 111
        %v3101 = vpop.permute.xlu0 %3100
        %3102 = vrot.lane.b32.xlu0 %v3080, 111
        %v3103 = vpop.permute.xlu0 %3102
        %3104 = vrot.lane.b32.xlu0 %v3081, 111
        %v3105 = vpop.permute.xlu0 %3104
        %v3106 = vrot.slane %v3091, 4
        %v3107 = vrot.slane %v3093, 4
        %v3108 = vrot.slane %v3095, 4
        %v3109 = vrot.slane %v3097, 4
        %v3110 = vrot.slane %v3099, 4
        %v3111 = vrot.slane %v3101, 4
        %v3112 = vrot.slane %v3103, 4
        %v3113 = vrot.slane %v3105, 4
        %v3114 = vsel %vm369, %v3106, %v3107
        %v3115 = vsel %vm1081, %v3091, %v3114
        %v3116 = vsel %vm369, %v3108, %v3109
        %v3117 = vsel %vm1081, %v3095, %v3116
        %v3118 = vsel %vm369, %v3110, %v3111
        %v3119 = vsel %vm1081, %v3099, %v3118
        %v3120 = vsel %vm369, %v3112, %v3113
        %v3121 = vsel %vm1081, %v3103, %v3120
        %3130 = vst [vmem:[#allocation3 + $0x120] sm:$0xff] %v3115
        %3131 = vst.msk [vmem:[#allocation3 + $0x128] sm:$0xf] %vm412, %v3093
        %3132 = vst [vmem:[#allocation3 + $0x12c] sm:$0xff] %v3117
        %3133 = vst.msk [vmem:[#allocation3 + $0x134] sm:$0xf] %vm412, %v3097
        %3134 = vst [vmem:[#allocation3 + $0x138] sm:$0xff] %v3119
        %3135 = vst.msk [vmem:[#allocation3 + $0x140] sm:$0xf] %vm412, %v3101
        %3136 = vst [vmem:[#allocation3 + $0x144] sm:$0xff] %v3121
        %3137 = vst.msk [vmem:[#allocation3 + $0x14c] sm:$0xf] %vm412, %v3105
        %v3138 = vld [vmem:[#allocation4 + $0x4] sm:$0xff]
        %v3139 = vld [vmem:[#allocation4 + $0xc] sm:$0xf]
        %v3140 = vld [vmem:[#allocation4 + $0x18] sm:$0xff]
        %v3141 = vld [vmem:[#allocation4 + $0x20] sm:$0xf]
        %v3142 = vld [vmem:[#allocation4 + $0x2c] sm:$0xff]
        %v3143 = vld [vmem:[#allocation4 + $0x34] sm:$0xf]
        %v3144 = vld [vmem:[#allocation4 + $0x40] sm:$0xff]
        %v3145 = vld [vmem:[#allocation4 + $0x48] sm:$0xf]
        %3154 = vrot.lane.b32.xlu0 %v3138, 110
        %v3155 = vpop.permute.xlu0 %3154
        %3156 = vrot.lane.b32.xlu0 %v3139, 110
        %v3157 = vpop.permute.xlu0 %3156
        %3158 = vrot.lane.b32.xlu0 %v3140, 110
        %v3159 = vpop.permute.xlu0 %3158
        %3160 = vrot.lane.b32.xlu0 %v3141, 110
        %v3161 = vpop.permute.xlu0 %3160
        %3162 = vrot.lane.b32.xlu0 %v3142, 110
        %v3163 = vpop.permute.xlu0 %3162
        %3164 = vrot.lane.b32.xlu0 %v3143, 110
        %v3165 = vpop.permute.xlu0 %3164
        %3166 = vrot.lane.b32.xlu0 %v3144, 110
        %v3167 = vpop.permute.xlu0 %3166
        %3168 = vrot.lane.b32.xlu0 %v3145, 110
        %v3169 = vpop.permute.xlu0 %3168
        %v3170 = vrot.slane %v3155, 4
        %v3171 = vrot.slane %v3157, 4
        %v3172 = vrot.slane %v3159, 4
        %v3173 = vrot.slane %v3161, 4
        %v3174 = vrot.slane %v3163, 4
        %v3175 = vrot.slane %v3165, 4
        %v3176 = vrot.slane %v3167, 4
        %v3177 = vrot.slane %v3169, 4
        %v3178 = vsel %vm369, %v3170, %v3171
        %v3179 = vsel %vm1210, %v3155, %v3178
        %v3180 = vsel %vm369, %v3172, %v3173
        %v3181 = vsel %vm1210, %v3159, %v3180
        %v3182 = vsel %vm369, %v3174, %v3175
        %v3183 = vsel %vm1210, %v3163, %v3182
        %v3184 = vsel %vm369, %v3176, %v3177
        %v3185 = vsel %vm1210, %v3167, %v3184
        %3194 = vst [vmem:[#allocation3 + $0x150] sm:$0xff] %v3179
        %3195 = vst.msk [vmem:[#allocation3 + $0x158] sm:$0xf] %vm412, %v3157
        %3196 = vst [vmem:[#allocation3 + $0x15c] sm:$0xff] %v3181
        %3197 = vst.msk [vmem:[#allocation3 + $0x164] sm:$0xf] %vm412, %v3161
        %3198 = vst [vmem:[#allocation3 + $0x168] sm:$0xff] %v3183
        %3199 = vst.msk [vmem:[#allocation3 + $0x170] sm:$0xf] %vm412, %v3165
        %3200 = vst [vmem:[#allocation3 + $0x174] sm:$0xff] %v3185
        %3201 = vst.msk [vmem:[#allocation3 + $0x17c] sm:$0xf] %vm412, %v3169
        %v3202 = vld [vmem:[#allocation4 + $0x4] sm:$0xff]
        %v3203 = vld [vmem:[#allocation4 + $0xc] sm:$0xf]
        %v3204 = vld [vmem:[#allocation4 + $0x18] sm:$0xff]
        %v3205 = vld [vmem:[#allocation4 + $0x20] sm:$0xf]
        %v3206 = vld [vmem:[#allocation4 + $0x2c] sm:$0xff]
        %v3207 = vld [vmem:[#allocation4 + $0x34] sm:$0xf]
        %v3208 = vld [vmem:[#allocation4 + $0x40] sm:$0xff]
        %v3209 = vld [vmem:[#allocation4 + $0x48] sm:$0xf]
        %3218 = vrot.lane.b32.xlu0 %v3202, 109
        %v3219 = vpop.permute.xlu0 %3218
        %3220 = vrot.lane.b32.xlu0 %v3203, 109
        %v3221 = vpop.permute.xlu0 %3220
        %3222 = vrot.lane.b32.xlu0 %v3204, 109
        %v3223 = vpop.permute.xlu0 %3222
        %3224 = vrot.lane.b32.xlu0 %v3205, 109
        %v3225 = vpop.permute.xlu0 %3224
        %3226 = vrot.lane.b32.xlu0 %v3206, 109
        %v3227 = vpop.permute.xlu0 %3226
        %3228 = vrot.lane.b32.xlu0 %v3207, 109
        %v3229 = vpop.permute.xlu0 %3228
        %3230 = vrot.lane.b32.xlu0 %v3208, 109
        %v3231 = vpop.permute.xlu0 %3230
        %3232 = vrot.lane.b32.xlu0 %v3209, 109
        %v3233 = vpop.permute.xlu0 %3232
        %v3234 = vrot.slane %v3219, 4
        %v3235 = vrot.slane %v3221, 4
        %v3236 = vrot.slane %v3223, 4
        %v3237 = vrot.slane %v3225, 4
        %v3238 = vrot.slane %v3227, 4
        %v3239 = vrot.slane %v3229, 4
        %v3240 = vrot.slane %v3231, 4
        %v3241 = vrot.slane %v3233, 4
        %v3242 = vsel %vm369, %v3234, %v3235
        %v3243 = vsel %vm1339, %v3219, %v3242
        %v3244 = vsel %vm369, %v3236, %v3237
        %v3245 = vsel %vm1339, %v3223, %v3244
        %v3246 = vsel %vm369, %v3238, %v3239
        %v3247 = vsel %vm1339, %v3227, %v3246
        %v3248 = vsel %vm369, %v3240, %v3241
        %v3249 = vsel %vm1339, %v3231, %v3248
        %3258 = vst [vmem:[#allocation3 + $0x180] sm:$0xff] %v3243
        %3259 = vst.msk [vmem:[#allocation3 + $0x188] sm:$0xf] %vm412, %v3221
        %3260 = vst [vmem:[#allocation3 + $0x18c] sm:$0xff] %v3245
        %3261 = vst.msk [vmem:[#allocation3 + $0x194] sm:$0xf] %vm412, %v3225
        %3262 = vst [vmem:[#allocation3 + $0x198] sm:$0xff] %v3247
        %3263 = vst.msk [vmem:[#allocation3 + $0x1a0] sm:$0xf] %vm412, %v3229
        %3264 = vst [vmem:[#allocation3 + $0x1a4] sm:$0xff] %v3249
        %3265 = vst.msk [vmem:[#allocation3 + $0x1ac] sm:$0xf] %vm412, %v3233
        %v3266 = vld [vmem:[#allocation10] sm:$0xff]
        %v3267 = vld [vmem:[#allocation10 + $0x8] sm:$0xf]
        %v3268 = vld [vmem:[#allocation10 + $0xc] sm:$0xff]
        %v3269 = vld [vmem:[#allocation10 + $0x14] sm:$0xf]
        %v3270 = vld [vmem:[#allocation10 + $0x18] sm:$0xff]
        %v3271 = vld [vmem:[#allocation10 + $0x20] sm:$0xf]
        %v3272 = vld [vmem:[#allocation10 + $0x24] sm:$0xff]
        %v3273 = vld [vmem:[#allocation10 + $0x2c] sm:$0xf]
        %v3274 = vld [vmem:[#allocation3] sm:$0xff]
        %v3275 = vld [vmem:[#allocation3 + $0x8] sm:$0xf]
        %v3276 = vld [vmem:[#allocation3 + $0xc] sm:$0xff]
        %v3277 = vld [vmem:[#allocation3 + $0x14] sm:$0xf]
        %v3278 = vld [vmem:[#allocation3 + $0x18] sm:$0xff]
        %v3279 = vld [vmem:[#allocation3 + $0x20] sm:$0xf]
        %v3280 = vld [vmem:[#allocation3 + $0x24] sm:$0xff]
        %v3281 = vld [vmem:[#allocation3 + $0x2c] sm:$0xf]
        %v3282 = vld [vmem:[#allocation3 + $0x30] sm:$0xff]
        %v3283 = vld [vmem:[#allocation3 + $0x38] sm:$0xf]
        %v3284 = vld [vmem:[#allocation3 + $0x3c] sm:$0xff]
        %v3285 = vld [vmem:[#allocation3 + $0x44] sm:$0xf]
        %v3286 = vld [vmem:[#allocation3 + $0x48] sm:$0xff]
        %v3287 = vld [vmem:[#allocation3 + $0x50] sm:$0xf]
        %v3288 = vld [vmem:[#allocation3 + $0x54] sm:$0xff]
        %v3289 = vld [vmem:[#allocation3 + $0x5c] sm:$0xf]
        %v3290 = vld [vmem:[#allocation3 + $0x60] sm:$0xff]
        %v3291 = vld [vmem:[#allocation3 + $0x68] sm:$0xf]
        %v3292 = vld [vmem:[#allocation3 + $0x6c] sm:$0xff]
        %v3293 = vld [vmem:[#allocation3 + $0x74] sm:$0xf]
        %v3294 = vld [vmem:[#allocation3 + $0x78] sm:$0xff]
        %v3295 = vld [vmem:[#allocation3 + $0x80] sm:$0xf]
        %v3296 = vld [vmem:[#allocation3 + $0x84] sm:$0xff]
        %v3297 = vld [vmem:[#allocation3 + $0x8c] sm:$0xf]
        %v3298 = vld [vmem:[#allocation3 + $0x90] sm:$0xff]
        %v3299 = vld [vmem:[#allocation3 + $0x98] sm:$0xf]
        %v3300 = vld [vmem:[#allocation3 + $0x9c] sm:$0xff]
        %v3301 = vld [vmem:[#allocation3 + $0xa4] sm:$0xf]
        %v3302 = vld [vmem:[#allocation3 + $0xa8] sm:$0xff]
        %v3303 = vld [vmem:[#allocation3 + $0xb0] sm:$0xf]
        %v3304 = vld [vmem:[#allocation3 + $0xb4] sm:$0xff]
        %v3305 = vld [vmem:[#allocation3 + $0xbc] sm:$0xf]
        %v3306 = vld [vmem:[#allocation3 + $0xc0] sm:$0xff]
        %v3307 = vld [vmem:[#allocation3 + $0xc8] sm:$0xf]
        %v3308 = vld [vmem:[#allocation3 + $0xcc] sm:$0xff]
        %v3309 = vld [vmem:[#allocation3 + $0xd4] sm:$0xf]
        %v3310 = vld [vmem:[#allocation3 + $0xd8] sm:$0xff]
        %v3311 = vld [vmem:[#allocation3 + $0xe0] sm:$0xf]
        %v3312 = vld [vmem:[#allocation3 + $0xe4] sm:$0xff]
        %v3313 = vld [vmem:[#allocation3 + $0xec] sm:$0xf]
        %v3314 = vld [vmem:[#allocation3 + $0xf0] sm:$0xff]
        %v3315 = vld [vmem:[#allocation3 + $0xf8] sm:$0xf]
        %v3316 = vld [vmem:[#allocation3 + $0xfc] sm:$0xff]
        %v3317 = vld [vmem:[#allocation3 + $0x104] sm:$0xf]
        %v3318 = vld [vmem:[#allocation3 + $0x108] sm:$0xff]
        %v3319 = vld [vmem:[#allocation3 + $0x110] sm:$0xf]
        %v3320 = vld [vmem:[#allocation3 + $0x114] sm:$0xff]
        %v3321 = vld [vmem:[#allocation3 + $0x11c] sm:$0xf]
        %v3322 = vld [vmem:[#allocation3 + $0x120] sm:$0xff]
        %v3323 = vld [vmem:[#allocation3 + $0x128] sm:$0xf]
        %v3324 = vld [vmem:[#allocation3 + $0x12c] sm:$0xff]
        %v3325 = vld [vmem:[#allocation3 + $0x134] sm:$0xf]
        %v3326 = vld [vmem:[#allocation3 + $0x138] sm:$0xff]
        %v3327 = vld [vmem:[#allocation3 + $0x140] sm:$0xf]
        %v3328 = vld [vmem:[#allocation3 + $0x144] sm:$0xff]
        %v3329 = vld [vmem:[#allocation3 + $0x14c] sm:$0xf]
        %v3330 = vld [vmem:[#allocation3 + $0x150] sm:$0xff]
        %v3331 = vld [vmem:[#allocation3 + $0x158] sm:$0xf]
        %v3332 = vld [vmem:[#allocation3 + $0x15c] sm:$0xff]
        %v3333 = vld [vmem:[#allocation3 + $0x164] sm:$0xf]
        %v3334 = vld [vmem:[#allocation3 + $0x168] sm:$0xff]
        %v3335 = vld [vmem:[#allocation3 + $0x170] sm:$0xf]
        %v3336 = vld [vmem:[#allocation3 + $0x174] sm:$0xff]
        %v3337 = vld [vmem:[#allocation3 + $0x17c] sm:$0xf]
        %v3338 = vld [vmem:[#allocation3 + $0x180] sm:$0xff]
        %v3339 = vld [vmem:[#allocation3 + $0x188] sm:$0xf]
        %v3340 = vld [vmem:[#allocation3 + $0x18c] sm:$0xff]
        %v3341 = vld [vmem:[#allocation3 + $0x194] sm:$0xf]
        %v3342 = vld [vmem:[#allocation3 + $0x198] sm:$0xff]
        %v3343 = vld [vmem:[#allocation3 + $0x1a0] sm:$0xf]
        %v3344 = vld [vmem:[#allocation3 + $0x1a4] sm:$0xff]
        %v3345 = vld [vmem:[#allocation3 + $0x1ac] sm:$0xf]
        %v3346 = vld [vmem:[#allocation11] sm:$0xf]
        %v3347 = vld [vmem:[#allocation11 + $0x4] sm:$0xf]
        %v3348 = vld [vmem:[#allocation11 + $0x8] sm:$0xf]
        %v3349 = vld [vmem:[#allocation11 + $0xc] sm:$0xf]
        %v3350 = vld [vmem:[%s248 + $0x4] sm:$0xff]
        %v3351 = vld [vmem:[%s248 + $0xc] sm:$0xf]
        %v3352 = vld [vmem:[%s248 + $0x18] sm:$0xff]
        %v3353 = vld [vmem:[%s248 + $0x20] sm:$0xf]
        %v3354 = vld [vmem:[%s248 + $0x2c] sm:$0xff]
        %v3355 = vld [vmem:[%s248 + $0x34] sm:$0xf]
        %v3356 = vld [vmem:[%s248 + $0x40] sm:$0xff]
        %v3357 = vld [vmem:[%s248 + $0x48] sm:$0xf]
        %v3358 = vld [vmem:[%s248 + $0x54] sm:$0xff]
        %v3359 = vld [vmem:[%s248 + $0x5c] sm:$0xf]
        %v3360 = vld [vmem:[%s248 + $0x68] sm:$0xff]
        %v3361 = vld [vmem:[%s248 + $0x70] sm:$0xf]
        %v3362 = vld [vmem:[%s248 + $0x7c] sm:$0xff]
        %v3363 = vld [vmem:[%s248 + $0x84] sm:$0xf]
        %v3364 = vld [vmem:[%s248 + $0x90] sm:$0xff]
        %v3365 = vld [vmem:[%s248 + $0x98] sm:$0xf]
        %v3370 = vunpack.c.l.b16 %v3346
        %v3371 = vunpack.c.l.b16 %v3347
        %v3372 = vunpack.c.l.b16 %v3348
        %v3373 = vunpack.c.l.b16 %v3349
        %v3374 = vpack.c.b16 %v3371, %v3370
        %v3375 = vpack.c.b16 %v3373, %v3372
        %v3392 = vunpack.c.l.b16 %v3350
        %v3393 = vunpack.c.h.b16 %v3350
        %v3394 = vunpack.c.l.b16 %v3351
        %v3395 = vunpack.c.l.b16 %v3352
        %v3396 = vunpack.c.h.b16 %v3352
        %v3397 = vunpack.c.l.b16 %v3353
        %v3398 = vunpack.c.l.b16 %v3354
        %v3399 = vunpack.c.h.b16 %v3354
        %v3400 = vunpack.c.l.b16 %v3355
        %v3401 = vunpack.c.l.b16 %v3356
        %v3402 = vunpack.c.h.b16 %v3356
        %v3403 = vunpack.c.l.b16 %v3357
        %v3404 = vunpack.c.l.b16 %v3358
        %v3405 = vunpack.c.h.b16 %v3358
        %v3406 = vunpack.c.l.b16 %v3359
        %v3407 = vunpack.c.l.b16 %v3360
        %v3408 = vunpack.c.h.b16 %v3360
        %v3409 = vunpack.c.l.b16 %v3361
        %v3410 = vunpack.c.l.b16 %v3362
        %v3411 = vunpack.c.h.b16 %v3362
        %v3412 = vunpack.c.l.b16 %v3363
        %v3413 = vunpack.c.l.b16 %v3364
        %v3414 = vunpack.c.h.b16 %v3364
        %v3415 = vunpack.c.l.b16 %v3365
        %v3416 = vpack.c.b16 %v3395, %v3392
        %v3417 = vpack.c.b16 %v3396, %v3393
        %v3418 = vpack.c.b16 %v3397, %v3394
        %v3419 = vpack.c.b16 %v3401, %v3398
        %v3420 = vpack.c.b16 %v3402, %v3399
        %v3421 = vpack.c.b16 %v3403, %v3400
        %v3422 = vpack.c.b16 %v3407, %v3404
        %v3423 = vpack.c.b16 %v3408, %v3405
        %v3424 = vpack.c.b16 %v3409, %v3406
        %v3425 = vpack.c.b16 %v3413, %v3410
        %v3426 = vpack.c.b16 %v3414, %v3411
        %v3427 = vpack.c.b16 %v3415, %v3412
        %v3441 = vsel %vm2169, %v3374, 0
        %v3444 = vsel %vm2169, %v3375, 0
        %3446 = vmatprep.subr.bf16.mxu0 0
        %3447 = vmatpush1.bf16.msra.mxu0 0
        %3448 = vmatprep.subr.bf16.mxu0 0
        %3449 = vmatpush1.bf16.msra.mxu0 0
        %3450 = vmatprep.subr.bf16.mxu0 0
        %3451 = vmatpush1.bf16.msra.mxu0 0
        %3452 = vmatprep.subr.bf16.mxu0 0
        %3453 = vmatpush1.bf16.msra.mxu0 0
        %3454 = vmatprep.subr.bf16.mxu0 %v3426
        %3455 = vmatpush1.bf16.msra.mxu0 %v3425
        %3456 = vmatprep.subr.bf16.mxu0 %v3423
        %3457 = vmatpush1.bf16.msra.mxu0 %v3422
        %3458 = vmatprep.subr.bf16.mxu0 %v3420
        %3459 = vmatpush1.bf16.msra.mxu0 %v3419
        %3460 = vmatprep.subr.bf16.mxu0 %v3417
        %3461 = vmatpush1.bf16.msra.mxu0 %v3416
        %3462 = vmatprep.subr.bf16.mxu0 0
        %3463 = vmatpush2.bf16.msra.mxu0 0
        %3464 = vmatprep.subr.bf16.mxu0 0
        %3465 = vmatpush2.bf16.msra.mxu0 0
        %3466 = vmatprep.subr.bf16.mxu0 0
        %3467 = vmatpush2.bf16.msra.mxu0 0
        %3468 = vmatprep.subr.bf16.mxu0 0
        %3469 = vmatpush2.bf16.msra.mxu0 0
        %3470 = vmatprep.subr.bf16.mxu0 0
        %3471 = vmatpush2.bf16.msra.mxu0 0
        %3472 = vmatprep.subr.bf16.mxu0 0
        %3473 = vmatpush2.bf16.msra.mxu0 0
        %3474 = vmatprep.subr.bf16.mxu0 0
        %3475 = vmatpush2.bf16.msra.mxu0 0
        %3476 = vmatprep.subr.bf16.mxu0 0
        %3477 = vmatpush2.bf16.msra.mxu0 0
        %3478 = vmatprep.mubr.bf16.mxu0 0
        %3479 = vmatmul.mubr.bf16.gmra.mxu0 %v3441
        %v3480 = vpop.f32.mrf.mxu0
        %v3481 = vadd.f32 0.0, %v3480
        %v3482 = vpop.f32.mrf.mxu0
        %v3483 = vadd.f32 0.0, %v3482
        %v3484 = vpop.f32.mrf.mxu0
        %v3485 = vadd.f32 0.0, %v3484
        %v3486 = vpop.f32.mrf.mxu0
        %v3487 = vadd.f32 0.0, %v3486
        %3488 = vmatprep.mubr.bf16.mxu0 0
        %3489 = vmatmul.mubr.bf16.gmra.mxu0 %v3444
        %v3490 = vpop.f32.mrf.mxu0
        %v3491 = vadd.f32 0.0, %v3490
        %v3492 = vpop.f32.mrf.mxu0
        %v3493 = vadd.f32 0.0, %v3492
        %v3494 = vpop.f32.mrf.mxu0
        %v3495 = vadd.f32 0.0, %v3494
        %v3496 = vpop.f32.mrf.mxu0
        %v3497 = vadd.f32 0.0, %v3496
        %3498 = vdwg.mxu0
        %3499 = vmatprep.subr.bf16.mxu0 0
        %3500 = vmatpush1.bf16.msra.mxu0 0
        %3501 = vmatprep.subr.bf16.mxu0 0
        %3502 = vmatpush1.bf16.msra.mxu0 0
        %3503 = vmatprep.subr.bf16.mxu0 0
        %3504 = vmatpush1.bf16.msra.mxu0 0
        %3505 = vmatprep.subr.bf16.mxu0 0
        %3506 = vmatpush1.bf16.msra.mxu0 0
        %3507 = vmatprep.subr.bf16.mxu0 0
        %3508 = vmatpush1.bf16.msra.mxu0 %v3427
        %3509 = vmatprep.subr.bf16.mxu0 0
        %3510 = vmatpush1.bf16.msra.mxu0 %v3424
        %3511 = vmatprep.subr.bf16.mxu0 0
        %3512 = vmatpush1.bf16.msra.mxu0 %v3421
        %3513 = vmatprep.subr.bf16.mxu0 0
        %3514 = vmatpush1.bf16.msra.mxu0 %v3418
        %3515 = vmatprep.subr.bf16.mxu0 0
        %3516 = vmatpush2.bf16.msra.mxu0 0
        %3517 = vmatprep.subr.bf16.mxu0 0
        %3518 = vmatpush2.bf16.msra.mxu0 0
        %3519 = vmatprep.subr.bf16.mxu0 0
        %3520 = vmatpush2.bf16.msra.mxu0 0
        %3521 = vmatprep.subr.bf16.mxu0 0
        %3522 = vmatpush2.bf16.msra.mxu0 0
        %3523 = vmatprep.subr.bf16.mxu0 0
        %3524 = vmatpush2.bf16.msra.mxu0 0
        %3525 = vmatprep.subr.bf16.mxu0 0
        %3526 = vmatpush2.bf16.msra.mxu0 0
        %3527 = vmatprep.subr.bf16.mxu0 0
        %3528 = vmatpush2.bf16.msra.mxu0 0
        %3529 = vmatprep.subr.bf16.mxu0 0
        %3530 = vmatpush2.bf16.msra.mxu0 0
        %3531 = vmatprep.mubr.bf16.mxu0 0
        %3532 = vmatmul.mubr.bf16.gmra.mxu0 %v3441
        %v3533 = vpop.f32.mrf.mxu0
        %v3534 = vadd.f32 0.0, %v3533
        %v3535 = vpop.f32.mrf.mxu0
        %v3536 = vpop.f32.mrf.mxu0
        %v3537 = vadd.f32 0.0, %v3536
        %v3538 = vpop.f32.mrf.mxu0
        %3539 = vmatprep.mubr.bf16.mxu0 0
        %3540 = vmatmul.mubr.bf16.gmra.mxu0 %v3444
        %v3541 = vpop.f32.mrf.mxu0
        %v3542 = vadd.f32 0.0, %v3541
        %v3543 = vpop.f32.mrf.mxu0
        %v3544 = vpop.f32.mrf.mxu0
        %v3545 = vadd.f32 0.0, %v3544
        %v3546 = vpop.f32.mrf.mxu0
        %3547 = vdwg.mxu0
        %v3556 = vunpack.c.l.b16 %v3266
        %v3557 = vunpack.c.h.b16 %v3266
        %v3558 = vunpack.c.l.b16 %v3267
        %v3559 = vunpack.c.l.b16 %v3268
        %v3560 = vunpack.c.h.b16 %v3268
        %v3561 = vunpack.c.l.b16 %v3269
        %v3562 = vunpack.c.l.b16 %v3270
        %v3563 = vunpack.c.h.b16 %v3270
        %v3564 = vunpack.c.l.b16 %v3271
        %v3565 = vunpack.c.l.b16 %v3272
        %v3566 = vunpack.c.h.b16 %v3272
        %v3567 = vunpack.c.l.b16 %v3273
        %v3568 = vpack.c.b16 %v3559, %v3556
        %v3569 = vpack.c.b16 %v3560, %v3557
        %v3570 = vpack.c.b16 %v3561, %v3558
        %v3571 = vpack.c.b16 %v3565, %v3562
        %v3572 = vpack.c.b16 %v3566, %v3563
        %v3573 = vpack.c.b16 %v3567, %v3564
        %v3650 = vunpack.c.l.b16 %v3274
        %v3651 = vunpack.c.h.b16 %v3274
        %v3652 = vunpack.c.l.b16 %v3275
        %v3653 = vunpack.c.l.b16 %v3276
        %v3654 = vunpack.c.h.b16 %v3276
        %v3655 = vunpack.c.l.b16 %v3277
        %v3656 = vunpack.c.l.b16 %v3278
        %v3657 = vunpack.c.h.b16 %v3278
        %v3658 = vunpack.c.l.b16 %v3279
        %v3659 = vunpack.c.l.b16 %v3280
        %v3660 = vunpack.c.h.b16 %v3280
        %v3661 = vunpack.c.l.b16 %v3281
        %v3662 = vunpack.c.l.b16 %v3282
        %v3663 = vunpack.c.h.b16 %v3282
        %v3664 = vunpack.c.l.b16 %v3283
        %v3665 = vunpack.c.l.b16 %v3284
        %v3666 = vunpack.c.h.b16 %v3284
        %v3667 = vunpack.c.l.b16 %v3285
        %v3668 = vunpack.c.l.b16 %v3286
        %v3669 = vunpack.c.h.b16 %v3286
        %v3670 = vunpack.c.l.b16 %v3287
        %v3671 = vunpack.c.l.b16 %v3288
        %v3672 = vunpack.c.h.b16 %v3288
        %v3673 = vunpack.c.l.b16 %v3289
        %v3674 = vunpack.c.l.b16 %v3290
        %v3675 = vunpack.c.h.b16 %v3290
        %v3676 = vunpack.c.l.b16 %v3291
        %v3677 = vunpack.c.l.b16 %v3292
        %v3678 = vunpack.c.h.b16 %v3292
        %v3679 = vunpack.c.l.b16 %v3293
        %v3680 = vunpack.c.l.b16 %v3294
        %v3681 = vunpack.c.h.b16 %v3294
        %v3682 = vunpack.c.l.b16 %v3295
        %v3683 = vunpack.c.l.b16 %v3296
        %v3684 = vunpack.c.h.b16 %v3296
        %v3685 = vunpack.c.l.b16 %v3297
        %v3686 = vunpack.c.l.b16 %v3298
        %v3687 = vunpack.c.h.b16 %v3298
        %v3688 = vunpack.c.l.b16 %v3299
        %v3689 = vunpack.c.l.b16 %v3300
        %v3690 = vunpack.c.h.b16 %v3300
        %v3691 = vunpack.c.l.b16 %v3301
        %v3692 = vunpack.c.l.b16 %v3302
        %v3693 = vunpack.c.h.b16 %v3302
        %v3694 = vunpack.c.l.b16 %v3303
        %v3695 = vunpack.c.l.b16 %v3304
        %v3696 = vunpack.c.h.b16 %v3304
        %v3697 = vunpack.c.l.b16 %v3305
        %v3698 = vunpack.c.l.b16 %v3306
        %v3699 = vunpack.c.h.b16 %v3306
        %v3700 = vunpack.c.l.b16 %v3307
        %v3701 = vunpack.c.l.b16 %v3308
        %v3702 = vunpack.c.h.b16 %v3308
        %v3703 = vunpack.c.l.b16 %v3309
        %v3704 = vunpack.c.l.b16 %v3310
        %v3705 = vunpack.c.h.b16 %v3310
        %v3706 = vunpack.c.l.b16 %v3311
        %v3707 = vunpack.c.l.b16 %v3312
        %v3708 = vunpack.c.h.b16 %v3312
        %v3709 = vunpack.c.l.b16 %v3313
        %v3710 = vunpack.c.l.b16 %v3314
        %v3711 = vunpack.c.h.b16 %v3314
        %v3712 = vunpack.c.l.b16 %v3315
        %v3713 = vunpack.c.l.b16 %v3316
        %v3714 = vunpack.c.h.b16 %v3316
        %v3715 = vunpack.c.l.b16 %v3317
        %v3716 = vunpack.c.l.b16 %v3318
        %v3717 = vunpack.c.h.b16 %v3318
        %v3718 = vunpack.c.l.b16 %v3319
        %v3719 = vunpack.c.l.b16 %v3320
        %v3720 = vunpack.c.h.b16 %v3320
        %v3721 = vunpack.c.l.b16 %v3321
        %v3722 = vunpack.c.l.b16 %v3322
        %v3723 = vunpack.c.h.b16 %v3322
        %v3724 = vunpack.c.l.b16 %v3323
        %v3725 = vunpack.c.l.b16 %v3324
        %v3726 = vunpack.c.h.b16 %v3324
        %v3727 = vunpack.c.l.b16 %v3325
        %v3728 = vunpack.c.l.b16 %v3326
        %v3729 = vunpack.c.h.b16 %v3326
        %v3730 = vunpack.c.l.b16 %v3327
        %v3731 = vunpack.c.l.b16 %v3328
        %v3732 = vunpack.c.h.b16 %v3328
        %v3733 = vunpack.c.l.b16 %v3329
        %v3734 = vunpack.c.l.b16 %v3330
        %v3735 = vunpack.c.h.b16 %v3330
        %v3736 = vunpack.c.l.b16 %v3331
        %v3737 = vunpack.c.l.b16 %v3332
        %v3738 = vunpack.c.h.b16 %v3332
        %v3739 = vunpack.c.l.b16 %v3333
        %v3740 = vunpack.c.l.b16 %v3334
        %v3741 = vunpack.c.h.b16 %v3334
        %v3742 = vunpack.c.l.b16 %v3335
        %v3743 = vunpack.c.l.b16 %v3336
        %v3744 = vunpack.c.h.b16 %v3336
        %v3745 = vunpack.c.l.b16 %v3337
        %v3746 = vunpack.c.l.b16 %v3338
        %v3747 = vunpack.c.h.b16 %v3338
        %v3748 = vunpack.c.l.b16 %v3339
        %v3749 = vunpack.c.l.b16 %v3340
        %v3750 = vunpack.c.h.b16 %v3340
        %v3751 = vunpack.c.l.b16 %v3341
        %v3752 = vunpack.c.l.b16 %v3342
        %v3753 = vunpack.c.h.b16 %v3342
        %v3754 = vunpack.c.l.b16 %v3343
        %v3755 = vunpack.c.l.b16 %v3344
        %v3756 = vunpack.c.h.b16 %v3344
        %v3757 = vunpack.c.l.b16 %v3345
        %v3758 = vpack.c.b16 %v3653, %v3650
        %v3759 = vpack.c.b16 %v3654, %v3651
        %v3760 = vpack.c.b16 %v3655, %v3652
        %v3761 = vpack.c.b16 %v3659, %v3656
        %v3762 = vpack.c.b16 %v3660, %v3657
        %v3763 = vpack.c.b16 %v3661, %v3658
        %v3764 = vpack.c.b16 %v3665, %v3662
        %v3765 = vpack.c.b16 %v3666, %v3663
        %v3766 = vpack.c.b16 %v3667, %v3664
        %v3767 = vpack.c.b16 %v3671, %v3668
        %v3768 = vpack.c.b16 %v3672, %v3669
        %v3769 = vpack.c.b16 %v3673, %v3670
        %v3770 = vpack.c.b16 %v3677, %v3674
        %v3771 = vpack.c.b16 %v3678, %v3675
        %v3772 = vpack.c.b16 %v3679, %v3676
        %v3773 = vpack.c.b16 %v3683, %v3680
        %v3774 = vpack.c.b16 %v3684, %v3681
        %v3775 = vpack.c.b16 %v3685, %v3682
        %v3776 = vpack.c.b16 %v3689, %v3686
        %v3777 = vpack.c.b16 %v3690, %v3687
        %v3778 = vpack.c.b16 %v3691, %v3688
        %v3779 = vpack.c.b16 %v3695, %v3692
        %v3780 = vpack.c.b16 %v3696, %v3693
        %v3781 = vpack.c.b16 %v3697, %v3694
        %v3782 = vpack.c.b16 %v3701, %v3698
        %v3783 = vpack.c.b16 %v3702, %v3699
        %v3784 = vpack.c.b16 %v3703, %v3700
        %v3785 = vpack.c.b16 %v3707, %v3704
        %v3786 = vpack.c.b16 %v3708, %v3705
        %v3787 = vpack.c.b16 %v3709, %v3706
        %v3788 = vpack.c.b16 %v3713, %v3710
        %v3789 = vpack.c.b16 %v3714, %v3711
        %v3790 = vpack.c.b16 %v3715, %v3712
        %v3791 = vpack.c.b16 %v3719, %v3716
        %v3792 = vpack.c.b16 %v3720, %v3717
        %v3793 = vpack.c.b16 %v3721, %v3718
        %v3794 = vpack.c.b16 %v3725, %v3722
        %v3795 = vpack.c.b16 %v3726, %v3723
        %v3796 = vpack.c.b16 %v3727, %v3724
        %v3797 = vpack.c.b16 %v3731, %v3728
        %v3798 = vpack.c.b16 %v3732, %v3729
        %v3799 = vpack.c.b16 %v3733, %v3730
        %v3800 = vpack.c.b16 %v3737, %v3734
        %v3801 = vpack.c.b16 %v3738, %v3735
        %v3802 = vpack.c.b16 %v3739, %v3736
        %v3803 = vpack.c.b16 %v3743, %v3740
        %v3804 = vpack.c.b16 %v3744, %v3741
        %v3805 = vpack.c.b16 %v3745, %v3742
        %v3806 = vpack.c.b16 %v3749, %v3746
        %v3807 = vpack.c.b16 %v3750, %v3747
        %v3808 = vpack.c.b16 %v3751, %v3748
        %v3809 = vpack.c.b16 %v3755, %v3752
        %v3810 = vpack.c.b16 %v3756, %v3753
        %v3811 = vpack.c.b16 %v3757, %v3754
        %vm3866 = vcmask 261120
        %v3868 = vsel %vm3866, %v3570, 0
        %v3871 = vsel %vm3866, %v3573, 0
        %3873 = vmatprep.subr.bf16.mxu0 %v3780
        %3874 = vmatpush1.bf16.msra.mxu0 %v3779
        %3875 = vmatprep.subr.bf16.mxu0 %v3777
        %3876 = vmatpush1.bf16.msra.mxu0 %v3776
        %3877 = vmatprep.subr.bf16.mxu0 %v3774
        %3878 = vmatpush1.bf16.msra.mxu0 %v3773
        %3879 = vmatprep.subr.bf16.mxu0 %v3771
        %3880 = vmatpush1.bf16.msra.mxu0 %v3770
        %3881 = vmatprep.subr.bf16.mxu0 %v3768
        %3882 = vmatpush1.bf16.msra.mxu0 %v3767
        %3883 = vmatprep.subr.bf16.mxu0 %v3765
        %3884 = vmatpush1.bf16.msra.mxu0 %v3764
        %3885 = vmatprep.subr.bf16.mxu0 %v3762
        %3886 = vmatpush1.bf16.msra.mxu0 %v3761
        %3887 = vmatprep.subr.bf16.mxu0 %v3759
        %3888 = vmatpush1.bf16.msra.mxu0 %v3758
        %3889 = vmatprep.subr.bf16.mxu0 %v3804
        %3890 = vmatpush2.bf16.msra.mxu0 %v3803
        %3891 = vmatprep.subr.bf16.mxu0 %v3801
        %3892 = vmatpush2.bf16.msra.mxu0 %v3800
        %3893 = vmatprep.subr.bf16.mxu0 %v3798
        %3894 = vmatpush2.bf16.msra.mxu0 %v3797
        %3895 = vmatprep.subr.bf16.mxu0 %v3795
        %3896 = vmatpush2.bf16.msra.mxu0 %v3794
        %3897 = vmatprep.subr.bf16.mxu0 %v3792
        %3898 = vmatpush2.bf16.msra.mxu0 %v3791
        %3899 = vmatprep.subr.bf16.mxu0 %v3789
        %3900 = vmatpush2.bf16.msra.mxu0 %v3788
        %3901 = vmatprep.subr.bf16.mxu0 %v3786
        %3902 = vmatpush2.bf16.msra.mxu0 %v3785
        %3903 = vmatprep.subr.bf16.mxu0 %v3783
        %3904 = vmatpush2.bf16.msra.mxu0 %v3782
        %3905 = vmatprep.mubr.bf16.mxu0 %v3569
        %3906 = vmatmul.mubr.bf16.gmra.mxu0 %v3568
        %v3907 = vpop.f32.mrf.mxu0
        %v3908 = vadd.f32 %v3481, %v3907
        %v3909 = vpop.f32.mrf.mxu0
        %v3910 = vadd.f32 %v3483, %v3909
        %v3911 = vpop.f32.mrf.mxu0
        %v3912 = vadd.f32 %v3485, %v3911
        %v3913 = vpop.f32.mrf.mxu0
        %v3914 = vadd.f32 %v3487, %v3913
        %3915 = vmatprep.mubr.bf16.mxu0 %v3572
        %3916 = vmatmul.mubr.bf16.gmra.mxu0 %v3571
        %v3917 = vpop.f32.mrf.mxu0
        %v3918 = vadd.f32 %v3491, %v3917
        %v3919 = vpop.f32.mrf.mxu0
        %v3920 = vadd.f32 %v3493, %v3919
        %v3921 = vpop.f32.mrf.mxu0
        %v3922 = vadd.f32 %v3495, %v3921
        %v3923 = vpop.f32.mrf.mxu0
        %v3924 = vadd.f32 %v3497, %v3923
        %3925 = vdwg.mxu0
        %3926 = vmatprep.subr.bf16.mxu0 0
        %3927 = vmatpush1.bf16.msra.mxu0 0
        %3928 = vmatprep.subr.bf16.mxu0 0
        %3929 = vmatpush1.bf16.msra.mxu0 0
        %3930 = vmatprep.subr.bf16.mxu0 0
        %3931 = vmatpush1.bf16.msra.mxu0 0
        %3932 = vmatprep.subr.bf16.mxu0 0
        %3933 = vmatpush1.bf16.msra.mxu0 0
        %3934 = vmatprep.subr.bf16.mxu0 0
        %3935 = vmatpush1.bf16.msra.mxu0 0
        %3936 = vmatprep.subr.bf16.mxu0 0
        %3937 = vmatpush1.bf16.msra.mxu0 0
        %3938 = vmatprep.subr.bf16.mxu0 %v3810
        %3939 = vmatpush1.bf16.msra.mxu0 %v3809
        %3940 = vmatprep.subr.bf16.mxu0 %v3807
        %3941 = vmatpush1.bf16.msra.mxu0 %v3806
        %3942 = vmatprep.subr.bf16.mxu0 0
        %3943 = vmatpush2.bf16.msra.mxu0 0
        %3944 = vmatprep.subr.bf16.mxu0 0
        %3945 = vmatpush2.bf16.msra.mxu0 0
        %3946 = vmatprep.subr.bf16.mxu0 0
        %3947 = vmatpush2.bf16.msra.mxu0 0
        %3948 = vmatprep.subr.bf16.mxu0 0
        %3949 = vmatpush2.bf16.msra.mxu0 0
        %3950 = vmatprep.subr.bf16.mxu0 0
        %3951 = vmatpush2.bf16.msra.mxu0 0
        %3952 = vmatprep.subr.bf16.mxu0 0
        %3953 = vmatpush2.bf16.msra.mxu0 0
        %3954 = vmatprep.subr.bf16.mxu0 0
        %3955 = vmatpush2.bf16.msra.mxu0 0
        %3956 = vmatprep.subr.bf16.mxu0 0
        %3957 = vmatpush2.bf16.msra.mxu0 0
        %3958 = vmatprep.mubr.bf16.mxu0 0
        %3959 = vmatmul.mubr.bf16.gmra.mxu0 %v3868
        %v3960 = vpop.f32.mrf.mxu0
        %v3961 = vadd.f32 %v3908, %v3960
        %v3962 = vpop.f32.mrf.mxu0
        %v3963 = vadd.f32 %v3910, %v3962
        %v3964 = vpop.f32.mrf.mxu0
        %v3965 = vadd.f32 %v3912, %v3964
        %v3966 = vpop.f32.mrf.mxu0
        %v3967 = vadd.f32 %v3914, %v3966
        %3968 = vmatprep.mubr.bf16.mxu0 0
        %3969 = vmatmul.mubr.bf16.gmra.mxu0 %v3871
        %v3970 = vpop.f32.mrf.mxu0
        %v3971 = vadd.f32 %v3918, %v3970
        %v3972 = vpop.f32.mrf.mxu0
        %v3973 = vadd.f32 %v3920, %v3972
        %v3974 = vpop.f32.mrf.mxu0
        %v3975 = vadd.f32 %v3922, %v3974
        %v3976 = vpop.f32.mrf.mxu0
        %v3977 = vadd.f32 %v3924, %v3976
        %3978 = vdwg.mxu0
        %3979 = vmatprep.subr.bf16.mxu0 0
        %3980 = vmatpush1.bf16.msra.mxu0 %v3781
        %3981 = vmatprep.subr.bf16.mxu0 0
        %3982 = vmatpush1.bf16.msra.mxu0 %v3778
        %3983 = vmatprep.subr.bf16.mxu0 0
        %3984 = vmatpush1.bf16.msra.mxu0 %v3775
        %3985 = vmatprep.subr.bf16.mxu0 0
        %3986 = vmatpush1.bf16.msra.mxu0 %v3772
        %3987 = vmatprep.subr.bf16.mxu0 0
        %3988 = vmatpush1.bf16.msra.mxu0 %v3769
        %3989 = vmatprep.subr.bf16.mxu0 0
        %3990 = vmatpush1.bf16.msra.mxu0 %v3766
        %3991 = vmatprep.subr.bf16.mxu0 0
        %3992 = vmatpush1.bf16.msra.mxu0 %v3763
        %3993 = vmatprep.subr.bf16.mxu0 0
        %3994 = vmatpush1.bf16.msra.mxu0 %v3760
        %3995 = vmatprep.subr.bf16.mxu0 0
        %3996 = vmatpush2.bf16.msra.mxu0 %v3805
        %3997 = vmatprep.subr.bf16.mxu0 0
        %3998 = vmatpush2.bf16.msra.mxu0 %v3802
        %3999 = vmatprep.subr.bf16.mxu0 0
        %4000 = vmatpush2.bf16.msra.mxu0 %v3799
        %4001 = vmatprep.subr.bf16.mxu0 0
        %4002 = vmatpush2.bf16.msra.mxu0 %v3796
        %4003 = vmatprep.subr.bf16.mxu0 0
        %4004 = vmatpush2.bf16.msra.mxu0 %v3793
        %4005 = vmatprep.subr.bf16.mxu0 0
        %4006 = vmatpush2.bf16.msra.mxu0 %v3790
        %4007 = vmatprep.subr.bf16.mxu0 0
        %4008 = vmatpush2.bf16.msra.mxu0 %v3787
        %4009 = vmatprep.subr.bf16.mxu0 0
        %4010 = vmatpush2.bf16.msra.mxu0 %v3784
        %4011 = vmatprep.mubr.bf16.mxu0 %v3569
        %4012 = vmatmul.mubr.bf16.gmra.mxu0 %v3568
        %v4013 = vpop.f32.mrf.mxu0
        %v4014 = vadd.f32 %v3534, %v4013
        %v4015 = vpop.f32.mrf.mxu0
        %v4016 = vpop.f32.mrf.mxu0
        %v4017 = vadd.f32 %v3537, %v4016
        %v4018 = vpop.f32.mrf.mxu0
        %4019 = vmatprep.mubr.bf16.mxu0 %v3572
        %4020 = vmatmul.mubr.bf16.gmra.mxu0 %v3571
        %v4021 = vpop.f32.mrf.mxu0
        %v4022 = vadd.f32 %v3542, %v4021
        %v4023 = vpop.f32.mrf.mxu0
        %v4024 = vpop.f32.mrf.mxu0
        %v4025 = vadd.f32 %v3545, %v4024
        %v4026 = vpop.f32.mrf.mxu0
        %4027 = vdwg.mxu0
        %4028 = vmatprep.subr.bf16.mxu0 0
        %4029 = vmatpush1.bf16.msra.mxu0 0
        %4030 = vmatprep.subr.bf16.mxu0 0
        %4031 = vmatpush1.bf16.msra.mxu0 0
        %4032 = vmatprep.subr.bf16.mxu0 0
        %4033 = vmatpush1.bf16.msra.mxu0 0
        %4034 = vmatprep.subr.bf16.mxu0 0
        %4035 = vmatpush1.bf16.msra.mxu0 0
        %4036 = vmatprep.subr.bf16.mxu0 0
        %4037 = vmatpush1.bf16.msra.mxu0 0
        %4038 = vmatprep.subr.bf16.mxu0 0
        %4039 = vmatpush1.bf16.msra.mxu0 0
        %4040 = vmatprep.subr.bf16.mxu0 0
        %4041 = vmatpush1.bf16.msra.mxu0 %v3811
        %4042 = vmatprep.subr.bf16.mxu0 0
        %4043 = vmatpush1.bf16.msra.mxu0 %v3808
        %4044 = vmatprep.subr.bf16.mxu0 0
        %4045 = vmatpush2.bf16.msra.mxu0 0
        %4046 = vmatprep.subr.bf16.mxu0 0
        %4047 = vmatpush2.bf16.msra.mxu0 0
        %4048 = vmatprep.subr.bf16.mxu0 0
        %4049 = vmatpush2.bf16.msra.mxu0 0
        %4050 = vmatprep.subr.bf16.mxu0 0
        %4051 = vmatpush2.bf16.msra.mxu0 0
        %4052 = vmatprep.subr.bf16.mxu0 0
        %4053 = vmatpush2.bf16.msra.mxu0 0
        %4054 = vmatprep.subr.bf16.mxu0 0
        %4055 = vmatpush2.bf16.msra.mxu0 0
        %4056 = vmatprep.subr.bf16.mxu0 0
        %4057 = vmatpush2.bf16.msra.mxu0 0
        %4058 = vmatprep.subr.bf16.mxu0 0
        %4059 = vmatpush2.bf16.msra.mxu0 0
        %4060 = vmatprep.mubr.bf16.mxu0 0
        %4061 = vmatmul.mubr.bf16.gmra.mxu0 %v3868
        %v4062 = vpop.f32.mrf.mxu0
        %v4063 = vadd.f32 %v4014, %v4062
        %v4064 = vpop.f32.mrf.mxu0
        %v4065 = vpop.f32.mrf.mxu0
        %v4066 = vadd.f32 %v4017, %v4065
        %v4067 = vpop.f32.mrf.mxu0
        %4068 = vmatprep.mubr.bf16.mxu0 0
        %4069 = vmatmul.mubr.bf16.gmra.mxu0 %v3871
        %v4070 = vpop.f32.mrf.mxu0
        %v4071 = vadd.f32 %v4022, %v4070
        %v4072 = vpop.f32.mrf.mxu0
        %v4073 = vpop.f32.mrf.mxu0
        %v4074 = vadd.f32 %v4025, %v4073
        %v4075 = vpop.f32.mrf.mxu0
        %4076 = vdwg.mxu0
        %v4077 = vmul.f32 %v3961, %v2486
        %v4078 = vmul.f32 %v3963, %v2490
        %v4079 = vmul.f32 %v4063, %v2494
        %v4080 = vmul.f32 %v3965, %v2486
        %v4081 = vmul.f32 %v3967, %v2490
        %v4082 = vmul.f32 %v4066, %v2494
        %v4083 = vmul.f32 %v3971, %v2486
        %v4084 = vmul.f32 %v3973, %v2490
        %v4085 = vmul.f32 %v4071, %v2494
        %v4086 = vmul.f32 %v3975, %v2486
        %v4087 = vmul.f32 %v3977, %v2490
        %v4088 = vmul.f32 %v4074, %v2494
        %v4089 = vadd.f32 %v4077, %v4078
        %v4090 = vsel %vm2511, %v4079, 0.0
        %v4091 = vadd.f32 %v4089, %v4090
        %4092 = vadd.xlane.f32.xlu0 %v4091
        %v4093 = vpop.xlane.xlu0 %4092
        %v4094 = vadd.f32 %v4080, %v4081
        %v4095 = vsel %vm2511, %v4082, 0.0
        %v4096 = vadd.f32 %v4094, %v4095
        %4097 = vadd.xlane.f32.xlu0 %v4096
        %v4098 = vpop.xlane.xlu0 %4097
        %v4099 = vadd.f32 %v4083, %v4084
        %v4100 = vsel %vm2511, %v4085, 0.0
        %v4101 = vadd.f32 %v4099, %v4100
        %4102 = vadd.xlane.f32.xlu0 %v4101
        %v4103 = vpop.xlane.xlu0 %4102
        %v4104 = vadd.f32 %v4086, %v4087
        %v4105 = vsel %vm2511, %v4088, 0.0
        %v4106 = vadd.f32 %v4104, %v4105
        %4107 = vadd.xlane.f32.xlu0 %v4106
        %v4108 = vpop.xlane.xlu0 %4107
        %v4109 = vmul.f32 %v4077, %v4077
        %v4110 = vmul.f32 %v4078, %v4078
        %v4111 = vmul.f32 %v4079, %v4079
        %v4112 = vmul.f32 %v4080, %v4080
        %v4113 = vmul.f32 %v4081, %v4081
        %v4114 = vmul.f32 %v4082, %v4082
        %v4115 = vmul.f32 %v4083, %v4083
        %v4116 = vmul.f32 %v4084, %v4084
        %v4117 = vmul.f32 %v4085, %v4085
        %v4118 = vmul.f32 %v4086, %v4086
        %v4119 = vmul.f32 %v4087, %v4087
        %v4120 = vmul.f32 %v4088, %v4088
        %v4121 = vadd.f32 %v4109, %v4110
        %v4122 = vsel %vm2511, %v4111, 0.0
        %v4123 = vadd.f32 %v4121, %v4122
        %4124 = vadd.xlane.f32.xlu0 %v4123
        %v4125 = vpop.xlane.xlu0 %4124
        %v4126 = vadd.f32 %v4112, %v4113
        %v4127 = vsel %vm2511, %v4114, 0.0
        %v4128 = vadd.f32 %v4126, %v4127
        %4129 = vadd.xlane.f32.xlu0 %v4128
        %v4130 = vpop.xlane.xlu0 %4129
        %v4131 = vadd.f32 %v4115, %v4116
        %v4132 = vsel %vm2511, %v4117, 0.0
        %v4133 = vadd.f32 %v4131, %v4132
        %4134 = vadd.xlane.f32.xlu0 %v4133
        %v4135 = vpop.xlane.xlu0 %4134
        %v4136 = vadd.f32 %v4118, %v4119
        %v4137 = vsel %vm2511, %v4120, 0.0
        %v4138 = vadd.f32 %v4136, %v4137
        %4139 = vadd.xlane.f32.xlu0 %v4138
        %v4140 = vpop.xlane.xlu0 %4139
        %v4141 = vmul.f32 %v4093, 0.00390625
        %v4142 = vmul.f32 %v4098, 0.00390625
        %v4143 = vmul.f32 %v4103, 0.00390625
        %v4144 = vmul.f32 %v4108, 0.00390625
        %v4145 = vmul.f32 %v4125, 0.00390625
        %v4146 = vmul.f32 %v4130, 0.00390625
        %v4147 = vmul.f32 %v4135, 0.00390625
        %v4148 = vmul.f32 %v4140, 0.00390625
        %v4149 = vmul.f32 %v4141, %v4141
        %v4150 = vmul.f32 %v4142, %v4142
        %v4151 = vmul.f32 %v4143, %v4143
        %v4152 = vmul.f32 %v4144, %v4144
        %v4153 = vsub.f32 %v4145, %v4149
        %v4154 = vsub.f32 %v4146, %v4150
        %v4155 = vsub.f32 %v4147, %v4151
        %v4156 = vsub.f32 %v4148, %v4152
        %v4157 = vmax.f32 %v4153, 0.0
        %v4158 = vmax.f32 %v4154, 0.0
        %v4159 = vmax.f32 %v4155, 0.0
        %v4160 = vmax.f32 %v4156, 0.0
        %v4161 = vsub.f32 %v4077, %v4141
        %v4162 = vsub.f32 %v4078, %v4141
        %v4163 = vsub.f32 %v4079, %v4141
        %v4164 = vsub.f32 %v4080, %v4142
        %v4165 = vsub.f32 %v4081, %v4142
        %v4166 = vsub.f32 %v4082, %v4142
        %v4167 = vsub.f32 %v4083, %v4143
        %v4168 = vsub.f32 %v4084, %v4143
        %v4169 = vsub.f32 %v4085, %v4143
        %v4170 = vsub.f32 %v4086, %v4144
        %v4171 = vsub.f32 %v4087, %v4144
        %v4172 = vsub.f32 %v4088, %v4144
        %v4173 = vadd.f32 %v4157, 0.001
        %v4174 = vadd.f32 %v4158, 0.001
        %v4175 = vadd.f32 %v4159, 0.001
        %v4176 = vadd.f32 %v4160, 0.001
        %v4177 = vrsqrt.pop %v4173
        %v4178 = vrsqrt.pop %v4174
        %v4179 = vrsqrt.pop %v4175
        %v4180 = vrsqrt.pop %v4176
        %v4181 = vmul.f32 %v4161, %v4177
        %v4182 = vmul.f32 %v4162, %v4177
        %v4183 = vmul.f32 %v4163, %v4177
        %v4184 = vmul.f32 %v4164, %v4178
        %v4185 = vmul.f32 %v4165, %v4178
        %v4186 = vmul.f32 %v4166, %v4178
        %v4187 = vmul.f32 %v4167, %v4179
        %v4188 = vmul.f32 %v4168, %v4179
        %v4189 = vmul.f32 %v4169, %v4179
        %v4190 = vmul.f32 %v4170, %v4180
        %v4191 = vmul.f32 %v4171, %v4180
        %v4192 = vmul.f32 %v4172, %v4180
        %vm4193 = vcmp.gt.f32.partialorder %v4181, 0.0
        %vm4194 = vcmp.gt.f32.partialorder %v4182, 0.0
        %vm4195 = vcmp.gt.f32.partialorder %v4183, 0.0
        %vm4196 = vcmp.gt.f32.partialorder %v4184, 0.0
        %vm4197 = vcmp.gt.f32.partialorder %v4185, 0.0
        %vm4198 = vcmp.gt.f32.partialorder %v4186, 0.0
        %vm4199 = vcmp.gt.f32.partialorder %v4187, 0.0
        %vm4200 = vcmp.gt.f32.partialorder %v4188, 0.0
        %vm4201 = vcmp.gt.f32.partialorder %v4189, 0.0
        %vm4202 = vcmp.gt.f32.partialorder %v4190, 0.0
        %vm4203 = vcmp.gt.f32.partialorder %v4191, 0.0
        %vm4204 = vcmp.gt.f32.partialorder %v4192, 0.0
        %v4205 = vmul.f32 %v4181, 0.2
        %v4206 = vmul.f32 %v4182, 0.2
        %v4207 = vmul.f32 %v4183, 0.2
        %v4208 = vmul.f32 %v4184, 0.2
        %v4209 = vmul.f32 %v4185, 0.2
        %v4210 = vmul.f32 %v4186, 0.2
        %v4211 = vmul.f32 %v4187, 0.2
        %v4212 = vmul.f32 %v4188, 0.2
        %v4213 = vmul.f32 %v4189, 0.2
        %v4214 = vmul.f32 %v4190, 0.2
        %v4215 = vmul.f32 %v4191, 0.2
        %v4216 = vmul.f32 %v4192, 0.2
        %v4217 = vsel %vm4193, %v4181, %v4205
        %v4218 = vsel %vm4194, %v4182, %v4206
        %v4219 = vsel %vm4195, %v4183, %v4207
        %v4220 = vsel %vm4196, %v4184, %v4208
        %v4221 = vsel %vm4197, %v4185, %v4209
        %v4222 = vsel %vm4198, %v4186, %v4210
        %v4223 = vsel %vm4199, %v4187, %v4211
        %v4224 = vsel %vm4200, %v4188, %v4212
        %v4225 = vsel %vm4201, %v4189, %v4213
        %v4226 = vsel %vm4202, %v4190, %v4214
        %v4227 = vsel %vm4203, %v4191, %v4215
        %v4228 = vsel %vm4204, %v4192, %v4216
        %v4229 = vmul.f32 %v4217, %v2486
        %v4230 = vmul.f32 %v4218, %v2490
        %v4231 = vmul.f32 %v4219, %v2494
        %v4232 = vmul.f32 %v4220, %v2486
        %v4233 = vmul.f32 %v4221, %v2490
        %v4234 = vmul.f32 %v4222, %v2494
        %v4235 = vmul.f32 %v4223, %v2486
        %v4236 = vmul.f32 %v4224, %v2490
        %v4237 = vmul.f32 %v4225, %v2494
        %v4238 = vmul.f32 %v4226, %v2486
        %v4239 = vmul.f32 %v4227, %v2490
        %v4240 = vmul.f32 %v4228, %v2494
        %4241 = vst [vmem:[%s286] sm:$0xf] 0
        %4242 = vst [vmem:[%s286 + $0x14] sm:$0xf] 0
        %4243 = vst [vmem:[%s286 + $0x28] sm:$0xf] 0
        %4244 = vst [vmem:[%s286 + $0x3c] sm:$0xf] 0
        %4245 = vst.msk [vmem:[%s286 + $0xc] sm:$0xff] %vm2669, 0
        %4246 = vst.msk [vmem:[%s286 + $0x20] sm:$0xff] %vm2669, 0
        %4247 = vst.msk [vmem:[%s286 + $0x34] sm:$0xff] %vm2669, 0
        %4248 = vst.msk [vmem:[%s286 + $0x48] sm:$0xff] %vm2669, 0
        %v4249 = vpack.c.bf16 %v4232, %v4229
        %v4250 = vpack.c.bf16 %v4233, %v4230
        %v4251 = vpack.c.bf16 %v4234, %v4231
        %v4252 = vpack.c.bf16 %v4238, %v4235
        %v4253 = vpack.c.bf16 %v4239, %v4236
        %v4254 = vpack.c.bf16 %v4240, %v4237
        %v4261 = vunpack.c.l.b16 %v4249
        %v4262 = vunpack.c.l.b16 %v4250
        %v4263 = vunpack.c.l.b16 %v4251
        %v4264 = vunpack.c.h.b16 %v4249
        %v4265 = vunpack.c.h.b16 %v4250
        %v4266 = vunpack.c.h.b16 %v4251
        %v4267 = vunpack.c.l.b16 %v4252
        %v4268 = vunpack.c.l.b16 %v4253
        %v4269 = vunpack.c.l.b16 %v4254
        %v4270 = vunpack.c.h.b16 %v4252
        %v4271 = vunpack.c.h.b16 %v4253
        %v4272 = vunpack.c.h.b16 %v4254
        %v4273 = vpack.c.b16 %v4262, %v4261
        %v4274 = vpack.c.b16 %v4263, %v4263
        %v4275 = vpack.c.b16 %v4265, %v4264
        %v4276 = vpack.c.b16 %v4266, %v4266
        %v4277 = vpack.c.b16 %v4268, %v4267
        %v4278 = vpack.c.b16 %v4269, %v4269
        %v4279 = vpack.c.b16 %v4271, %v4270
        %v4280 = vpack.c.b16 %v4272, %v4272
        %4289 = vst [vmem:[%s286 + $0x4] sm:$0xff] %v4273
        %4290 = vst.msk [vmem:[%s286 + $0xc] sm:$0xf] %vm412, %v4274
        %4291 = vst [vmem:[%s286 + $0x18] sm:$0xff] %v4275
        %4292 = vst.msk [vmem:[%s286 + $0x20] sm:$0xf] %vm412, %v4276
        %4293 = vst [vmem:[%s286 + $0x2c] sm:$0xff] %v4277
        %4294 = vst.msk [vmem:[%s286 + $0x34] sm:$0xf] %vm412, %v4278
        %4295 = vst [vmem:[%s286 + $0x40] sm:$0xff] %v4279
        %4296 = vst.msk [vmem:[%s286 + $0x48] sm:$0xf] %vm412, %v4280
        %s4297 = sand.u32 %s142, 1
        %s4298 = scalar_lea.sflag [#allocation7], %s4297
        %s4299 = sand.u32 %s142, 1
        %s4300 = smul.addr %s4299, 80
        %s4301 = scalar_lea.vmem [#allocation13], %s4300
        // Predicated region
        $region57: #{tpu_custom_call.1} parent=39 // pred_check
          %p4302 = pneg %p152
        $region58: #{tpu_custom_call.1} parent=39 // pred_check_branch
          %4304 = sbr.rel (%p4302) target = $region60
        $region59: #{tpu_custom_call.1} parent=39 // pred_region
          %s4306 = ssub.s32 1280, 1280
          %4307 = vsyncadd %s4298, %s4306
          %s4308 = smul.addr %s24, 20
          %s4309 = smul.addr %s4308, 64
          %s4310 = scalar_lea.hbm %s5, %s4309
          %s4311 = sshll.u32 %s4301, 4
          %s4312 = int_to_ptr.vmem [resolvable:$true] %s4311
          %4317 = dma.vmem_to_hbm [thread:$0]  %s4312, 1280, %s4310, %s4298, 320, 320, 20
        $region60: #{tpu_custom_call.1} parent=39 // pred_fallthru
          _
      $region40: #{tpu_custom_call.1} parent=5 // pred_fallthru
        _
      %p4318 = scmp.le.s32.totalorder 2, %s19
      // Predicated region
      $region61: #{tpu_custom_call.1} parent=5 // pred_check
        %p4319 = pneg %p4318
      $region62: #{tpu_custom_call.1} parent=5 // pred_check_branch
        %4321 = sbr.rel (%p4319) target = $region64
      $region63: #{tpu_custom_call.1} parent=5 // pred_region
        %s4322 = ssub.s32 %s19, 2
        // Predicated region
        $region65: #{tpu_custom_call.1} parent=63 // pred_check
          %p4323 = pneg %p158
        $region66: #{tpu_custom_call.1} parent=63 // pred_check_branch
          %4325 = sbr.rel (%p4323) target = $region68
        $region67: #{tpu_custom_call.1} parent=63 // pred_region
          %s4326 = sand.u32 %s143, 1
          %s4327 = scalar_lea.sflag [#allocation7], %s4326
          %s4328 = sand.u32 %s143, 1
          %s4329 = smul.addr %s4328, 80
          %s4330 = scalar_lea.vmem [#allocation13], %s4329
          %4331 = dma.done %s4327, 1280
        $region68: #{tpu_custom_call.1} parent=63 // pred_fallthru
          _
      $region64: #{tpu_custom_call.1} parent=5 // pred_fallthru
        _
    $region6: #{tpu_custom_call.1} parent=1 // loop_footer
      %s23 = sadd.s32 1, %s19
    $region7: #{tpu_custom_call.1} parent=1 // loop_footer_branch
      %18 = sbr.rel target = $region3
    $region8: #{tpu_custom_call.1} parent=1 // loop_exit
      _
    %4332 = vsyncpa [#allocation6], 1
    %s4333 = scalar_lea.sflag [#allocation6], 1
    %4334 = vsyncpa %s4333, 1
    %4335 = vsyncpa [#allocation9], 1
    %4336 = vsyncpa [#allocation12], 1
    %4337 = vsyncpa [#allocation7], 1
    %s4338 = scalar_lea.sflag [#allocation7], 1
    %4339 = vsyncpa %s4338, 1

</llo_original>
